<compile_context>
chip_gen: v7x
topology: tpu7x:2x2x1
jax: 0.10.0
libtpu: 0.0.40
codegen_flags: <defaults>
</compile_context>

<pallas_src>
import jax
import jax.numpy as jnp
from jax import lax
from jax.experimental import pallas as pl
from jax.experimental.pallas import tpu as pltpu


# ------------------------------- helpers ------------------------------------


def _round_up(x, m):
  return ((x + m - 1) // m) * m


def _time_chunk(T, max_chunk=64):
  """Largest divisor of T that is <= max_chunk."""
  tc = min(T, max_chunk)
  while T % tc:
    tc -= 1
  return tc


def _device_vmem_cap():
  """Per-TensorCore VMEM capacity in bytes (conservative fallback = v7x 64 MiB)."""
  try:
    return int(pltpu.get_tpu_info().vmem_capacity_bytes)
  except Exception:
    return 64 << 20


def _lstm_vmem_req(T, tb, D, tc):
  """Rough per-grid-step VMEM footprint of the LSTM kernel (bytes)."""
  G = 4 * D
  blk = 2 * (T * tb * D * 2) + 2 * (T * tb * D * 4)     # x (bf16) + out (f32), double-buffered
  wblk = 2 * (2 * D * G * 2) + 2 * (G * 4 + 2 * D * 4)  # ONE layer's weights, double-buffered
  scr = tc * tb * G * 4 + 2 * tb * D * 4                # chunked gates + h/c state
  return int(1.25 * (blk + wblk + scr)) + (2 << 20)


# ----------------------------- Pallas kernels ------------------------------


def _lstm_kernel(x_ref, wih_ref, whh_ref, b_ref, h0_ref, c0_ref,
                 out_ref, gates_scr, h_scr, c_scr):
  """One LSTM layer over one batch tile (grid = (batch tiles, layers)).

  x_ref:     [T, tb, D]    bf16 layer-0 input (embeddings) for this batch tile
  wih_ref:   [1, D, 4D]    bf16 this layer's input-hidden weights, gates (i,f,g,o)
  whh_ref:   [1, D, 4D]    bf16 this layer's hidden-hidden weights
  b_ref:     [1, 1, 4D]    f32  b_ih + b_hh
  h0_ref:    [1, 1, D]     f32  initial hidden state (broadcast over batch)
  c0_ref:    [1, 1, D]     f32  initial cell state
  out_ref:   [T, tb, D]    f32  layer ping-pong buffer; after the last layer it holds
                                the last-layer hidden states (written back to HBM)
  gates_scr: [tc*tb, 4D]   f32  time-chunked input-to-hidden pre-activations
  h_scr:     [tb, D]       f32
  c_scr:     [tb, D]       f32
  """
  T, TB, D = out_ref.shape
  TC = gates_scr.shape[0] // TB
  n_chunks = T // TC

  l = pl.program_id(1)

  wih = wih_ref[0]                     # [D, 4D] bf16
  whh = whh_ref[0]                     # [D, 4D] bf16
  bias = b_ref[0]                      # [1, 4D] f32

  h_scr[...] = jnp.broadcast_to(h0_ref[0], (TB, D))
  c_scr[...] = jnp.broadcast_to(c0_ref[0], (TB, D))

  def chunk(ci, carry):
    row0 = pl.multiple_of(ci * TC, TC)

    # Hoisted input projection for this time chunk: ONE MXU matmul, bias folded once.
    # Layer 0 reads the bf16 embeddings; deeper layers read the previous layer's
    # hidden states which are resident in out_ref (its block index is constant in l).
    @pl.when(l == 0)
    def _():
      inp = x_ref[pl.ds(row0, TC)].reshape(TC * TB, D)                 # bf16
      gates_scr[...] = jnp.dot(inp, wih,
                               preferred_element_type=jnp.float32) + bias

    @pl.when(l != 0)
    def _():
      inp = out_ref[pl.ds(row0, TC)].reshape(TC * TB, D).astype(jnp.bfloat16)
      gates_scr[...] = jnp.dot(inp, wih,
                               preferred_element_type=jnp.float32) + bias

    def step(s, c2):
      h_prev = h_scr[...]
      c_prev = c_scr[...]
      g_row = pl.multiple_of(s * TB, TB)                 # sublane-aligned dynamic slice
      gates = gates_scr[pl.ds(g_row, TB), :] + jnp.dot(
          h_prev.astype(jnp.bfloat16), whh,
          preferred_element_type=jnp.float32)            # single recurrent matmul / step
      # Gate slices are lane-tile aligned when D % 128 == 0 (true in the demo).
      # i and f sigmoids fused into one EUP push over 2D lanes.
      if_g = jax.nn.sigmoid(gates[:, 0:2 * D])
      i_g = if_g[:, 0:D]
      f_g = if_g[:, D:2 * D]
      g_g = jnp.tanh(gates[:, 2 * D:3 * D])
      o_g = jax.nn.sigmoid(gates[:, 3 * D:4 * D])
      c_new = f_g * c_prev + i_g * g_g
      h_new = o_g * jnp.tanh(c_new)
      h_scr[...] = h_new
      c_scr[...] = c_new
      out_ref[row0 + s] = h_new        # this layer's output == next layer's input
      return c2

    lax.fori_loop(0, TC, step, 0, unroll=(True if TC <= 16 else 8))
    return carry

  lax.fori_loop(0, n_chunks, chunk, 0, unroll=False)


def _proj_kernel(h_ref, et_ref, b_ref, o_ref):
  """Tied-embedding vocab projection tile: [tm, D] @ [D, tn] + bias -> [tm, tn]."""
  o_ref[...] = jnp.dot(h_ref[...], et_ref[...],
                       preferred_element_type=jnp.float32) + b_ref[...]


# ------------------------------- wrappers ----------------------------------


def lstm_pallas(x_tbd_bf16, wih_bf16, whh_bf16, b, h0, c0):
  T, Bp, D = x_tbd_bf16.shape
  L = wih_bf16.shape[0]
  G = 4 * D
  assert Bp % 16 == 0, "batch must be padded to a multiple of 16 (bf16 MXU packing)"
  # input_size == hidden_size is assumed by the [L, D, 4D] weight layout.
  assert wih_bf16.shape == (L, D, G) and whh_bf16.shape == (L, D, G)

  tc = _time_chunk(T, 64)
  cap = _device_vmem_cap()
  headroom = max(cap - (6 << 20), 16 << 20)

  # Batch tile: 16-aligned; prefer >= 2 grid steps when the batch allows it
  # (so the "parallel" axis can shard across v7x's two TensorCores); shrink
  # until the per-step VMEM footprint fits the device.
  pref = 128
  if Bp >= 32:
    pref = min(pref, max(16, (Bp // 2 // 16) * 16))
  tb = 16
  t = (min(pref, Bp) // 16) * 16
  while t >= 16:
    if Bp % t == 0 and _lstm_vmem_req(T, t, D, tc) <= headroom:
      tb = t
      break
    t -= 16

  grid = (Bp // tb, L)
  vmem_limit = int(max(4 << 20, min(_lstm_vmem_req(T, tb, D, tc), headroom)))

  flops = 4 * L * T * Bp * D * G            # hoisted + recurrent matmuls
  transc = 5 * L * T * Bp * D               # 3 sigmoid + 2 tanh per step/element
  bytes_acc = (T * Bp * D * 2 + T * Bp * D * 4
               + 2 * L * D * G * 2 + L * G * 4 + 2 * L * D * 4)

  return pl.pallas_call(
      _lstm_kernel,
      out_shape=jax.ShapeDtypeStruct((T, Bp, D), jnp.float32),
      grid=grid,
      in_specs=[
          pl.BlockSpec((T, tb, D), lambda bi, l: (0, bi, 0)),   # embeddings (bf16)
          pl.BlockSpec((1, D, G), lambda bi, l: (l, 0, 0)),     # W_ih (one layer / step)
          pl.BlockSpec((1, D, G), lambda bi, l: (l, 0, 0)),     # W_hh
          pl.BlockSpec((1, 1, G), lambda bi, l: (l, 0, 0)),     # b_ih + b_hh
          pl.BlockSpec((1, 1, D), lambda bi, l: (l, 0, 0)),     # h0
          pl.BlockSpec((1, 1, D), lambda bi, l: (l, 0, 0)),     # c0
      ],
      out_specs=pl.BlockSpec((T, tb, D), lambda bi, l: (0, bi, 0)),
      scratch_shapes=[
          pltpu.VMEM((tc * tb, G), jnp.float32),   # time-chunked gate pre-activations
          pltpu.VMEM((tb, D), jnp.float32),        # h state
          pltpu.VMEM((tb, D), jnp.float32),        # c state
      ],
      compiler_params=pltpu.CompilerParams(
          dimension_semantics=("parallel", "arbitrary"),
          vmem_limit_bytes=vmem_limit),
      cost_estimate=pl.CostEstimate(flops=flops, transcendentals=transc,
                                    bytes_accessed=bytes_acc),
  )(x_tbd_bf16, wih_bf16, whh_bf16, b, h0, c0)


def proj_pallas(h_bf16, embT_bf16, bias_v):
  """Tied-embedding projection: [N, D] bf16 @ [D, V] bf16 + bias -> [N, V] f32."""
  N, D = h_bf16.shape
  V = embT_bf16.shape[1]
  assert embT_bf16.shape == (D, V)

  # Lane-dense tiles; pad N / V to the tile sizes (avoids masked partial stores and
  # the single-giant-tile fallback on non-divisible shapes), slice afterwards.
  tm = min(512, _round_up(N, 16))       # rows tile (bf16 sublane packing)
  tn = min(1024, _round_up(V, 128))     # lane-dense vocab tile
  Np = _round_up(N, tm)
  Vp = _round_up(V, tn)
  if Np != N:
    h_bf16 = jnp.pad(h_bf16, ((0, Np - N), (0, 0)))
  if Vp != V:
    embT_bf16 = jnp.pad(embT_bf16, ((0, 0), (0, Vp - V)))
    bias_v = jnp.pad(bias_v, (0, Vp - V))
  bias2 = bias_v[None, :].astype(jnp.float32)

  grid = (Np // tm, Vp // tn)

  cap = _device_vmem_cap()
  headroom = max(cap - (6 << 20), 16 << 20)
  req = 2 * (tm * D * 2 + D * tn * 2 + tn * 4 + tm * tn * 4) + (2 << 20)
  vmem_limit = int(max(4 << 20, min(req, headroom)))

  flops = 2 * Np * D * Vp
  bytes_acc = Np * D * 2 + D * Vp * 2 + Vp * 4 + Np * Vp * 4

  out = pl.pallas_call(
      _proj_kernel,
      out_shape=jax.ShapeDtypeStruct((Np, Vp), jnp.float32),
      grid=grid,
      in_specs=[
          pl.BlockSpec((tm, D), lambda i, j: (i, 0)),
          pl.BlockSpec((D, tn), lambda i, j: (0, j)),
          pl.BlockSpec((1, tn), lambda i, j: (0, j)),
      ],
      out_specs=pl.BlockSpec((tm, tn), lambda i, j: (i, j)),
      compiler_params=pltpu.CompilerParams(
          dimension_semantics=("parallel", "parallel"),
          vmem_limit_bytes=vmem_limit),
      cost_estimate=pl.CostEstimate(flops=flops, transcendentals=0,
                                    bytes_accessed=bytes_acc),
  )(h_bf16, embT_bf16, bias2)
  return out[:N, :V]


@jax.jit
def segment_lstm_encoder_forward(token_ids, params):
  """Returns (logits[:, :-1, :], embeds, decoder_hidden) like SegmentOutput."""
  emb = params["embedding"]                       # [V, D] f32, tied with emb2vocab
  B, T = token_ids.shape
  V, D = emb.shape
  L = params["wih_t"].shape[0]
  assert params["wih_t"].shape == (L, D, 4 * D)   # input_size == hidden_size
  assert params["whh_t"].shape == (L, D, 4 * D)

  # bf16 copies of the matmul weights (f32 params stay the source of truth).
  wih_bf16 = params["wih_t"].astype(jnp.bfloat16)
  whh_bf16 = params["whh_t"].astype(jnp.bfloat16)
  embT_bf16 = emb.astype(jnp.bfloat16).T          # [D, V], amortized over all row tiles

  # Embedding lookup (gather) -- plain-JAX glue; padding_idx row of the table is zero.
  embeds = jnp.take(emb, token_ids, axis=0)       # [B, T, D] f32 (returned as-is)
  # encoder_input_dropout: identity (eval mode).

  # LSTM encoder: time-major, bf16 input, batch padded to a multiple of 16.
  Bp = _round_up(B, 16)
  x_tbd = jnp.transpose(embeds, (1, 0, 2)).astype(jnp.bfloat16)    # [T, B, D] bf16
  if Bp != B:
    x_tbd = jnp.pad(x_tbd, ((0, 0), (0, Bp - B), (0, 0)))
  hidden_tbd = lstm_pallas(x_tbd, wih_bf16, whh_bf16,
                           params["b"], params["h0"], params["c0"])
  hidden = jnp.transpose(hidden_tbd[:, :B, :], (1, 0, 2))          # [B, T, D] f32

  # emb2vocab: tied-weight projection of the first T-1 steps only (last step dropped).
  h_in = hidden[:, :T - 1, :].reshape(B * (T - 1), D).astype(jnp.bfloat16)
  logits = proj_pallas(h_in, embT_bf16, params["proj_bias"])
  logits = logits.reshape(B, T - 1, V)

  return logits, embeds, hidden


# --------------------------- pure-JAX reference -----------------------------


def reference_forward(token_ids, params):
  emb = params["embedding"]
  B, T = token_ids.shape
  V, D = emb.shape
  L = params["wih_t"].shape[0]

  embeds = jnp.take(emb, token_ids, axis=0)
  seq = embeds
  for l in range(L):
    wih = params["wih_t"][l]
    whh = params["whh_t"][l]
    b = params["b"][l, 0]
    h = jnp.broadcast_to(params["h0"][l], (B, D))
    c = jnp.broadcast_to(params["c0"][l], (B, D))

    def step(carry, x_t):
      h, c = carry
      gates = x_t @ wih + h @ whh + b
      i_g = jax.nn.sigmoid(gates[:, 0 * D:1 * D])
      f_g = jax.nn.sigmoid(gates[:, 1 * D:2 * D])
      g_g = jnp.tanh(gates[:, 2 * D:3 * D])
      o_g = jax.nn.sigmoid(gates[:, 3 * D:4 * D])
      c_new = f_g * c + i_g * g_g
      h_new = o_g * jnp.tanh(c_new)
      return (h_new, c_new), h_new

    (_, _), hs = lax.scan(step, (h, c), jnp.transpose(seq, (1, 0, 2)))
    seq = jnp.transpose(hs, (1, 0, 2))

  hidden = seq
  logits = hidden @ emb.T + params["proj_bias"]
  return logits[:, :-1, :], embeds, hidden


# --------------------------------- main -------------------------------------


if __name__ == "__main__":
  # Small shapes consistent with the module's forward; d_model / vocab are chosen as
  # multiples of 128 so gate slices and projection stores are lane-tile aligned.
  B, T = 2, 8          # batch, sequence length
  D = 128              # d_model (LSTM input_size == hidden_size)
  V = 256              # vocab_size
  L = 2                # n_layers
  PAD_ID = 0

  key = jax.random.PRNGKey(0)
  k_emb, k_wih, k_whh, k_bih, k_bhh, k_pb, k_tok = jax.random.split(key, 7)

  # Deterministic synthetic parameters (shapes from the module's __init__).
  emb = jax.random.uniform(k_emb, (V, D), jnp.float32, -0.1, 0.1)
  emb = emb.at[PAD_ID].set(0.0)                     # padding_idx row is zero
  wih = jax.random.uniform(k_wih, (L, 4 * D, D), jnp.float32, -0.1, 0.1)
  whh = jax.random.uniform(k_whh, (L, 4 * D, D), jnp.float32, -0.1, 0.1)
  b_ih = jax.random.uniform(k_bih, (L, 4 * D), jnp.float32, -0.1, 0.1)
  b_hh = jax.random.uniform(k_bhh, (L, 4 * D), jnp.float32, -0.1, 0.1)
  proj_bias = jax.random.uniform(k_pb, (V,), jnp.float32, -0.1, 0.1)

  params = {
      "embedding": emb,                             # tied with the output projection
      "wih_t": jnp.transpose(wih, (0, 2, 1)),       # [L, D, 4D], gate order (i, f, g, o)
      "whh_t": jnp.transpose(whh, (0, 2, 1)),       # [L, D, 4D]
      "b": (b_ih + b_hh)[:, None, :],               # [L, 1, 4D]
      "h0": jnp.zeros((L, 1, D), jnp.float32),      # h_init_state (zeros parameter)
      "c0": jnp.zeros((L, 1, D), jnp.float32),      # c_init_state (zeros parameter)
      "proj_bias": proj_bias,
  }

  token_ids = jax.random.randint(k_tok, (B, T), 0, V, dtype=jnp.int32)

  logits, embeds, hidden = segment_lstm_encoder_forward(token_ids, params)
  jax.block_until_ready((logits, embeds, hidden))

  ref_logits, ref_embeds, ref_hidden = reference_forward(token_ids, params)
  assert logits.shape == (B, T - 1, V)
  assert embeds.shape == (B, T, D)
  assert hidden.shape == (B, T, D)
  # bf16 matmul operands (f32 accumulation / state) -> bf16-appropriate tolerances
  # versus the pure-f32 reference.
  assert jnp.allclose(embeds, ref_embeds, rtol=1e-6, atol=1e-6)
  assert jnp.allclose(hidden, ref_hidden, rtol=5e-2, atol=5e-3)
  assert jnp.allclose(logits, ref_logits, rtol=5e-2, atol=1e-2)

  print("KERNEL_OK")
</pallas_src>

<mosaic_0001>
module attributes {stable_mosaic.version = 11 : i64} {
  func.func @_lstm_kernel(%arg0: i32, %arg1: i32, %arg2: memref<8x16x128xbf16, #tpu.memory_space<vmem>>, %arg3: memref<1x128x512xbf16, #tpu.memory_space<vmem>>, %arg4: memref<1x128x512xbf16, #tpu.memory_space<vmem>>, %arg5: memref<1x1x512xf32, #tpu.memory_space<vmem>>, %arg6: memref<1x1x128xf32, #tpu.memory_space<vmem>>, %arg7: memref<1x1x128xf32, #tpu.memory_space<vmem>>, %arg8: memref<8x16x128xf32, #tpu.memory_space<vmem>>, %arg9: memref<128x512xf32, #tpu.memory_space<vmem>>, %arg10: memref<16x128xf32, #tpu.memory_space<vmem>>, %arg11: memref<16x128xf32, #tpu.memory_space<vmem>>) attributes {dimension_semantics = [#tpu.dimension_semantics<parallel>, #tpu.dimension_semantics<arbitrary>], iteration_bounds = array<i64: 1, 2>, scalar_prefetch = 0 : i64, scratch_operands = 3 : i64, tpu.core_type = #tpu.core_type<tc>, window_params = [{transform_indices = @transform_0, window_bounds = array<i64: 8, 16, 128>}, {transform_indices = @transform_1, window_bounds = array<i64: 1, 128, 512>}, {transform_indices = @transform_2, window_bounds = array<i64: 1, 128, 512>}, {transform_indices = @transform_3, window_bounds = array<i64: 1, 1, 512>}, {transform_indices = @transform_4, window_bounds = array<i64: 1, 1, 128>}, {transform_indices = @transform_5, window_bounds = array<i64: 1, 1, 128>}, {transform_indices = @transform_6, window_bounds = array<i64: 8, 16, 128>}]} {
    %c0 = arith.constant 0 : index
    %c0_0 = arith.constant 0 : index
    %c0_1 = arith.constant 0 : index
    %0 = vector.load %arg3[%c0, %c0_0, %c0_1] : memref<1x128x512xbf16, #tpu.memory_space<vmem>>, vector<1x128x512xbf16>
    %1 = vector.shape_cast %0 : vector<1x128x512xbf16> to vector<128x512xbf16>
    %c0_2 = arith.constant 0 : index
    %c0_3 = arith.constant 0 : index
    %c0_4 = arith.constant 0 : index
    %2 = vector.load %arg4[%c0_2, %c0_3, %c0_4] : memref<1x128x512xbf16, #tpu.memory_space<vmem>>, vector<1x128x512xbf16>
    %3 = vector.shape_cast %2 : vector<1x128x512xbf16> to vector<128x512xbf16>
    %c0_5 = arith.constant 0 : index
    %c0_6 = arith.constant 0 : index
    %c0_7 = arith.constant 0 : index
    %4 = vector.load %arg5[%c0_5, %c0_6, %c0_7] : memref<1x1x512xf32, #tpu.memory_space<vmem>>, vector<1x1x512xf32>
    %5 = vector.shape_cast %4 : vector<1x1x512xf32> to vector<1x512xf32>
    %c0_8 = arith.constant 0 : index
    %c0_9 = arith.constant 0 : index
    %c0_10 = arith.constant 0 : index
    %6 = vector.load %arg6[%c0_8, %c0_9, %c0_10] : memref<1x1x128xf32, #tpu.memory_space<vmem>>, vector<1x1x128xf32>
    %7 = vector.shape_cast %6 : vector<1x1x128xf32> to vector<1x128xf32>
    %8 = vector.shape_cast %7 : vector<1x128xf32> to vector<1x128xf32>
    %9 = vector.broadcast %8 : vector<1x128xf32> to vector<16x128xf32>
    %c0_11 = arith.constant 0 : index
    %c0_12 = arith.constant 0 : index
    %10 = vector.load %arg10[%c0_11, %c0_12] : memref<16x128xf32, #tpu.memory_space<vmem>>, vector<16x128xf32>
    tpu.vector_store %arg10[%c0_11, %c0_12], %9 {strides = array<i32>} : memref<16x128xf32, #tpu.memory_space<vmem>>, vector<16x128xf32>,
    %c0_13 = arith.constant 0 : index
    %c0_14 = arith.constant 0 : index
    %c0_15 = arith.constant 0 : index
    %11 = vector.load %arg7[%c0_13, %c0_14, %c0_15] : memref<1x1x128xf32, #tpu.memory_space<vmem>>, vector<1x1x128xf32>
    %12 = vector.shape_cast %11 : vector<1x1x128xf32> to vector<1x128xf32>
    %13 = vector.shape_cast %12 : vector<1x128xf32> to vector<1x128xf32>
    %14 = vector.broadcast %13 : vector<1x128xf32> to vector<16x128xf32>
    %c0_16 = arith.constant 0 : index
    %c0_17 = arith.constant 0 : index
    %15 = vector.load %arg11[%c0_16, %c0_17] : memref<16x128xf32, #tpu.memory_space<vmem>>, vector<16x128xf32>
    tpu.vector_store %arg11[%c0_16, %c0_17], %14 {strides = array<i32>} : memref<16x128xf32, #tpu.memory_space<vmem>>, vector<16x128xf32>,
    %c0_i32 = arith.constant 0 : i32
    %c8_i32 = arith.constant 8 : i32
    %16 = arith.muli %c0_i32, %c8_i32 : i32
    %17 = tpu.assume_multiple %16, 8 : i32
    %c0_i32_18 = arith.constant 0 : i32
    %18 = arith.cmpi eq, %arg1, %c0_i32_18 : i32
    %19 = arith.extui %18 : i1 to i32
    %c0_i32_19 = arith.constant 0 : i32
    %20 = arith.cmpi ne, %19, %c0_i32_19 : i32
    scf.if %20 {
      %320 = arith.index_cast %17 : i32 to index
      %c0_143 = arith.constant 0 : index
      %c0_144 = arith.constant 0 : index
      %321 = vector.load %arg2[%320, %c0_143, %c0_144] : memref<8x16x128xbf16, #tpu.memory_space<vmem>>, vector<8x16x128xbf16>
      %322 = vector.shape_cast %321 : vector<8x16x128xbf16> to vector<128x128xbf16>
      %cst_145 = arith.constant dense<0.000000e+00> : vector<128x512xf32>
      %323 = tpu.matmul %322, %1, %cst_145 {dimension_numbers = #tpu.dot_dimension_numbers<[1], [0], [0], [1], [0, 0, 1, 1], [], []>} : vector<128x128xbf16>, vector<128x512xbf16>, vector<128x512xf32> -> vector<128x512xf32>
      %324 = vector.broadcast %5 : vector<1x512xf32> to vector<128x512xf32>
      %325 = arith.addf %323, %324 : vector<128x512xf32>
      %c0_146 = arith.constant 0 : index
      %c0_147 = arith.constant 0 : index
      %326 = vector.load %arg9[%c0_146, %c0_147] : memref<128x512xf32, #tpu.memory_space<vmem>>, vector<128x512xf32>
      tpu.vector_store %arg9[%c0_146, %c0_147], %325 {strides = array<i32>} : memref<128x512xf32, #tpu.memory_space<vmem>>, vector<128x512xf32>,
    } else {
    }
    %c0_i32_20 = arith.constant 0 : i32
    %21 = arith.cmpi ne, %arg1, %c0_i32_20 : i32
    %22 = arith.extui %21 : i1 to i32
    %c0_i32_21 = arith.constant 0 : i32
    %23 = arith.cmpi ne, %22, %c0_i32_21 : i32
    scf.if %23 {
      %320 = arith.index_cast %17 : i32 to index
      %c0_143 = arith.constant 0 : index
      %c0_144 = arith.constant 0 : index
      %321 = vector.load %arg8[%320, %c0_143, %c0_144] : memref<8x16x128xf32, #tpu.memory_space<vmem>>, vector<8x16x128xf32>
      %322 = vector.shape_cast %321 : vector<8x16x128xf32> to vector<128x128xf32>
      %323 = arith.truncf %322 : vector<128x128xf32> to vector<128x128xbf16>
      %cst_145 = arith.constant dense<0.000000e+00> : vector<128x512xf32>
      %324 = tpu.matmul %323, %1, %cst_145 {dimension_numbers = #tpu.dot_dimension_numbers<[1], [0], [0], [1], [0, 0, 1, 1], [], []>} : vector<128x128xbf16>, vector<128x512xbf16>, vector<128x512xf32> -> vector<128x512xf32>
      %325 = vector.broadcast %5 : vector<1x512xf32> to vector<128x512xf32>
      %326 = arith.addf %324, %325 : vector<128x512xf32>
      %c0_146 = arith.constant 0 : index
      %c0_147 = arith.constant 0 : index
      %327 = vector.load %arg9[%c0_146, %c0_147] : memref<128x512xf32, #tpu.memory_space<vmem>>, vector<128x512xf32>
      tpu.vector_store %arg9[%c0_146, %c0_147], %326 {strides = array<i32>} : memref<128x512xf32, #tpu.memory_space<vmem>>, vector<128x512xf32>,
    } else {
    }
    %c0_i32_22 = arith.constant 0 : i32
    %c0_23 = arith.constant 0 : index
    %c0_24 = arith.constant 0 : index
    %24 = vector.load %arg10[%c0_23, %c0_24] : memref<16x128xf32, #tpu.memory_space<vmem>>, vector<16x128xf32>
    %c0_25 = arith.constant 0 : index
    %c0_26 = arith.constant 0 : index
    %25 = vector.load %arg11[%c0_25, %c0_26] : memref<16x128xf32, #tpu.memory_space<vmem>>, vector<16x128xf32>
    %c16_i32 = arith.constant 16 : i32
    %26 = arith.muli %c0_i32_22, %c16_i32 : i32
    %27 = tpu.assume_multiple %26, 16 : i32
    %28 = arith.index_cast %27 : i32 to index
    %c0_27 = arith.constant 0 : index
    %29 = vector.load %arg9[%28, %c0_27] : memref<128x512xf32, #tpu.memory_space<vmem>>, vector<16x512xf32>
    %30 = arith.truncf %24 : vector<16x128xf32> to vector<16x128xbf16>
    %cst = arith.constant dense<0.000000e+00> : vector<16x512xf32>
    %31 = tpu.matmul %30, %3, %cst {dimension_numbers = #tpu.dot_dimension_numbers<[1], [0], [0], [1], [0, 0, 1, 1], [], []>} : vector<16x128xbf16>, vector<128x512xbf16>, vector<16x512xf32> -> vector<16x512xf32>
    %32 = arith.addf %29, %31 : vector<16x512xf32>
    %33 = vector.extract_strided_slice %32 {offsets = [0, 0], sizes = [16, 256], strides = [1, 1]} : vector<16x512xf32> to vector<16x256xf32>
    %34 = arith.negf %33 : vector<16x256xf32>
    %35 = math.exp %34 : vector<16x256xf32>
    %cst_28 = arith.constant 1.000000e+00 : f32
    %36 = vector.broadcast %cst_28 : f32 to vector<16x256xf32>
    %37 = arith.addf %36, %35 : vector<16x256xf32>
    %38 = arith.divf %36, %37 : vector<16x256xf32>
    %39 = vector.extract_strided_slice %38 {offsets = [0, 0], sizes = [16, 128], strides = [1, 1]} : vector<16x256xf32> to vector<16x128xf32>
    %40 = vector.extract_strided_slice %38 {offsets = [0, 128], sizes = [16, 128], strides = [1, 1]} : vector<16x256xf32> to vector<16x128xf32>
    %41 = vector.extract_strided_slice %32 {offsets = [0, 256], sizes = [16, 128], strides = [1, 1]} : vector<16x512xf32> to vector<16x128xf32>
    %42 = math.tanh %41 : vector<16x128xf32>
    %43 = vector.extract_strided_slice %32 {offsets = [0, 384], sizes = [16, 128], strides = [1, 1]} : vector<16x512xf32> to vector<16x128xf32>
    %44 = arith.negf %43 : vector<16x128xf32>
    %45 = math.exp %44 : vector<16x128xf32>
    %cst_29 = arith.constant 1.000000e+00 : f32
    %46 = vector.broadcast %cst_29 : f32 to vector<16x128xf32>
    %47 = arith.addf %46, %45 : vector<16x128xf32>
    %48 = arith.divf %46, %47 : vector<16x128xf32>
    %49 = arith.mulf %40, %25 : vector<16x128xf32>
    %50 = arith.mulf %39, %42 : vector<16x128xf32>
    %51 = arith.addf %49, %50 : vector<16x128xf32>
    %52 = math.tanh %51 : vector<16x128xf32>
    %53 = arith.mulf %48, %52 : vector<16x128xf32>
    %c0_30 = arith.constant 0 : index
    %c0_31 = arith.constant 0 : index
    %54 = vector.load %arg10[%c0_30, %c0_31] : memref<16x128xf32, #tpu.memory_space<vmem>>, vector<16x128xf32>
    tpu.vector_store %arg10[%c0_30, %c0_31], %53 {strides = array<i32>} : memref<16x128xf32, #tpu.memory_space<vmem>>, vector<16x128xf32>,
    %c0_32 = arith.constant 0 : index
    %c0_33 = arith.constant 0 : index
    %55 = vector.load %arg11[%c0_32, %c0_33] : memref<16x128xf32, #tpu.memory_space<vmem>>, vector<16x128xf32>
    tpu.vector_store %arg11[%c0_32, %c0_33], %51 {strides = array<i32>} : memref<16x128xf32, #tpu.memory_space<vmem>>, vector<16x128xf32>,
    %56 = arith.addi %17, %c0_i32_22 : i32
    %57 = arith.index_cast %56 : i32 to index
    %c0_34 = arith.constant 0 : index
    %c0_35 = arith.constant 0 : index
    %58 = vector.load %arg8[%57, %c0_34, %c0_35] : memref<8x16x128xf32, #tpu.memory_space<vmem>>, vector<1x16x128xf32>
    %59 = vector.shape_cast %58 : vector<1x16x128xf32> to vector<16x128xf32>
    %60 = vector.shape_cast %53 : vector<16x128xf32> to vector<1x16x128xf32>
    tpu.vector_store %arg8[%57, %c0_34, %c0_35], %60 {strides = array<i32>} : memref<8x16x128xf32, #tpu.memory_space<vmem>>, vector<1x16x128xf32>,
    %c1_i32 = arith.constant 1 : i32
    %c0_36 = arith.constant 0 : index
    %c0_37 = arith.constant 0 : index
    %61 = vector.load %arg10[%c0_36, %c0_37] : memref<16x128xf32, #tpu.memory_space<vmem>>, vector<16x128xf32>
    %c0_38 = arith.constant 0 : index
    %c0_39 = arith.constant 0 : index
    %62 = vector.load %arg11[%c0_38, %c0_39] : memref<16x128xf32, #tpu.memory_space<vmem>>, vector<16x128xf32>
    %c16_i32_40 = arith.constant 16 : i32
    %63 = arith.muli %c1_i32, %c16_i32_40 : i32
    %64 = tpu.assume_multiple %63, 16 : i32
    %65 = arith.index_cast %64 : i32 to index
    %c0_41 = arith.constant 0 : index
    %66 = vector.load %arg9[%65, %c0_41] : memref<128x512xf32, #tpu.memory_space<vmem>>, vector<16x512xf32>
    %67 = arith.truncf %61 : vector<16x128xf32> to vector<16x128xbf16>
    %cst_42 = arith.constant dense<0.000000e+00> : vector<16x512xf32>
    %68 = tpu.matmul %67, %3, %cst_42 {dimension_numbers = #tpu.dot_dimension_numbers<[1], [0], [0], [1], [0, 0, 1, 1], [], []>} : vector<16x128xbf16>, vector<128x512xbf16>, vector<16x512xf32> -> vector<16x512xf32>
    %69 = arith.addf %66, %68 : vector<16x512xf32>
    %70 = vector.extract_strided_slice %69 {offsets = [0, 0], sizes = [16, 256], strides = [1, 1]} : vector<16x512xf32> to vector<16x256xf32>
    %71 = arith.negf %70 : vector<16x256xf32>
    %72 = math.exp %71 : vector<16x256xf32>
    %cst_43 = arith.constant 1.000000e+00 : f32
    %73 = vector.broadcast %cst_43 : f32 to vector<16x256xf32>
    %74 = arith.addf %73, %72 : vector<16x256xf32>
    %75 = arith.divf %73, %74 : vector<16x256xf32>
    %76 = vector.extract_strided_slice %75 {offsets = [0, 0], sizes = [16, 128], strides = [1, 1]} : vector<16x256xf32> to vector<16x128xf32>
    %77 = vector.extract_strided_slice %75 {offsets = [0, 128], sizes = [16, 128], strides = [1, 1]} : vector<16x256xf32> to vector<16x128xf32>
    %78 = vector.extract_strided_slice %69 {offsets = [0, 256], sizes = [16, 128], strides = [1, 1]} : vector<16x512xf32> to vector<16x128xf32>
    %79 = math.tanh %78 : vector<16x128xf32>
    %80 = vector.extract_strided_slice %69 {offsets = [0, 384], sizes = [16, 128], strides = [1, 1]} : vector<16x512xf32> to vector<16x128xf32>
    %81 = arith.negf %80 : vector<16x128xf32>
    %82 = math.exp %81 : vector<16x128xf32>
    %cst_44 = arith.constant 1.000000e+00 : f32
    %83 = vector.broadcast %cst_44 : f32 to vector<16x128xf32>
    %84 = arith.addf %83, %82 : vector<16x128xf32>
    %85 = arith.divf %83, %84 : vector<16x128xf32>
    %86 = arith.mulf %77, %62 : vector<16x128xf32>
    %87 = arith.mulf %76, %79 : vector<16x128xf32>
    %88 = arith.addf %86, %87 : vector<16x128xf32>
    %89 = math.tanh %88 : vector<16x128xf32>
    %90 = arith.mulf %85, %89 : vector<16x128xf32>
    %c0_45 = arith.constant 0 : index
    %c0_46 = arith.constant 0 : index
    %91 = vector.load %arg10[%c0_45, %c0_46] : memref<16x128xf32, #tpu.memory_space<vmem>>, vector<16x128xf32>
    tpu.vector_store %arg10[%c0_45, %c0_46], %90 {strides = array<i32>} : memref<16x128xf32, #tpu.memory_space<vmem>>, vector<16x128xf32>,
    %c0_47 = arith.constant 0 : index
    %c0_48 = arith.constant 0 : index
    %92 = vector.load %arg11[%c0_47, %c0_48] : memref<16x128xf32, #tpu.memory_space<vmem>>, vector<16x128xf32>
    tpu.vector_store %arg11[%c0_47, %c0_48], %88 {strides = array<i32>} : memref<16x128xf32, #tpu.memory_space<vmem>>, vector<16x128xf32>,
    %93 = arith.addi %17, %c1_i32 : i32
    %94 = arith.index_cast %93 : i32 to index
    %c0_49 = arith.constant 0 : index
    %c0_50 = arith.constant 0 : index
    %95 = vector.load %arg8[%94, %c0_49, %c0_50] : memref<8x16x128xf32, #tpu.memory_space<vmem>>, vector<1x16x128xf32>
    %96 = vector.shape_cast %95 : vector<1x16x128xf32> to vector<16x128xf32>
    %97 = vector.shape_cast %90 : vector<16x128xf32> to vector<1x16x128xf32>
    tpu.vector_store %arg8[%94, %c0_49, %c0_50], %97 {strides = array<i32>} : memref<8x16x128xf32, #tpu.memory_space<vmem>>, vector<1x16x128xf32>,
    %c2_i32 = arith.constant 2 : i32
    %c0_51 = arith.constant 0 : index
    %c0_52 = arith.constant 0 : index
    %98 = vector.load %arg10[%c0_51, %c0_52] : memref<16x128xf32, #tpu.memory_space<vmem>>, vector<16x128xf32>
    %c0_53 = arith.constant 0 : index
    %c0_54 = arith.constant 0 : index
    %99 = vector.load %arg11[%c0_53, %c0_54] : memref<16x128xf32, #tpu.memory_space<vmem>>, vector<16x128xf32>
    %c16_i32_55 = arith.constant 16 : i32
    %100 = arith.muli %c2_i32, %c16_i32_55 : i32
    %101 = tpu.assume_multiple %100, 16 : i32
    %102 = arith.index_cast %101 : i32 to index
    %c0_56 = arith.constant 0 : index
    %103 = vector.load %arg9[%102, %c0_56] : memref<128x512xf32, #tpu.memory_space<vmem>>, vector<16x512xf32>
    %104 = arith.truncf %98 : vector<16x128xf32> to vector<16x128xbf16>
    %cst_57 = arith.constant dense<0.000000e+00> : vector<16x512xf32>
    %105 = tpu.matmul %104, %3, %cst_57 {dimension_numbers = #tpu.dot_dimension_numbers<[1], [0], [0], [1], [0, 0, 1, 1], [], []>} : vector<16x128xbf16>, vector<128x512xbf16>, vector<16x512xf32> -> vector<16x512xf32>
    %106 = arith.addf %103, %105 : vector<16x512xf32>
    %107 = vector.extract_strided_slice %106 {offsets = [0, 0], sizes = [16, 256], strides = [1, 1]} : vector<16x512xf32> to vector<16x256xf32>
    %108 = arith.negf %107 : vector<16x256xf32>
    %109 = math.exp %108 : vector<16x256xf32>
    %cst_58 = arith.constant 1.000000e+00 : f32
    %110 = vector.broadcast %cst_58 : f32 to vector<16x256xf32>
    %111 = arith.addf %110, %109 : vector<16x256xf32>
    %112 = arith.divf %110, %111 : vector<16x256xf32>
    %113 = vector.extract_strided_slice %112 {offsets = [0, 0], sizes = [16, 128], strides = [1, 1]} : vector<16x256xf32> to vector<16x128xf32>
    %114 = vector.extract_strided_slice %112 {offsets = [0, 128], sizes = [16, 128], strides = [1, 1]} : vector<16x256xf32> to vector<16x128xf32>
    %115 = vector.extract_strided_slice %106 {offsets = [0, 256], sizes = [16, 128], strides = [1, 1]} : vector<16x512xf32> to vector<16x128xf32>
    %116 = math.tanh %115 : vector<16x128xf32>
    %117 = vector.extract_strided_slice %106 {offsets = [0, 384], sizes = [16, 128], strides = [1, 1]} : vector<16x512xf32> to vector<16x128xf32>
    %118 = arith.negf %117 : vector<16x128xf32>
    %119 = math.exp %118 : vector<16x128xf32>
    %cst_59 = arith.constant 1.000000e+00 : f32
    %120 = vector.broadcast %cst_59 : f32 to vector<16x128xf32>
    %121 = arith.addf %120, %119 : vector<16x128xf32>
    %122 = arith.divf %120, %121 : vector<16x128xf32>
    %123 = arith.mulf %114, %99 : vector<16x128xf32>
    %124 = arith.mulf %113, %116 : vector<16x128xf32>
    %125 = arith.addf %123, %124 : vector<16x128xf32>
    %126 = math.tanh %125 : vector<16x128xf32>
    %127 = arith.mulf %122, %126 : vector<16x128xf32>
    %c0_60 = arith.constant 0 : index
    %c0_61 = arith.constant 0 : index
    %128 = vector.load %arg10[%c0_60, %c0_61] : memref<16x128xf32, #tpu.memory_space<vmem>>, vector<16x128xf32>
    tpu.vector_store %arg10[%c0_60, %c0_61], %127 {strides = array<i32>} : memref<16x128xf32, #tpu.memory_space<vmem>>, vector<16x128xf32>,
    %c0_62 = arith.constant 0 : index
    %c0_63 = arith.constant 0 : index
    %129 = vector.load %arg11[%c0_62, %c0_63] : memref<16x128xf32, #tpu.memory_space<vmem>>, vector<16x128xf32>
    tpu.vector_store %arg11[%c0_62, %c0_63], %125 {strides = array<i32>} : memref<16x128xf32, #tpu.memory_space<vmem>>, vector<16x128xf32>,
    %130 = arith.addi %17, %c2_i32 : i32
    %131 = arith.index_cast %130 : i32 to index
    %c0_64 = arith.constant 0 : index
    %c0_65 = arith.constant 0 : index
    %132 = vector.load %arg8[%131, %c0_64, %c0_65] : memref<8x16x128xf32, #tpu.memory_space<vmem>>, vector<1x16x128xf32>
    %133 = vector.shape_cast %132 : vector<1x16x128xf32> to vector<16x128xf32>
    %134 = vector.shape_cast %127 : vector<16x128xf32> to vector<1x16x128xf32>
    tpu.vector_store %arg8[%131, %c0_64, %c0_65], %134 {strides = array<i32>} : memref<8x16x128xf32, #tpu.memory_space<vmem>>, vector<1x16x128xf32>,
    %c3_i32 = arith.constant 3 : i32
    %c0_66 = arith.constant 0 : index
    %c0_67 = arith.constant 0 : index
    %135 = vector.load %arg10[%c0_66, %c0_67] : memref<16x128xf32, #tpu.memory_space<vmem>>, vector<16x128xf32>
    %c0_68 = arith.constant 0 : index
    %c0_69 = arith.constant 0 : index
    %136 = vector.load %arg11[%c0_68, %c0_69] : memref<16x128xf32, #tpu.memory_space<vmem>>, vector<16x128xf32>
    %c16_i32_70 = arith.constant 16 : i32
    %137 = arith.muli %c3_i32, %c16_i32_70 : i32
    %138 = tpu.assume_multiple %137, 16 : i32
    %139 = arith.index_cast %138 : i32 to index
    %c0_71 = arith.constant 0 : index
    %140 = vector.load %arg9[%139, %c0_71] : memref<128x512xf32, #tpu.memory_space<vmem>>, vector<16x512xf32>
    %141 = arith.truncf %135 : vector<16x128xf32> to vector<16x128xbf16>
    %cst_72 = arith.constant dense<0.000000e+00> : vector<16x512xf32>
    %142 = tpu.matmul %141, %3, %cst_72 {dimension_numbers = #tpu.dot_dimension_numbers<[1], [0], [0], [1], [0, 0, 1, 1], [], []>} : vector<16x128xbf16>, vector<128x512xbf16>, vector<16x512xf32> -> vector<16x512xf32>
    %143 = arith.addf %140, %142 : vector<16x512xf32>
    %144 = vector.extract_strided_slice %143 {offsets = [0, 0], sizes = [16, 256], strides = [1, 1]} : vector<16x512xf32> to vector<16x256xf32>
    %145 = arith.negf %144 : vector<16x256xf32>
    %146 = math.exp %145 : vector<16x256xf32>
    %cst_73 = arith.constant 1.000000e+00 : f32
    %147 = vector.broadcast %cst_73 : f32 to vector<16x256xf32>
    %148 = arith.addf %147, %146 : vector<16x256xf32>
    %149 = arith.divf %147, %148 : vector<16x256xf32>
    %150 = vector.extract_strided_slice %149 {offsets = [0, 0], sizes = [16, 128], strides = [1, 1]} : vector<16x256xf32> to vector<16x128xf32>
    %151 = vector.extract_strided_slice %149 {offsets = [0, 128], sizes = [16, 128], strides = [1, 1]} : vector<16x256xf32> to vector<16x128xf32>
    %152 = vector.extract_strided_slice %143 {offsets = [0, 256], sizes = [16, 128], strides = [1, 1]} : vector<16x512xf32> to vector<16x128xf32>
    %153 = math.tanh %152 : vector<16x128xf32>
    %154 = vector.extract_strided_slice %143 {offsets = [0, 384], sizes = [16, 128], strides = [1, 1]} : vector<16x512xf32> to vector<16x128xf32>
    %155 = arith.negf %154 : vector<16x128xf32>
    %156 = math.exp %155 : vector<16x128xf32>
    %cst_74 = arith.constant 1.000000e+00 : f32
    %157 = vector.broadcast %cst_74 : f32 to vector<16x128xf32>
    %158 = arith.addf %157, %156 : vector<16x128xf32>
    %159 = arith.divf %157, %158 : vector<16x128xf32>
    %160 = arith.mulf %151, %136 : vector<16x128xf32>
    %161 = arith.mulf %150, %153 : vector<16x128xf32>
    %162 = arith.addf %160, %161 : vector<16x128xf32>
    %163 = math.tanh %162 : vector<16x128xf32>
    %164 = arith.mulf %159, %163 : vector<16x128xf32>
    %c0_75 = arith.constant 0 : index
    %c0_76 = arith.constant 0 : index
    %165 = vector.load %arg10[%c0_75, %c0_76] : memref<16x128xf32, #tpu.memory_space<vmem>>, vector<16x128xf32>
    tpu.vector_store %arg10[%c0_75, %c0_76], %164 {strides = array<i32>} : memref<16x128xf32, #tpu.memory_space<vmem>>, vector<16x128xf32>,
    %c0_77 = arith.constant 0 : index
    %c0_78 = arith.constant 0 : index
    %166 = vector.load %arg11[%c0_77, %c0_78] : memref<16x128xf32, #tpu.memory_space<vmem>>, vector<16x128xf32>
    tpu.vector_store %arg11[%c0_77, %c0_78], %162 {strides = array<i32>} : memref<16x128xf32, #tpu.memory_space<vmem>>, vector<16x128xf32>,
    %167 = arith.addi %17, %c3_i32 : i32
    %168 = arith.index_cast %167 : i32 to index
    %c0_79 = arith.constant 0 : index
    %c0_80 = arith.constant 0 : index
    %169 = vector.load %arg8[%168, %c0_79, %c0_80] : memref<8x16x128xf32, #tpu.memory_space<vmem>>, vector<1x16x128xf32>
    %170 = vector.shape_cast %169 : vector<1x16x128xf32> to vector<16x128xf32>
    %171 = vector.shape_cast %164 : vector<16x128xf32> to vector<1x16x128xf32>
    tpu.vector_store %arg8[%168, %c0_79, %c0_80], %171 {strides = array<i32>} : memref<8x16x128xf32, #tpu.memory_space<vmem>>, vector<1x16x128xf32>,
    %c4_i32 = arith.constant 4 : i32
    %c0_81 = arith.constant 0 : index
    %c0_82 = arith.constant 0 : index
    %172 = vector.load %arg10[%c0_81, %c0_82] : memref<16x128xf32, #tpu.memory_space<vmem>>, vector<16x128xf32>
    %c0_83 = arith.constant 0 : index
    %c0_84 = arith.constant 0 : index
    %173 = vector.load %arg11[%c0_83, %c0_84] : memref<16x128xf32, #tpu.memory_space<vmem>>, vector<16x128xf32>
    %c16_i32_85 = arith.constant 16 : i32
    %174 = arith.muli %c4_i32, %c16_i32_85 : i32
    %175 = tpu.assume_multiple %174, 16 : i32
    %176 = arith.index_cast %175 : i32 to index
    %c0_86 = arith.constant 0 : index
    %177 = vector.load %arg9[%176, %c0_86] : memref<128x512xf32, #tpu.memory_space<vmem>>, vector<16x512xf32>
    %178 = arith.truncf %172 : vector<16x128xf32> to vector<16x128xbf16>
    %cst_87 = arith.constant dense<0.000000e+00> : vector<16x512xf32>
    %179 = tpu.matmul %178, %3, %cst_87 {dimension_numbers = #tpu.dot_dimension_numbers<[1], [0], [0], [1], [0, 0, 1, 1], [], []>} : vector<16x128xbf16>, vector<128x512xbf16>, vector<16x512xf32> -> vector<16x512xf32>
    %180 = arith.addf %177, %179 : vector<16x512xf32>
    %181 = vector.extract_strided_slice %180 {offsets = [0, 0], sizes = [16, 256], strides = [1, 1]} : vector<16x512xf32> to vector<16x256xf32>
    %182 = arith.negf %181 : vector<16x256xf32>
    %183 = math.exp %182 : vector<16x256xf32>
    %cst_88 = arith.constant 1.000000e+00 : f32
    %184 = vector.broadcast %cst_88 : f32 to vector<16x256xf32>
    %185 = arith.addf %184, %183 : vector<16x256xf32>
    %186 = arith.divf %184, %185 : vector<16x256xf32>
    %187 = vector.extract_strided_slice %186 {offsets = [0, 0], sizes = [16, 128], strides = [1, 1]} : vector<16x256xf32> to vector<16x128xf32>
    %188 = vector.extract_strided_slice %186 {offsets = [0, 128], sizes = [16, 128], strides = [1, 1]} : vector<16x256xf32> to vector<16x128xf32>
    %189 = vector.extract_strided_slice %180 {offsets = [0, 256], sizes = [16, 128], strides = [1, 1]} : vector<16x512xf32> to vector<16x128xf32>
    %190 = math.tanh %189 : vector<16x128xf32>
    %191 = vector.extract_strided_slice %180 {offsets = [0, 384], sizes = [16, 128], strides = [1, 1]} : vector<16x512xf32> to vector<16x128xf32>
    %192 = arith.negf %191 : vector<16x128xf32>
    %193 = math.exp %192 : vector<16x128xf32>
    %cst_89 = arith.constant 1.000000e+00 : f32
    %194 = vector.broadcast %cst_89 : f32 to vector<16x128xf32>
    %195 = arith.addf %194, %193 : vector<16x128xf32>
    %196 = arith.divf %194, %195 : vector<16x128xf32>
    %197 = arith.mulf %188, %173 : vector<16x128xf32>
    %198 = arith.mulf %187, %190 : vector<16x128xf32>
    %199 = arith.addf %197, %198 : vector<16x128xf32>
    %200 = math.tanh %199 : vector<16x128xf32>
    %201 = arith.mulf %196, %200 : vector<16x128xf32>
    %c0_90 = arith.constant 0 : index
    %c0_91 = arith.constant 0 : index
    %202 = vector.load %arg10[%c0_90, %c0_91] : memref<16x128xf32, #tpu.memory_space<vmem>>, vector<16x128xf32>
    tpu.vector_store %arg10[%c0_90, %c0_91], %201 {strides = array<i32>} : memref<16x128xf32, #tpu.memory_space<vmem>>, vector<16x128xf32>,
    %c0_92 = arith.constant 0 : index
    %c0_93 = arith.constant 0 : index
    %203 = vector.load %arg11[%c0_92, %c0_93] : memref<16x128xf32, #tpu.memory_space<vmem>>, vector<16x128xf32>
    tpu.vector_store %arg11[%c0_92, %c0_93], %199 {strides = array<i32>} : memref<16x128xf32, #tpu.memory_space<vmem>>, vector<16x128xf32>,
    %204 = arith.addi %17, %c4_i32 : i32
    %205 = arith.index_cast %204 : i32 to index
    %c0_94 = arith.constant 0 : index
    %c0_95 = arith.constant 0 : index
    %206 = vector.load %arg8[%205, %c0_94, %c0_95] : memref<8x16x128xf32, #tpu.memory_space<vmem>>, vector<1x16x128xf32>
    %207 = vector.shape_cast %206 : vector<1x16x128xf32> to vector<16x128xf32>
    %208 = vector.shape_cast %201 : vector<16x128xf32> to vector<1x16x128xf32>
    tpu.vector_store %arg8[%205, %c0_94, %c0_95], %208 {strides = array<i32>} : memref<8x16x128xf32, #tpu.memory_space<vmem>>, vector<1x16x128xf32>,
    %c5_i32 = arith.constant 5 : i32
    %c0_96 = arith.constant 0 : index
    %c0_97 = arith.constant 0 : index
    %209 = vector.load %arg10[%c0_96, %c0_97] : memref<16x128xf32, #tpu.memory_space<vmem>>, vector<16x128xf32>
    %c0_98 = arith.constant 0 : index
    %c0_99 = arith.constant 0 : index
    %210 = vector.load %arg11[%c0_98, %c0_99] : memref<16x128xf32, #tpu.memory_space<vmem>>, vector<16x128xf32>
    %c16_i32_100 = arith.constant 16 : i32
    %211 = arith.muli %c5_i32, %c16_i32_100 : i32
    %212 = tpu.assume_multiple %211, 16 : i32
    %213 = arith.index_cast %212 : i32 to index
    %c0_101 = arith.constant 0 : index
    %214 = vector.load %arg9[%213, %c0_101] : memref<128x512xf32, #tpu.memory_space<vmem>>, vector<16x512xf32>
    %215 = arith.truncf %209 : vector<16x128xf32> to vector<16x128xbf16>
    %cst_102 = arith.constant dense<0.000000e+00> : vector<16x512xf32>
    %216 = tpu.matmul %215, %3, %cst_102 {dimension_numbers = #tpu.dot_dimension_numbers<[1], [0], [0], [1], [0, 0, 1, 1], [], []>} : vector<16x128xbf16>, vector<128x512xbf16>, vector<16x512xf32> -> vector<16x512xf32>
    %217 = arith.addf %214, %216 : vector<16x512xf32>
    %218 = vector.extract_strided_slice %217 {offsets = [0, 0], sizes = [16, 256], strides = [1, 1]} : vector<16x512xf32> to vector<16x256xf32>
    %219 = arith.negf %218 : vector<16x256xf32>
    %220 = math.exp %219 : vector<16x256xf32>
    %cst_103 = arith.constant 1.000000e+00 : f32
    %221 = vector.broadcast %cst_103 : f32 to vector<16x256xf32>
    %222 = arith.addf %221, %220 : vector<16x256xf32>
    %223 = arith.divf %221, %222 : vector<16x256xf32>
    %224 = vector.extract_strided_slice %223 {offsets = [0, 0], sizes = [16, 128], strides = [1, 1]} : vector<16x256xf32> to vector<16x128xf32>
    %225 = vector.extract_strided_slice %223 {offsets = [0, 128], sizes = [16, 128], strides = [1, 1]} : vector<16x256xf32> to vector<16x128xf32>
    %226 = vector.extract_strided_slice %217 {offsets = [0, 256], sizes = [16, 128], strides = [1, 1]} : vector<16x512xf32> to vector<16x128xf32>
    %227 = math.tanh %226 : vector<16x128xf32>
    %228 = vector.extract_strided_slice %217 {offsets = [0, 384], sizes = [16, 128], strides = [1, 1]} : vector<16x512xf32> to vector<16x128xf32>
    %229 = arith.negf %228 : vector<16x128xf32>
    %230 = math.exp %229 : vector<16x128xf32>
    %cst_104 = arith.constant 1.000000e+00 : f32
    %231 = vector.broadcast %cst_104 : f32 to vector<16x128xf32>
    %232 = arith.addf %231, %230 : vector<16x128xf32>
    %233 = arith.divf %231, %232 : vector<16x128xf32>
    %234 = arith.mulf %225, %210 : vector<16x128xf32>
    %235 = arith.mulf %224, %227 : vector<16x128xf32>
    %236 = arith.addf %234, %235 : vector<16x128xf32>
    %237 = math.tanh %236 : vector<16x128xf32>
    %238 = arith.mulf %233, %237 : vector<16x128xf32>
    %c0_105 = arith.constant 0 : index
    %c0_106 = arith.constant 0 : index
    %239 = vector.load %arg10[%c0_105, %c0_106] : memref<16x128xf32, #tpu.memory_space<vmem>>, vector<16x128xf32>
    tpu.vector_store %arg10[%c0_105, %c0_106], %238 {strides = array<i32>} : memref<16x128xf32, #tpu.memory_space<vmem>>, vector<16x128xf32>,
    %c0_107 = arith.constant 0 : index
    %c0_108 = arith.constant 0 : index
    %240 = vector.load %arg11[%c0_107, %c0_108] : memref<16x128xf32, #tpu.memory_space<vmem>>, vector<16x128xf32>
    tpu.vector_store %arg11[%c0_107, %c0_108], %236 {strides = array<i32>} : memref<16x128xf32, #tpu.memory_space<vmem>>, vector<16x128xf32>,
    %241 = arith.addi %17, %c5_i32 : i32
    %242 = arith.index_cast %241 : i32 to index
    %c0_109 = arith.constant 0 : index
    %c0_110 = arith.constant 0 : index
    %243 = vector.load %arg8[%242, %c0_109, %c0_110] : memref<8x16x128xf32, #tpu.memory_space<vmem>>, vector<1x16x128xf32>
    %244 = vector.shape_cast %243 : vector<1x16x128xf32> to vector<16x128xf32>
    %245 = vector.shape_cast %238 : vector<16x128xf32> to vector<1x16x128xf32>
    tpu.vector_store %arg8[%242, %c0_109, %c0_110], %245 {strides = array<i32>} : memref<8x16x128xf32, #tpu.memory_space<vmem>>, vector<1x16x128xf32>,
    %c6_i32 = arith.constant 6 : i32
    %c0_111 = arith.constant 0 : index
    %c0_112 = arith.constant 0 : index
    %246 = vector.load %arg10[%c0_111, %c0_112] : memref<16x128xf32, #tpu.memory_space<vmem>>, vector<16x128xf32>
    %c0_113 = arith.constant 0 : index
    %c0_114 = arith.constant 0 : index
    %247 = vector.load %arg11[%c0_113, %c0_114] : memref<16x128xf32, #tpu.memory_space<vmem>>, vector<16x128xf32>
    %c16_i32_115 = arith.constant 16 : i32
    %248 = arith.muli %c6_i32, %c16_i32_115 : i32
    %249 = tpu.assume_multiple %248, 16 : i32
    %250 = arith.index_cast %249 : i32 to index
    %c0_116 = arith.constant 0 : index
    %251 = vector.load %arg9[%250, %c0_116] : memref<128x512xf32, #tpu.memory_space<vmem>>, vector<16x512xf32>
    %252 = arith.truncf %246 : vector<16x128xf32> to vector<16x128xbf16>
    %cst_117 = arith.constant dense<0.000000e+00> : vector<16x512xf32>
    %253 = tpu.matmul %252, %3, %cst_117 {dimension_numbers = #tpu.dot_dimension_numbers<[1], [0], [0], [1], [0, 0, 1, 1], [], []>} : vector<16x128xbf16>, vector<128x512xbf16>, vector<16x512xf32> -> vector<16x512xf32>
    %254 = arith.addf %251, %253 : vector<16x512xf32>
    %255 = vector.extract_strided_slice %254 {offsets = [0, 0], sizes = [16, 256], strides = [1, 1]} : vector<16x512xf32> to vector<16x256xf32>
    %256 = arith.negf %255 : vector<16x256xf32>
    %257 = math.exp %256 : vector<16x256xf32>
    %cst_118 = arith.constant 1.000000e+00 : f32
    %258 = vector.broadcast %cst_118 : f32 to vector<16x256xf32>
    %259 = arith.addf %258, %257 : vector<16x256xf32>
    %260 = arith.divf %258, %259 : vector<16x256xf32>
    %261 = vector.extract_strided_slice %260 {offsets = [0, 0], sizes = [16, 128], strides = [1, 1]} : vector<16x256xf32> to vector<16x128xf32>
    %262 = vector.extract_strided_slice %260 {offsets = [0, 128], sizes = [16, 128], strides = [1, 1]} : vector<16x256xf32> to vector<16x128xf32>
    %263 = vector.extract_strided_slice %254 {offsets = [0, 256], sizes = [16, 128], strides = [1, 1]} : vector<16x512xf32> to vector<16x128xf32>
    %264 = math.tanh %263 : vector<16x128xf32>
    %265 = vector.extract_strided_slice %254 {offsets = [0, 384], sizes = [16, 128], strides = [1, 1]} : vector<16x512xf32> to vector<16x128xf32>
    %266 = arith.negf %265 : vector<16x128xf32>
    %267 = math.exp %266 : vector<16x128xf32>
    %cst_119 = arith.constant 1.000000e+00 : f32
    %268 = vector.broadcast %cst_119 : f32 to vector<16x128xf32>
    %269 = arith.addf %268, %267 : vector<16x128xf32>
    %270 = arith.divf %268, %269 : vector<16x128xf32>
    %271 = arith.mulf %262, %247 : vector<16x128xf32>
    %272 = arith.mulf %261, %264 : vector<16x128xf32>
    %273 = arith.addf %271, %272 : vector<16x128xf32>
    %274 = math.tanh %273 : vector<16x128xf32>
    %275 = arith.mulf %270, %274 : vector<16x128xf32>
    %c0_120 = arith.constant 0 : index
    %c0_121 = arith.constant 0 : index
    %276 = vector.load %arg10[%c0_120, %c0_121] : memref<16x128xf32, #tpu.memory_space<vmem>>, vector<16x128xf32>
    tpu.vector_store %arg10[%c0_120, %c0_121], %275 {strides = array<i32>} : memref<16x128xf32, #tpu.memory_space<vmem>>, vector<16x128xf32>,
    %c0_122 = arith.constant 0 : index
    %c0_123 = arith.constant 0 : index
    %277 = vector.load %arg11[%c0_122, %c0_123] : memref<16x128xf32, #tpu.memory_space<vmem>>, vector<16x128xf32>
    tpu.vector_store %arg11[%c0_122, %c0_123], %273 {strides = array<i32>} : memref<16x128xf32, #tpu.memory_space<vmem>>, vector<16x128xf32>,
    %278 = arith.addi %17, %c6_i32 : i32
    %279 = arith.index_cast %278 : i32 to index
    %c0_124 = arith.constant 0 : index
    %c0_125 = arith.constant 0 : index
    %280 = vector.load %arg8[%279, %c0_124, %c0_125] : memref<8x16x128xf32, #tpu.memory_space<vmem>>, vector<1x16x128xf32>
    %281 = vector.shape_cast %280 : vector<1x16x128xf32> to vector<16x128xf32>
    %282 = vector.shape_cast %275 : vector<16x128xf32> to vector<1x16x128xf32>
    tpu.vector_store %arg8[%279, %c0_124, %c0_125], %282 {strides = array<i32>} : memref<8x16x128xf32, #tpu.memory_space<vmem>>, vector<1x16x128xf32>,
    %c7_i32 = arith.constant 7 : i32
    %c0_126 = arith.constant 0 : index
    %c0_127 = arith.constant 0 : index
    %283 = vector.load %arg10[%c0_126, %c0_127] : memref<16x128xf32, #tpu.memory_space<vmem>>, vector<16x128xf32>
    %c0_128 = arith.constant 0 : index
    %c0_129 = arith.constant 0 : index
    %284 = vector.load %arg11[%c0_128, %c0_129] : memref<16x128xf32, #tpu.memory_space<vmem>>, vector<16x128xf32>
    %c16_i32_130 = arith.constant 16 : i32
    %285 = arith.muli %c7_i32, %c16_i32_130 : i32
    %286 = tpu.assume_multiple %285, 16 : i32
    %287 = arith.index_cast %286 : i32 to index
    %c0_131 = arith.constant 0 : index
    %288 = vector.load %arg9[%287, %c0_131] : memref<128x512xf32, #tpu.memory_space<vmem>>, vector<16x512xf32>
    %289 = arith.truncf %283 : vector<16x128xf32> to vector<16x128xbf16>
    %cst_132 = arith.constant dense<0.000000e+00> : vector<16x512xf32>
    %290 = tpu.matmul %289, %3, %cst_132 {dimension_numbers = #tpu.dot_dimension_numbers<[1], [0], [0], [1], [0, 0, 1, 1], [], []>} : vector<16x128xbf16>, vector<128x512xbf16>, vector<16x512xf32> -> vector<16x512xf32>
    %291 = arith.addf %288, %290 : vector<16x512xf32>
    %292 = vector.extract_strided_slice %291 {offsets = [0, 0], sizes = [16, 256], strides = [1, 1]} : vector<16x512xf32> to vector<16x256xf32>
    %293 = arith.negf %292 : vector<16x256xf32>
    %294 = math.exp %293 : vector<16x256xf32>
    %cst_133 = arith.constant 1.000000e+00 : f32
    %295 = vector.broadcast %cst_133 : f32 to vector<16x256xf32>
    %296 = arith.addf %295, %294 : vector<16x256xf32>
    %297 = arith.divf %295, %296 : vector<16x256xf32>
    %298 = vector.extract_strided_slice %297 {offsets = [0, 0], sizes = [16, 128], strides = [1, 1]} : vector<16x256xf32> to vector<16x128xf32>
    %299 = vector.extract_strided_slice %297 {offsets = [0, 128], sizes = [16, 128], strides = [1, 1]} : vector<16x256xf32> to vector<16x128xf32>
    %300 = vector.extract_strided_slice %291 {offsets = [0, 256], sizes = [16, 128], strides = [1, 1]} : vector<16x512xf32> to vector<16x128xf32>
    %301 = math.tanh %300 : vector<16x128xf32>
    %302 = vector.extract_strided_slice %291 {offsets = [0, 384], sizes = [16, 128], strides = [1, 1]} : vector<16x512xf32> to vector<16x128xf32>
    %303 = arith.negf %302 : vector<16x128xf32>
    %304 = math.exp %303 : vector<16x128xf32>
    %cst_134 = arith.constant 1.000000e+00 : f32
    %305 = vector.broadcast %cst_134 : f32 to vector<16x128xf32>
    %306 = arith.addf %305, %304 : vector<16x128xf32>
    %307 = arith.divf %305, %306 : vector<16x128xf32>
    %308 = arith.mulf %299, %284 : vector<16x128xf32>
    %309 = arith.mulf %298, %301 : vector<16x128xf32>
    %310 = arith.addf %308, %309 : vector<16x128xf32>
    %311 = math.tanh %310 : vector<16x128xf32>
    %312 = arith.mulf %307, %311 : vector<16x128xf32>
    %c0_135 = arith.constant 0 : index
    %c0_136 = arith.constant 0 : index
    %313 = vector.load %arg10[%c0_135, %c0_136] : memref<16x128xf32, #tpu.memory_space<vmem>>, vector<16x128xf32>
    tpu.vector_store %arg10[%c0_135, %c0_136], %312 {strides = array<i32>} : memref<16x128xf32, #tpu.memory_space<vmem>>, vector<16x128xf32>,
    %c0_137 = arith.constant 0 : index
    %c0_138 = arith.constant 0 : index
    %314 = vector.load %arg11[%c0_137, %c0_138] : memref<16x128xf32, #tpu.memory_space<vmem>>, vector<16x128xf32>
    tpu.vector_store %arg11[%c0_137, %c0_138], %310 {strides = array<i32>} : memref<16x128xf32, #tpu.memory_space<vmem>>, vector<16x128xf32>,
    %315 = arith.addi %17, %c7_i32 : i32
    %316 = arith.index_cast %315 : i32 to index
    %c0_139 = arith.constant 0 : index
    %c0_140 = arith.constant 0 : index
    %317 = vector.load %arg8[%316, %c0_139, %c0_140] : memref<8x16x128xf32, #tpu.memory_space<vmem>>, vector<1x16x128xf32>
    %318 = vector.shape_cast %317 : vector<1x16x128xf32> to vector<16x128xf32>
    %319 = vector.shape_cast %312 : vector<16x128xf32> to vector<1x16x128xf32>
    tpu.vector_store %arg8[%316, %c0_139, %c0_140], %319 {strides = array<i32>} : memref<8x16x128xf32, #tpu.memory_space<vmem>>, vector<1x16x128xf32>,
    %c8_i32_141 = arith.constant 8 : i32
    %c1_i32_142 = arith.constant 1 : i32
    return
  }
  func.func @transform_0(%arg0: i32, %arg1: i32) -> (i32, i32, i32) {
    %c0_i32 = arith.constant 0 : i32
    %c0_i32_0 = arith.constant 0 : i32
    %c0_i32_1 = arith.constant 0 : i32
    return %c0_i32, %arg0, %c0_i32_0 : i32, i32, i32
  }
  func.func @transform_1(%arg0: i32, %arg1: i32) -> (i32, i32, i32) {
    %c0_i32 = arith.constant 0 : i32
    %c0_i32_0 = arith.constant 0 : i32
    %c0_i32_1 = arith.constant 0 : i32
    return %arg1, %c0_i32, %c0_i32_0 : i32, i32, i32
  }
  func.func @transform_2(%arg0: i32, %arg1: i32) -> (i32, i32, i32) {
    %c0_i32 = arith.constant 0 : i32
    %c0_i32_0 = arith.constant 0 : i32
    %c0_i32_1 = arith.constant 0 : i32
    return %arg1, %c0_i32, %c0_i32_0 : i32, i32, i32
  }
  func.func @transform_3(%arg0: i32, %arg1: i32) -> (i32, i32, i32) {
    %c0_i32 = arith.constant 0 : i32
    %c0_i32_0 = arith.constant 0 : i32
    %c0_i32_1 = arith.constant 0 : i32
    return %arg1, %c0_i32, %c0_i32_0 : i32, i32, i32
  }
  func.func @transform_4(%arg0: i32, %arg1: i32) -> (i32, i32, i32) {
    %c0_i32 = arith.constant 0 : i32
    %c0_i32_0 = arith.constant 0 : i32
    %c0_i32_1 = arith.constant 0 : i32
    return %arg1, %c0_i32, %c0_i32_0 : i32, i32, i32
  }
  func.func @transform_5(%arg0: i32, %arg1: i32) -> (i32, i32, i32) {
    %c0_i32 = arith.constant 0 : i32
    %c0_i32_0 = arith.constant 0 : i32
    %c0_i32_1 = arith.constant 0 : i32
    return %arg1, %c0_i32, %c0_i32_0 : i32, i32, i32
  }
  func.func @transform_6(%arg0: i32, %arg1: i32) -> (i32, i32, i32) {
    %c0_i32 = arith.constant 0 : i32
    %c0_i32_0 = arith.constant 0 : i32
    %c0_i32_1 = arith.constant 0 : i32
    return %c0_i32, %arg0, %c0_i32_0 : i32, i32, i32
  }
}

module attributes {stable_mosaic.version = 11 : i64} {
  func.func @_proj_kernel(%arg0: i32, %arg1: i32, %arg2: memref<16x128xbf16, #tpu.memory_space<vmem>>, %arg3: memref<128x256xbf16, #tpu.memory_space<vmem>>, %arg4: memref<1x256xf32, #tpu.memory_space<vmem>>, %arg5: memref<16x256xf32, #tpu.memory_space<vmem>>) attributes {dimension_semantics = [#tpu.dimension_semantics<parallel>, #tpu.dimension_semantics<parallel>], iteration_bounds = array<i64: 1, 1>, scalar_prefetch = 0 : i64, scratch_operands = 0 : i64, tpu.core_type = #tpu.core_type<tc>, window_params = [{transform_indices = @transform_0, window_bounds = array<i64: 16, 128>}, {transform_indices = @transform_1, window_bounds = array<i64: 128, 256>}, {transform_indices = @transform_2, window_bounds = array<i64: 1, 256>}, {transform_indices = @transform_3, window_bounds = array<i64: 16, 256>}]} {
    %c0 = arith.constant 0 : index
    %c0_0 = arith.constant 0 : index
    %0 = vector.load %arg2[%c0, %c0_0] : memref<16x128xbf16, #tpu.memory_space<vmem>>, vector<16x128xbf16>
    %c0_1 = arith.constant 0 : index
    %c0_2 = arith.constant 0 : index
    %1 = vector.load %arg3[%c0_1, %c0_2] : memref<128x256xbf16, #tpu.memory_space<vmem>>, vector<128x256xbf16>
    %cst = arith.constant dense<0.000000e+00> : vector<16x256xf32>
    %2 = tpu.matmul %0, %1, %cst {dimension_numbers = #tpu.dot_dimension_numbers<[1], [0], [0], [1], [0, 0, 1, 1], [], []>} : vector<16x128xbf16>, vector<128x256xbf16>, vector<16x256xf32> -> vector<16x256xf32>
    %c0_3 = arith.constant 0 : index
    %c0_4 = arith.constant 0 : index
    %3 = vector.load %arg4[%c0_3, %c0_4] : memref<1x256xf32, #tpu.memory_space<vmem>>, vector<1x256xf32>
    %4 = vector.broadcast %3 : vector<1x256xf32> to vector<16x256xf32>
    %5 = arith.addf %2, %4 : vector<16x256xf32>
    %c0_5 = arith.constant 0 : index
    %c0_6 = arith.constant 0 : index
    %6 = vector.load %arg5[%c0_5, %c0_6] : memref<16x256xf32, #tpu.memory_space<vmem>>, vector<16x256xf32>
    tpu.vector_store %arg5[%c0_5, %c0_6], %5 {strides = array<i32>} : memref<16x256xf32, #tpu.memory_space<vmem>>, vector<16x256xf32>,
    return
  }
  func.func @transform_0(%arg0: i32, %arg1: i32) -> (i32, i32) {
    %c0_i32 = arith.constant 0 : i32
    %c0_i32_0 = arith.constant 0 : i32
    return %arg0, %c0_i32 : i32, i32
  }
  func.func @transform_1(%arg0: i32, %arg1: i32) -> (i32, i32) {
    %c0_i32 = arith.constant 0 : i32
    %c0_i32_0 = arith.constant 0 : i32
    return %c0_i32, %arg1 : i32, i32
  }
  func.func @transform_2(%arg0: i32, %arg1: i32) -> (i32, i32) {
    %c0_i32 = arith.constant 0 : i32
    %c0_i32_0 = arith.constant 0 : i32
    return %c0_i32, %arg1 : i32, i32
  }
  func.func @transform_3(%arg0: i32, %arg1: i32) -> (i32, i32) {
    %c0_i32 = arith.constant 0 : i32
    return %arg0, %arg1 : i32, i32
  }
}

</mosaic_0001>

<llo_original>
// kernel: segment_lstm_encoder_forward.3
$region0: #{segment_lstm_encoder_forward.3}
  #allocation0 [shape = 'u32[]', space=smem, size = 0x4, offset = 0x4, fixed_abs, tag = 'smem constant byte address 0x4 - core index']
  #allocation1 [shape = 'u32[144,128]{1,0:T(1,128)}', space=vmem, size = 0x12000, scoped, tag = 'internal scratch']
  %s0 = inlined_call_operand.vmem [shape: bf16[16,128], index: 0, kind: input, shape index: {}]
  %s1 = inlined_call_operand.vmem [shape: bf16[128,256], index: 1, kind: input, shape index: {}]
  %s2 = inlined_call_operand.vmem [shape: f32[1,256], index: 2, kind: input, shape index: {}]
  %s3 = inlined_call_operand.vmem [shape: f32[16,256], index: 3, kind: output, shape index: {}]
  %s4 = sld [smem:[#allocation0]]
  $region22: #{segment_lstm_encoder_forward.3} parent=0
    _
  %s6 = ssub.s32 1, %s4
  %s7 = scalar_select 0, %s6, %s4
  // Predicated region
  $region2: #{segment_lstm_encoder_forward.3} parent=0 // pred_check
    _
  $region3: #{segment_lstm_encoder_forward.3} parent=0 // pred_check_branch
    %9 = sbr.rel (0) target = $region5
  $region4: #{segment_lstm_encoder_forward.3} parent=0 // pred_region
    _
  $region5: #{segment_lstm_encoder_forward.3} parent=0 // pred_fallthru
    _
  // Predicated region
  $region6: #{segment_lstm_encoder_forward.3} parent=0 // pred_check
    _
  $region7: #{segment_lstm_encoder_forward.3} parent=0 // pred_check_branch
    %11 = sbr.rel (0) target = $region9
  $region8: #{segment_lstm_encoder_forward.3} parent=0 // pred_region
    _
  $region9: #{segment_lstm_encoder_forward.3} parent=0 // pred_fallthru
    _
  // Predicated region
  $region10: #{segment_lstm_encoder_forward.3} parent=0 // pred_check
    _
  $region11: #{segment_lstm_encoder_forward.3} parent=0 // pred_check_branch
    %13 = sbr.rel (0) target = $region13
  $region12: #{segment_lstm_encoder_forward.3} parent=0 // pred_region
    _
  $region13: #{segment_lstm_encoder_forward.3} parent=0 // pred_fallthru
    _
  %v15 = vld [vmem:[%s0] sm:$0xf]
  %v16 = vld [vmem:[%s0 + $0x4] sm:$0xf]
  %v17 = vld [vmem:[%s1] sm:$0xff]
  %v18 = vld [vmem:[%s1 + $0x8] sm:$0xff]
  %v19 = vld [vmem:[%s1 + $0x10] sm:$0xff]
  %v20 = vld [vmem:[%s1 + $0x18] sm:$0xff]
  %v21 = vld [vmem:[%s1 + $0x20] sm:$0xff]
  %v22 = vld [vmem:[%s1 + $0x28] sm:$0xff]
  %v23 = vld [vmem:[%s1 + $0x30] sm:$0xff]
  %v24 = vld [vmem:[%s1 + $0x38] sm:$0xff]
  %v25 = vld [vmem:[%s1 + $0x40] sm:$0xff]
  %v26 = vld [vmem:[%s1 + $0x48] sm:$0xff]
  %v27 = vld [vmem:[%s1 + $0x50] sm:$0xff]
  %v28 = vld [vmem:[%s1 + $0x58] sm:$0xff]
  %v29 = vld [vmem:[%s1 + $0x60] sm:$0xff]
  %v30 = vld [vmem:[%s1 + $0x68] sm:$0xff]
  %v31 = vld [vmem:[%s1 + $0x70] sm:$0xff]
  %v32 = vld [vmem:[%s1 + $0x78] sm:$0xff]
  %v33 = vld [vmem:[%s2] sm:$0x3]
  %v35 = vlaneseq
  %v36 = vshrl.u32 %v35, 7
  %v37 = vsub.s32 0, %v36
  %v38 = vrot.slane %v33, %v37
  %v39 = vlaneseq
  %v40 = vshrl.u32 %v39, 7
  %v41 = vsub.s32 1, %v40
  %v42 = vrot.slane %v33, %v41
  %v47 = vunpack.c.l.b16 %v15
  %v48 = vunpack.c.l.b16 %v16
  %v49 = vpack.c.b16 %v48, %v47
  %v67 = vunpack.c.l.b16 %v17
  %v68 = vunpack.c.h.b16 %v17
  %v69 = vunpack.c.l.b16 %v18
  %v70 = vunpack.c.h.b16 %v18
  %v71 = vunpack.c.l.b16 %v19
  %v72 = vunpack.c.h.b16 %v19
  %v73 = vunpack.c.l.b16 %v20
  %v74 = vunpack.c.h.b16 %v20
  %v75 = vunpack.c.l.b16 %v21
  %v76 = vunpack.c.h.b16 %v21
  %v77 = vunpack.c.l.b16 %v22
  %v78 = vunpack.c.h.b16 %v22
  %v79 = vunpack.c.l.b16 %v23
  %v80 = vunpack.c.h.b16 %v23
  %v81 = vunpack.c.l.b16 %v24
  %v82 = vunpack.c.h.b16 %v24
  %v83 = vunpack.c.l.b16 %v25
  %v84 = vunpack.c.h.b16 %v25
  %v85 = vunpack.c.l.b16 %v26
  %v86 = vunpack.c.h.b16 %v26
  %v87 = vunpack.c.l.b16 %v27
  %v88 = vunpack.c.h.b16 %v27
  %v89 = vunpack.c.l.b16 %v28
  %v90 = vunpack.c.h.b16 %v28
  %v91 = vunpack.c.l.b16 %v29
  %v92 = vunpack.c.h.b16 %v29
  %v93 = vunpack.c.l.b16 %v30
  %v94 = vunpack.c.h.b16 %v30
  %v95 = vunpack.c.l.b16 %v31
  %v96 = vunpack.c.h.b16 %v31
  %v97 = vunpack.c.l.b16 %v32
  %v98 = vunpack.c.h.b16 %v32
  %v99 = vpack.c.b16 %v69, %v67
  %v100 = vpack.c.b16 %v70, %v68
  %v101 = vpack.c.b16 %v73, %v71
  %v102 = vpack.c.b16 %v74, %v72
  %v103 = vpack.c.b16 %v77, %v75
  %v104 = vpack.c.b16 %v78, %v76
  %v105 = vpack.c.b16 %v81, %v79
  %v106 = vpack.c.b16 %v82, %v80
  %v107 = vpack.c.b16 %v85, %v83
  %v108 = vpack.c.b16 %v86, %v84
  %v109 = vpack.c.b16 %v89, %v87
  %v110 = vpack.c.b16 %v90, %v88
  %v111 = vpack.c.b16 %v93, %v91
  %v112 = vpack.c.b16 %v94, %v92
  %v113 = vpack.c.b16 %v97, %v95
  %v114 = vpack.c.b16 %v98, %v96
  %131 = vmatprep.subr.bf16.mxu0 %v100
  %132 = vmatpush1.bf16.msra.mxu0 %v99
  %133 = vmatprep.subr.bf16.mxu0 %v102
  %134 = vmatpush1.bf16.msra.mxu0 %v101
  %135 = vmatprep.subr.bf16.mxu0 %v104
  %136 = vmatpush1.bf16.msra.mxu0 %v103
  %137 = vmatprep.subr.bf16.mxu0 %v106
  %138 = vmatpush1.bf16.msra.mxu0 %v105
  %139 = vmatprep.subr.bf16.mxu0 %v108
  %140 = vmatpush1.bf16.msra.mxu0 %v107
  %141 = vmatprep.subr.bf16.mxu0 %v110
  %142 = vmatpush1.bf16.msra.mxu0 %v109
  %143 = vmatprep.subr.bf16.mxu0 %v112
  %144 = vmatpush1.bf16.msra.mxu0 %v111
  %145 = vmatprep.subr.bf16.mxu0 %v114
  %146 = vmatpush1.bf16.msra.mxu0 %v113
  %147 = vmatprep.subr.bf16.mxu0 0
  %148 = vmatpush1.bf16.msra.mxu0 0
  %149 = vmatprep.subr.bf16.mxu0 0
  %150 = vmatpush1.bf16.msra.mxu0 0
  %151 = vmatprep.subr.bf16.mxu0 0
  %152 = vmatpush1.bf16.msra.mxu0 0
  %153 = vmatprep.subr.bf16.mxu0 0
  %154 = vmatpush1.bf16.msra.mxu0 0
  %155 = vmatprep.subr.bf16.mxu0 0
  %156 = vmatpush1.bf16.msra.mxu0 0
  %157 = vmatprep.subr.bf16.mxu0 0
  %158 = vmatpush1.bf16.msra.mxu0 0
  %159 = vmatprep.subr.bf16.mxu0 0
  %160 = vmatpush1.bf16.msra.mxu0 0
  %161 = vmatprep.subr.bf16.mxu0 0
  %162 = vmatpush1.bf16.msra.mxu0 0
  %163 = vmatprep.mubr.bf16.mxu0 0
  %164 = vmatmul.mubr.bf16.gmra.mrb[0].mxu0 %v49
  %v165 = vpop.f32.mrb[0].mxu0
  %v166 = vadd.f32 %v38, %v165
  %v167 = vpop.f32.mrb[0].mxu0
  %v168 = vadd.f32 %v42, %v167
  %v169 = vpop.f32.mrb[0].mxu0
  %v170 = vadd.f32 %v38, %v169
  %v171 = vpop.f32.mrb[0].mxu0
  %v172 = vadd.f32 %v42, %v171
  %173 = vdwg.mxu0
  %174 = vst [vmem:[%s3] sm:$0xff] %v166
  %175 = vst [vmem:[%s3 + $0x8] sm:$0xff] %v168
  %176 = vst [vmem:[%s3 + $0x10] sm:$0xff] %v170
  %177 = vst [vmem:[%s3 + $0x18] sm:$0xff] %v172
  // Predicated region
  $region14: #{segment_lstm_encoder_forward.3} parent=0 // pred_check
    _
  $region15: #{segment_lstm_encoder_forward.3} parent=0 // pred_check_branch
    %179 = sbr.rel (0) target = $region17
  $region16: #{segment_lstm_encoder_forward.3} parent=0 // pred_region
    _
  $region17: #{segment_lstm_encoder_forward.3} parent=0 // pred_fallthru
    _
  // Predicated region
  $region18: #{segment_lstm_encoder_forward.3} parent=0 // pred_check
    _
  $region19: #{segment_lstm_encoder_forward.3} parent=0 // pred_check_branch
    %181 = sbr.rel (0) target = $region21
  $region20: #{segment_lstm_encoder_forward.3} parent=0 // pred_region
    _
  $region21: #{segment_lstm_encoder_forward.3} parent=0 // pred_fallthru
    _

// kernel: segment_lstm_encoder_forward.2
$region0: #{segment_lstm_encoder_forward.2}
  #allocation0 [shape = 'u32[]', space=smem, size = 0x4, offset = 0x4, fixed_abs, tag = 'smem constant byte address 0x4 - core index']
  #allocation1 [shape = 'u32[144,128]{1,0:T(1,128)}', space=vmem, size = 0x12000, scoped, tag = 'internal scratch']
  #allocation2 [shape = 'f32[128,512]{1,0:T(8,128)}', space=vmem, size = 0x40000, scoped, tag = 'scratch operand']
  #allocation3 [shape = 'f32[16,128]{1,0:T(8,128)}', space=vmem, size = 0x2000, scoped, tag = 'scratch operand']
  #allocation4 [shape = 'f32[16,128]{1,0:T(8,128)}', space=vmem, size = 0x2000, scoped, tag = 'scratch operand']
  %s0 = inlined_call_operand.vmem [shape: bf16[8,16,128], index: 0, kind: input, shape index: {}]
  %s1 = inlined_call_operand.vmem [shape: bf16[2,128,512], index: 1, kind: input, shape index: {}]
  %s2 = inlined_call_operand.vmem [shape: bf16[2,128,512], index: 2, kind: input, shape index: {}]
  %s3 = inlined_call_operand.vmem [shape: f32[2,1,512], index: 3, kind: input, shape index: {}]
  %s4 = inlined_call_operand.vmem [shape: f32[2,1,128], index: 4, kind: input, shape index: {}]
  %s5 = inlined_call_operand.vmem [shape: f32[2,1,128], index: 5, kind: input, shape index: {}]
  %s6 = inlined_call_operand.vmem [shape: f32[8,16,128], index: 6, kind: output, shape index: {}]
  %s7 = sld [smem:[#allocation0]]
  $region65: #{segment_lstm_encoder_forward.2} parent=0
    _
  %s9 = ssub.s32 1, %s7
  %s10 = scalar_select 0, %s9, %s7
  loop: start=0, step=1, limit=4
  $region2: #{segment_lstm_encoder_forward.2} parent=0 // loop_pre_header
    _
  $region3: #{segment_lstm_encoder_forward.2} parent=0 // loop_header
    %s12 = sphi 0, %s16
    %p13 = scmp.ge.s32.totalorder %s12, 4
    %s19 = sphi 0, %s31
    %s20 = sphi 0, %s27
    %s21 = sphi 0, %s19
    %s22 = sphi 0, %s20
    %s23 = sphi 0, %s21
    %s24 = sphi 0, %s22
    %s34 = sphi 0, %s36
    %s37 = sphi 0, %s34
    %s38 = sphi 0, %s37
    %s54 = sphi 0, %s38
    %s60 = sphi 0, %s62
    %s63 = sphi 0, %s60
    %s64 = sphi 0, %s63
    %s80 = sphi 0, %s64
    %s86 = sphi 0, %s88
    %s89 = sphi 0, %s86
    %s90 = sphi 0, %s89
    %s106 = sphi 0, %s90
    %s112 = sphi 0, %s114
    %s115 = sphi 0, %s112
    %s116 = sphi 0, %s115
    %s132 = sphi 0, %s116
    %s138 = sphi 0, %s140
    %s141 = sphi 0, %s138
    %s142 = sphi 0, %s141
    %s158 = sphi 0, %s142
    %s164 = sphi 0, %s166
    %s167 = sphi 0, %s164
    %s168 = sphi 0, %s167
    %s184 = sphi 0, %s168
    %s190 = sphi 0, %s192
    %s193 = sphi 0, %s190
    %s194 = sphi 0, %s193
    %s210 = sphi 0, %s194
  $region4: #{segment_lstm_encoder_forward.2} parent=0 // loop_header_branch
    %15 = sbr.rel (%p13) target = $region8
  $region5: #{segment_lstm_encoder_forward.2} parent=0 // loop_body
    %s17 = ssub.s32 %s12, 1
    %s18 = ssub.s32 %s12, 2
    %s25 = sadd.s32 1, %s20
    %p26 = scmp.ge.s32.totalorder %s25, 2
    %s27 = scalar_select %p26, 0, %s25
    %s28 = sadd.s32 1, %s19
    %s29 = scalar_select %p26, %s28, %s19
    %p30 = scmp.ge.s32.totalorder %s29, 1
    %s31 = scalar_select %p30, 0, %s29
    %s32 = ssub.s32 %s19, %s31
    %p33 = scmp.eq.s32.totalorder %s32, 0
    %s35 = sadd.s32 %s34, 1
    %s36 = scalar_select %p33, %s34, %s35
    %p39 = pneg %p33
    %p40 = scmp.eq.s32.totalorder %s12, 1
    %p41 = por %p39, %p40
    %p42 = scmp.ne.s32.totalorder %s34, %s37
    %p43 = scmp.eq.s32.totalorder %s12, 0
    %p44 = por %p42, %p43
    %p45 = scmp.ne.s32.totalorder %s34, %s37
    %p46 = scmp.eq.s32.totalorder %s17, 1
    %p47 = por %p45, %p46
    %p48 = scmp.ne.s32.totalorder %s37, %s38
    %p49 = scmp.eq.s32.totalorder %s17, 0
    %p50 = por %p48, %p49
    %p51 = scmp.ne.s32.totalorder %s37, %s38
    %p52 = scmp.eq.s32.totalorder %s18, 1
    %p53 = por %p51, %p52
    %p55 = scmp.ne.s32.totalorder %s38, %s54
    %p56 = scmp.eq.s32.totalorder %s18, 0
    %p57 = por %p55, %p56
    %s58 = ssub.s32 %s20, %s27
    %p59 = scmp.eq.s32.totalorder %s58, 0
    %s61 = sadd.s32 %s60, 1
    %s62 = scalar_select %p59, %s60, %s61
    %p65 = pneg %p59
    %p66 = scmp.eq.s32.totalorder %s12, 1
    %p67 = por %p65, %p66
    %p68 = scmp.ne.s32.totalorder %s60, %s63
    %p69 = scmp.eq.s32.totalorder %s12, 0
    %p70 = por %p68, %p69
    %p71 = scmp.ne.s32.totalorder %s60, %s63
    %p72 = scmp.eq.s32.totalorder %s17, 1
    %p73 = por %p71, %p72
    %p74 = scmp.ne.s32.totalorder %s63, %s64
    %p75 = scmp.eq.s32.totalorder %s17, 0
    %p76 = por %p74, %p75
    %p77 = scmp.ne.s32.totalorder %s63, %s64
    %p78 = scmp.eq.s32.totalorder %s18, 1
    %p79 = por %p77, %p78
    %p81 = scmp.ne.s32.totalorder %s64, %s80
    %p82 = scmp.eq.s32.totalorder %s18, 0
    %p83 = por %p81, %p82
    %s84 = ssub.s32 %s20, %s27
    %p85 = scmp.eq.s32.totalorder %s84, 0
    %s87 = sadd.s32 %s86, 1
    %s88 = scalar_select %p85, %s86, %s87
    %p91 = pneg %p85
    %p92 = scmp.eq.s32.totalorder %s12, 1
    %p93 = por %p91, %p92
    %p94 = scmp.ne.s32.totalorder %s86, %s89
    %p95 = scmp.eq.s32.totalorder %s12, 0
    %p96 = por %p94, %p95
    %p97 = scmp.ne.s32.totalorder %s86, %s89
    %p98 = scmp.eq.s32.totalorder %s17, 1
    %p99 = por %p97, %p98
    %p100 = scmp.ne.s32.totalorder %s89, %s90
    %p101 = scmp.eq.s32.totalorder %s17, 0
    %p102 = por %p100, %p101
    %p103 = scmp.ne.s32.totalorder %s89, %s90
    %p104 = scmp.eq.s32.totalorder %s18, 1
    %p105 = por %p103, %p104
    %p107 = scmp.ne.s32.totalorder %s90, %s106
    %p108 = scmp.eq.s32.totalorder %s18, 0
    %p109 = por %p107, %p108
    %s110 = ssub.s32 %s20, %s27
    %p111 = scmp.eq.s32.totalorder %s110, 0
    %s113 = sadd.s32 %s112, 1
    %s114 = scalar_select %p111, %s112, %s113
    %p117 = pneg %p111
    %p118 = scmp.eq.s32.totalorder %s12, 1
    %p119 = por %p117, %p118
    %p120 = scmp.ne.s32.totalorder %s112, %s115
    %p121 = scmp.eq.s32.totalorder %s12, 0
    %p122 = por %p120, %p121
    %p123 = scmp.ne.s32.totalorder %s112, %s115
    %p124 = scmp.eq.s32.totalorder %s17, 1
    %p125 = por %p123, %p124
    %p126 = scmp.ne.s32.totalorder %s115, %s116
    %p127 = scmp.eq.s32.totalorder %s17, 0
    %p128 = por %p126, %p127
    %p129 = scmp.ne.s32.totalorder %s115, %s116
    %p130 = scmp.eq.s32.totalorder %s18, 1
    %p131 = por %p129, %p130
    %p133 = scmp.ne.s32.totalorder %s116, %s132
    %p134 = scmp.eq.s32.totalorder %s18, 0
    %p135 = por %p133, %p134
    %s136 = ssub.s32 %s20, %s27
    %p137 = scmp.eq.s32.totalorder %s136, 0
    %s139 = sadd.s32 %s138, 1
    %s140 = scalar_select %p137, %s138, %s139
    %p143 = pneg %p137
    %p144 = scmp.eq.s32.totalorder %s12, 1
    %p145 = por %p143, %p144
    %p146 = scmp.ne.s32.totalorder %s138, %s141
    %p147 = scmp.eq.s32.totalorder %s12, 0
    %p148 = por %p146, %p147
    %p149 = scmp.ne.s32.totalorder %s138, %s141
    %p150 = scmp.eq.s32.totalorder %s17, 1
    %p151 = por %p149, %p150
    %p152 = scmp.ne.s32.totalorder %s141, %s142
    %p153 = scmp.eq.s32.totalorder %s17, 0
    %p154 = por %p152, %p153
    %p155 = scmp.ne.s32.totalorder %s141, %s142
    %p156 = scmp.eq.s32.totalorder %s18, 1
    %p157 = por %p155, %p156
    %p159 = scmp.ne.s32.totalorder %s142, %s158
    %p160 = scmp.eq.s32.totalorder %s18, 0
    %p161 = por %p159, %p160
    %s162 = ssub.s32 %s20, %s27
    %p163 = scmp.eq.s32.totalorder %s162, 0
    %s165 = sadd.s32 %s164, 1
    %s166 = scalar_select %p163, %s164, %s165
    %p169 = pneg %p163
    %p170 = scmp.eq.s32.totalorder %s12, 1
    %p171 = por %p169, %p170
    %p172 = scmp.ne.s32.totalorder %s164, %s167
    %p173 = scmp.eq.s32.totalorder %s12, 0
    %p174 = por %p172, %p173
    %p175 = scmp.ne.s32.totalorder %s164, %s167
    %p176 = scmp.eq.s32.totalorder %s17, 1
    %p177 = por %p175, %p176
    %p178 = scmp.ne.s32.totalorder %s167, %s168
    %p179 = scmp.eq.s32.totalorder %s17, 0
    %p180 = por %p178, %p179
    %p181 = scmp.ne.s32.totalorder %s167, %s168
    %p182 = scmp.eq.s32.totalorder %s18, 1
    %p183 = por %p181, %p182
    %p185 = scmp.ne.s32.totalorder %s168, %s184
    %p186 = scmp.eq.s32.totalorder %s18, 0
    %p187 = por %p185, %p186
    %s188 = ssub.s32 %s19, %s31
    %p189 = scmp.eq.s32.totalorder %s188, 0
    %s191 = sadd.s32 %s190, 1
    %s192 = scalar_select %p189, %s190, %s191
    %p195 = pneg %p189
    %p196 = scmp.eq.s32.totalorder %s12, 1
    %p197 = por %p195, %p196
    %p198 = scmp.ne.s32.totalorder %s190, %s193
    %p199 = scmp.eq.s32.totalorder %s12, 0
    %p200 = por %p198, %p199
    %p201 = scmp.ne.s32.totalorder %s190, %s193
    %p202 = scmp.eq.s32.totalorder %s17, 1
    %p203 = por %p201, %p202
    %p204 = scmp.ne.s32.totalorder %s193, %s194
    %p205 = scmp.eq.s32.totalorder %s17, 0
    %p206 = por %p204, %p205
    %p207 = scmp.ne.s32.totalorder %s193, %s194
    %p208 = scmp.eq.s32.totalorder %s18, 1
    %p209 = por %p207, %p208
    %p211 = scmp.ne.s32.totalorder %s194, %s210
    %p212 = scmp.eq.s32.totalorder %s18, 0
    %p213 = por %p211, %p212
    %p214 = scmp.le.s32.totalorder 1, %s12
    %p215 = scmp.lt.s32.totalorder %s12, 3
    %p216 = pnand %p214, %p215
    %p217 = pneg %p216
    // Predicated region
    $region9: #{segment_lstm_encoder_forward.2} parent=5 // pred_check
      _
    $region10: #{segment_lstm_encoder_forward.2} parent=5 // pred_check_branch
      %219 = sbr.rel (%p216) target = $region12
    $region11: #{segment_lstm_encoder_forward.2} parent=5 // pred_region
      %s220 = ssub.s32 %s12, 1
      // Predicated region
      $region13: #{segment_lstm_encoder_forward.2} parent=11 // pred_check
        %p221 = pneg %p50
      $region14: #{segment_lstm_encoder_forward.2} parent=11 // pred_check_branch
        %223 = sbr.rel (%p221) target = $region16
      $region15: #{segment_lstm_encoder_forward.2} parent=11 // pred_region
        %s224 = smul.u32 2, %s21
        %p225 = scmp.lt.s32.totalorder %s224, 1
        %s226 = scalar_select %p225, %s224, 1
        %s227 = smul.addr %s226, 4
        %s228 = scalar_lea.vmem %s0, %s227
        %s229 = smul.u32 2, %s21
      $region16: #{segment_lstm_encoder_forward.2} parent=11 // pred_fallthru
        _
    $region12: #{segment_lstm_encoder_forward.2} parent=5 // pred_fallthru
      _
    %p230 = scmp.lt.s32.totalorder %s12, 2
    // Predicated region
    $region17: #{segment_lstm_encoder_forward.2} parent=5 // pred_check
      %p231 = pneg %p230
    $region18: #{segment_lstm_encoder_forward.2} parent=5 // pred_check_branch
      %233 = sbr.rel (%p231) target = $region20
    $region19: #{segment_lstm_encoder_forward.2} parent=5 // pred_region
      // Predicated region
      $region21: #{segment_lstm_encoder_forward.2} parent=19 // pred_check
        %p234 = pneg %p70
      $region22: #{segment_lstm_encoder_forward.2} parent=19 // pred_check_branch
        %236 = sbr.rel (%p234) target = $region24
      $region23: #{segment_lstm_encoder_forward.2} parent=19 // pred_region
        %p237 = scmp.lt.s32.totalorder %s20, 1
        %s238 = scalar_select %p237, %s20, 1
        %s239 = smul.addr %s238, 64
        %s240 = smul.addr %s239, 4
        %s241 = scalar_lea.vmem %s1, %s240
      $region24: #{segment_lstm_encoder_forward.2} parent=19 // pred_fallthru
        _
      // Predicated region
      $region25: #{segment_lstm_encoder_forward.2} parent=19 // pred_check
        %p242 = pneg %p96
      $region26: #{segment_lstm_encoder_forward.2} parent=19 // pred_check_branch
        %244 = sbr.rel (%p242) target = $region28
      $region27: #{segment_lstm_encoder_forward.2} parent=19 // pred_region
        %p245 = scmp.lt.s32.totalorder %s20, 1
        %s246 = scalar_select %p245, %s20, 1
        %s247 = smul.addr %s246, 64
        %s248 = smul.addr %s247, 4
        %s249 = scalar_lea.vmem %s2, %s248
      $region28: #{segment_lstm_encoder_forward.2} parent=19 // pred_fallthru
        _
      // Predicated region
      $region29: #{segment_lstm_encoder_forward.2} parent=19 // pred_check
        %p250 = pneg %p122
      $region30: #{segment_lstm_encoder_forward.2} parent=19 // pred_check_branch
        %252 = sbr.rel (%p250) target = $region32
      $region31: #{segment_lstm_encoder_forward.2} parent=19 // pred_region
        %p253 = scmp.lt.s32.totalorder %s20, 1
        %s254 = scalar_select %p253, %s20, 1
        %s255 = smul.addr %s254, 4
        %s256 = scalar_lea.vmem %s3, %s255
      $region32: #{segment_lstm_encoder_forward.2} parent=19 // pred_fallthru
        _
      // Predicated region
      $region33: #{segment_lstm_encoder_forward.2} parent=19 // pred_check
        %p257 = pneg %p148
      $region34: #{segment_lstm_encoder_forward.2} parent=19 // pred_check_branch
        %259 = sbr.rel (%p257) target = $region36
      $region35: #{segment_lstm_encoder_forward.2} parent=19 // pred_region
        %p260 = scmp.lt.s32.totalorder %s20, 1
        %s261 = scalar_select %p260, %s20, 1
        %s262 = scalar_lea.vmem %s4, %s261
      $region36: #{segment_lstm_encoder_forward.2} parent=19 // pred_fallthru
        _
      // Predicated region
      $region37: #{segment_lstm_encoder_forward.2} parent=19 // pred_check
        %p263 = pneg %p174
      $region38: #{segment_lstm_encoder_forward.2} parent=19 // pred_check_branch
        %265 = sbr.rel (%p263) target = $region40
      $region39: #{segment_lstm_encoder_forward.2} parent=19 // pred_region
        %p266 = scmp.lt.s32.totalorder %s20, 1
        %s267 = scalar_select %p266, %s20, 1
        %s268 = scalar_lea.vmem %s5, %s267
      $region40: #{segment_lstm_encoder_forward.2} parent=19 // pred_fallthru
        _
    $region20: #{segment_lstm_encoder_forward.2} parent=5 // pred_fallthru
      _
    %p269 = scmp.le.s32.totalorder 1, %s12
    %p270 = scmp.lt.s32.totalorder %s12, 3
    %p271 = pnand %p269, %p270
    %p272 = pneg %p271
    // Predicated region
    $region41: #{segment_lstm_encoder_forward.2} parent=5 // pred_check
      _
    $region42: #{segment_lstm_encoder_forward.2} parent=5 // pred_check_branch
      %274 = sbr.rel (%p271) target = $region44
    $region43: #{segment_lstm_encoder_forward.2} parent=5 // pred_region
      %s275 = ssub.s32 %s12, 1
      %s276 = smul.u32 2, %s21
      %p277 = scmp.lt.s32.totalorder %s276, 1
      %s278 = scalar_select %p277, %s276, 1
      %s279 = smul.addr %s278, 4
      %s280 = scalar_lea.vmem %s0, %s279
      %p281 = pneg %p50
      %p282 = pneg %p47
      %p283 = scmp.lt.s32.totalorder %s22, 1
      %s284 = scalar_select %p283, %s22, 1
      %s285 = smul.addr %s284, 64
      %s286 = smul.addr %s285, 4
      %s287 = scalar_lea.vmem %s1, %s286
      %p288 = pneg %p76
      %p289 = pneg %p73
      %p290 = scmp.lt.s32.totalorder %s22, 1
      %s291 = scalar_select %p290, %s22, 1
      %s292 = smul.addr %s291, 64
      %s293 = smul.addr %s292, 4
      %s294 = scalar_lea.vmem %s2, %s293
      %p295 = pneg %p102
      %p296 = pneg %p99
      %p297 = scmp.lt.s32.totalorder %s22, 1
      %s298 = scalar_select %p297, %s22, 1
      %s299 = smul.addr %s298, 4
      %s300 = scalar_lea.vmem %s3, %s299
      %p301 = pneg %p128
      %p302 = pneg %p125
      %p303 = scmp.lt.s32.totalorder %s22, 1
      %s304 = scalar_select %p303, %s22, 1
      %s305 = scalar_lea.vmem %s4, %s304
      %p306 = pneg %p154
      %p307 = pneg %p151
      %p308 = scmp.lt.s32.totalorder %s22, 1
      %s309 = scalar_select %p308, %s22, 1
      %s310 = scalar_lea.vmem %s5, %s309
      %p311 = pneg %p180
      %p312 = pneg %p177
      %p313 = pneg %p206
      %p314 = pneg %p203
      %s315 = smul.u32 2, %s21
      %p316 = scmp.lt.s32.totalorder %s315, 1
      %s317 = scalar_select %p316, %s315, 1
      %s318 = smul.addr %s317, 8
      %s319 = scalar_lea.vmem %s6, %s318
      %s320 = smul.u32 2, %s21
      %p321 = scmp.lt.s32.totalorder %s320, 1
      %s322 = scalar_select %p321, %s320, 1
      %s323 = smul.addr %s322, 4
      %s324 = scalar_lea.vmem %s0, %s323
      %s325 = smul.u32 2, %s21
      %p326 = scmp.lt.s32.totalorder %s22, 1
      %s327 = scalar_select %p326, %s22, 1
      %s328 = smul.addr %s327, 64
      %s329 = smul.addr %s328, 4
      %s330 = scalar_lea.vmem %s1, %s329
      %p331 = scmp.lt.s32.totalorder %s22, 1
      %s332 = scalar_select %p331, %s22, 1
      %s333 = smul.addr %s332, 64
      %s334 = smul.addr %s333, 4
      %s335 = scalar_lea.vmem %s2, %s334
      %p336 = scmp.lt.s32.totalorder %s22, 1
      %s337 = scalar_select %p336, %s22, 1
      %s338 = smul.addr %s337, 4
      %s339 = scalar_lea.vmem %s3, %s338
      %p340 = scmp.lt.s32.totalorder %s22, 1
      %s341 = scalar_select %p340, %s22, 1
      %s342 = scalar_lea.vmem %s4, %s341
      %p343 = scmp.lt.s32.totalorder %s22, 1
      %s344 = scalar_select %p343, %s22, 1
      %s345 = scalar_lea.vmem %s5, %s344
      %s346 = smul.u32 2, %s21
      %p347 = scmp.lt.s32.totalorder %s346, 1
      %s348 = scalar_select %p347, %s346, 1
      %s349 = smul.addr %s348, 8
      %s350 = scalar_lea.vmem %s6, %s349
      %s351 = smul.u32 2, %s21
      %v353 = vld [vmem:[%s330] sm:$0xff]
      %v354 = vld [vmem:[%s330 + $0x8] sm:$0xff]
      %v355 = vld [vmem:[%s330 + $0x10] sm:$0xff]
      %v356 = vld [vmem:[%s330 + $0x18] sm:$0xff]
      %v357 = vld [vmem:[%s330 + $0x20] sm:$0xff]
      %v358 = vld [vmem:[%s330 + $0x28] sm:$0xff]
      %v359 = vld [vmem:[%s330 + $0x30] sm:$0xff]
      %v360 = vld [vmem:[%s330 + $0x38] sm:$0xff]
      %v361 = vld [vmem:[%s330 + $0x40] sm:$0xff]
      %v362 = vld [vmem:[%s330 + $0x48] sm:$0xff]
      %v363 = vld [vmem:[%s330 + $0x50] sm:$0xff]
      %v364 = vld [vmem:[%s330 + $0x58] sm:$0xff]
      %v365 = vld [vmem:[%s330 + $0x60] sm:$0xff]
      %v366 = vld [vmem:[%s330 + $0x68] sm:$0xff]
      %v367 = vld [vmem:[%s330 + $0x70] sm:$0xff]
      %v368 = vld [vmem:[%s330 + $0x78] sm:$0xff]
      %v369 = vld [vmem:[%s330 + $0x80] sm:$0xff]
      %v370 = vld [vmem:[%s330 + $0x88] sm:$0xff]
      %v371 = vld [vmem:[%s330 + $0x90] sm:$0xff]
      %v372 = vld [vmem:[%s330 + $0x98] sm:$0xff]
      %v373 = vld [vmem:[%s330 + $0xa0] sm:$0xff]
      %v374 = vld [vmem:[%s330 + $0xa8] sm:$0xff]
      %v375 = vld [vmem:[%s330 + $0xb0] sm:$0xff]
      %v376 = vld [vmem:[%s330 + $0xb8] sm:$0xff]
      %v377 = vld [vmem:[%s330 + $0xc0] sm:$0xff]
      %v378 = vld [vmem:[%s330 + $0xc8] sm:$0xff]
      %v379 = vld [vmem:[%s330 + $0xd0] sm:$0xff]
      %v380 = vld [vmem:[%s330 + $0xd8] sm:$0xff]
      %v381 = vld [vmem:[%s330 + $0xe0] sm:$0xff]
      %v382 = vld [vmem:[%s330 + $0xe8] sm:$0xff]
      %v383 = vld [vmem:[%s330 + $0xf0] sm:$0xff]
      %v384 = vld [vmem:[%s330 + $0xf8] sm:$0xff]
      %v385 = vld [vmem:[%s335] sm:$0xff]
      %v386 = vld [vmem:[%s335 + $0x8] sm:$0xff]
      %v387 = vld [vmem:[%s335 + $0x10] sm:$0xff]
      %v388 = vld [vmem:[%s335 + $0x18] sm:$0xff]
      %v389 = vld [vmem:[%s335 + $0x20] sm:$0xff]
      %v390 = vld [vmem:[%s335 + $0x28] sm:$0xff]
      %v391 = vld [vmem:[%s335 + $0x30] sm:$0xff]
      %v392 = vld [vmem:[%s335 + $0x38] sm:$0xff]
      %v393 = vld [vmem:[%s335 + $0x40] sm:$0xff]
      %v394 = vld [vmem:[%s335 + $0x48] sm:$0xff]
      %v395 = vld [vmem:[%s335 + $0x50] sm:$0xff]
      %v396 = vld [vmem:[%s335 + $0x58] sm:$0xff]
      %v397 = vld [vmem:[%s335 + $0x60] sm:$0xff]
      %v398 = vld [vmem:[%s335 + $0x68] sm:$0xff]
      %v399 = vld [vmem:[%s335 + $0x70] sm:$0xff]
      %v400 = vld [vmem:[%s335 + $0x78] sm:$0xff]
      %v401 = vld [vmem:[%s335 + $0x80] sm:$0xff]
      %v402 = vld [vmem:[%s335 + $0x88] sm:$0xff]
      %v403 = vld [vmem:[%s335 + $0x90] sm:$0xff]
      %v404 = vld [vmem:[%s335 + $0x98] sm:$0xff]
      %v405 = vld [vmem:[%s335 + $0xa0] sm:$0xff]
      %v406 = vld [vmem:[%s335 + $0xa8] sm:$0xff]
      %v407 = vld [vmem:[%s335 + $0xb0] sm:$0xff]
      %v408 = vld [vmem:[%s335 + $0xb8] sm:$0xff]
      %v409 = vld [vmem:[%s335 + $0xc0] sm:$0xff]
      %v410 = vld [vmem:[%s335 + $0xc8] sm:$0xff]
      %v411 = vld [vmem:[%s335 + $0xd0] sm:$0xff]
      %v412 = vld [vmem:[%s335 + $0xd8] sm:$0xff]
      %v413 = vld [vmem:[%s335 + $0xe0] sm:$0xff]
      %v414 = vld [vmem:[%s335 + $0xe8] sm:$0xff]
      %v415 = vld [vmem:[%s335 + $0xf0] sm:$0xff]
      %v416 = vld [vmem:[%s335 + $0xf8] sm:$0xff]
      %v417 = vld [vmem:[%s339] sm:$0xf]
      %v418 = vld [vmem:[%s342] sm:$0x1]
      %v420 = vlaneseq
      %v421 = vshrl.u32 %v420, 7
      %v422 = vsub.s32 0, %v421
      %v423 = vrot.slane %v418, %v422
      %425 = vst [vmem:[#allocation3] sm:$0xff] %v423
      %426 = vst [vmem:[#allocation3 + $0x8] sm:$0xff] %v423
      %v427 = vld [vmem:[%s345] sm:$0x1]
      %v429 = vlaneseq
      %v430 = vshrl.u32 %v429, 7
      %v431 = vsub.s32 0, %v430
      %v432 = vrot.slane %v427, %v431
      %434 = vst [vmem:[#allocation4] sm:$0xff] %v432
      %435 = vst [vmem:[#allocation4 + $0x8] sm:$0xff] %v432
      %p436 = scmp.eq.s32.totalorder %s22, 0
      // Predicated region
      $region45: #{segment_lstm_encoder_forward.2} parent=43 // pred_check
        %p437 = pneg %p436
      $region46: #{segment_lstm_encoder_forward.2} parent=43 // pred_check_branch
        %439 = sbr.rel (%p437) target = $region48
      $region47: #{segment_lstm_encoder_forward.2} parent=43 // pred_region
        %s440 = smul.u32 0, 2
        %s441 = smul.addr %s440, 4
        %s442 = scalar_lea.vmem %s324, %s441
        %v443 = vld [vmem:[%s442] sm:$0xf]
        %v444 = vld [vmem:[%s442 + $0x4] sm:$0xf]
        %v445 = vld [vmem:[%s442 + $0x8] sm:$0xf]
        %v446 = vld [vmem:[%s442 + $0xc] sm:$0xf]
        %v447 = vld [vmem:[%s442 + $0x10] sm:$0xf]
        %v448 = vld [vmem:[%s442 + $0x14] sm:$0xf]
        %v449 = vld [vmem:[%s442 + $0x18] sm:$0xf]
        %v450 = vld [vmem:[%s442 + $0x1c] sm:$0xf]
        %v451 = vld [vmem:[%s442 + $0x20] sm:$0xf]
        %v452 = vld [vmem:[%s442 + $0x24] sm:$0xf]
        %v453 = vld [vmem:[%s442 + $0x28] sm:$0xf]
        %v454 = vld [vmem:[%s442 + $0x2c] sm:$0xf]
        %v455 = vld [vmem:[%s442 + $0x30] sm:$0xf]
        %v456 = vld [vmem:[%s442 + $0x34] sm:$0xf]
        %v457 = vld [vmem:[%s442 + $0x38] sm:$0xf]
        %v458 = vld [vmem:[%s442 + $0x3c] sm:$0xf]
        %v460 = vlaneseq
        %v461 = vshrl.u32 %v460, 7
        %v462 = vsub.s32 0, %v461
        %v463 = vrot.slane %v417, %v462
        %v464 = vlaneseq
        %v465 = vshrl.u32 %v464, 7
        %v466 = vsub.s32 1, %v465
        %v467 = vrot.slane %v417, %v466
        %v468 = vlaneseq
        %v469 = vshrl.u32 %v468, 7
        %v470 = vsub.s32 2, %v469
        %v471 = vrot.slane %v417, %v470
        %v472 = vlaneseq
        %v473 = vshrl.u32 %v472, 7
        %v474 = vsub.s32 3, %v473
        %v475 = vrot.slane %v417, %v474
        %v496 = vunpack.c.l.b16 %v443
        %v497 = vunpack.c.l.b16 %v444
        %v498 = vunpack.c.l.b16 %v445
        %v499 = vunpack.c.l.b16 %v446
        %v500 = vunpack.c.l.b16 %v447
        %v501 = vunpack.c.l.b16 %v448
        %v502 = vunpack.c.l.b16 %v449
        %v503 = vunpack.c.l.b16 %v450
        %v504 = vunpack.c.l.b16 %v451
        %v505 = vunpack.c.l.b16 %v452
        %v506 = vunpack.c.l.b16 %v453
        %v507 = vunpack.c.l.b16 %v454
        %v508 = vunpack.c.l.b16 %v455
        %v509 = vunpack.c.l.b16 %v456
        %v510 = vunpack.c.l.b16 %v457
        %v511 = vunpack.c.l.b16 %v458
        %v512 = vpack.c.b16 %v497, %v496
        %v513 = vpack.c.b16 %v499, %v498
        %v514 = vpack.c.b16 %v501, %v500
        %v515 = vpack.c.b16 %v503, %v502
        %v516 = vpack.c.b16 %v505, %v504
        %v517 = vpack.c.b16 %v507, %v506
        %v518 = vpack.c.b16 %v509, %v508
        %v519 = vpack.c.b16 %v511, %v510
        %v560 = vunpack.c.l.b16 %v353
        %v561 = vunpack.c.h.b16 %v353
        %v562 = vunpack.c.l.b16 %v354
        %v563 = vunpack.c.h.b16 %v354
        %v564 = vunpack.c.l.b16 %v355
        %v565 = vunpack.c.h.b16 %v355
        %v566 = vunpack.c.l.b16 %v356
        %v567 = vunpack.c.h.b16 %v356
        %v568 = vunpack.c.l.b16 %v357
        %v569 = vunpack.c.h.b16 %v357
        %v570 = vunpack.c.l.b16 %v358
        %v571 = vunpack.c.h.b16 %v358
        %v572 = vunpack.c.l.b16 %v359
        %v573 = vunpack.c.h.b16 %v359
        %v574 = vunpack.c.l.b16 %v360
        %v575 = vunpack.c.h.b16 %v360
        %v576 = vunpack.c.l.b16 %v361
        %v577 = vunpack.c.h.b16 %v361
        %v578 = vunpack.c.l.b16 %v362
        %v579 = vunpack.c.h.b16 %v362
        %v580 = vunpack.c.l.b16 %v363
        %v581 = vunpack.c.h.b16 %v363
        %v582 = vunpack.c.l.b16 %v364
        %v583 = vunpack.c.h.b16 %v364
        %v584 = vunpack.c.l.b16 %v365
        %v585 = vunpack.c.h.b16 %v365
        %v586 = vunpack.c.l.b16 %v366
        %v587 = vunpack.c.h.b16 %v366
        %v588 = vunpack.c.l.b16 %v367
        %v589 = vunpack.c.h.b16 %v367
        %v590 = vunpack.c.l.b16 %v368
        %v591 = vunpack.c.h.b16 %v368
        %v592 = vunpack.c.l.b16 %v369
        %v593 = vunpack.c.h.b16 %v369
        %v594 = vunpack.c.l.b16 %v370
        %v595 = vunpack.c.h.b16 %v370
        %v596 = vunpack.c.l.b16 %v371
        %v597 = vunpack.c.h.b16 %v371
        %v598 = vunpack.c.l.b16 %v372
        %v599 = vunpack.c.h.b16 %v372
        %v600 = vunpack.c.l.b16 %v373
        %v601 = vunpack.c.h.b16 %v373
        %v602 = vunpack.c.l.b16 %v374
        %v603 = vunpack.c.h.b16 %v374
        %v604 = vunpack.c.l.b16 %v375
        %v605 = vunpack.c.h.b16 %v375
        %v606 = vunpack.c.l.b16 %v376
        %v607 = vunpack.c.h.b16 %v376
        %v608 = vunpack.c.l.b16 %v377
        %v609 = vunpack.c.h.b16 %v377
        %v610 = vunpack.c.l.b16 %v378
        %v611 = vunpack.c.h.b16 %v378
        %v612 = vunpack.c.l.b16 %v379
        %v613 = vunpack.c.h.b16 %v379
        %v614 = vunpack.c.l.b16 %v380
        %v615 = vunpack.c.h.b16 %v380
        %v616 = vunpack.c.l.b16 %v381
        %v617 = vunpack.c.h.b16 %v381
        %v618 = vunpack.c.l.b16 %v382
        %v619 = vunpack.c.h.b16 %v382
        %v620 = vunpack.c.l.b16 %v383
        %v621 = vunpack.c.h.b16 %v383
        %v622 = vunpack.c.l.b16 %v384
        %v623 = vunpack.c.h.b16 %v384
        %v624 = vpack.c.b16 %v564, %v560
        %v625 = vpack.c.b16 %v565, %v561
        %v626 = vpack.c.b16 %v566, %v562
        %v627 = vpack.c.b16 %v567, %v563
        %v628 = vpack.c.b16 %v572, %v568
        %v629 = vpack.c.b16 %v573, %v569
        %v630 = vpack.c.b16 %v574, %v570
        %v631 = vpack.c.b16 %v575, %v571
        %v632 = vpack.c.b16 %v580, %v576
        %v633 = vpack.c.b16 %v581, %v577
        %v634 = vpack.c.b16 %v582, %v578
        %v635 = vpack.c.b16 %v583, %v579
        %v636 = vpack.c.b16 %v588, %v584
        %v637 = vpack.c.b16 %v589, %v585
        %v638 = vpack.c.b16 %v590, %v586
        %v639 = vpack.c.b16 %v591, %v587
        %v640 = vpack.c.b16 %v596, %v592
        %v641 = vpack.c.b16 %v597, %v593
        %v642 = vpack.c.b16 %v598, %v594
        %v643 = vpack.c.b16 %v599, %v595
        %v644 = vpack.c.b16 %v604, %v600
        %v645 = vpack.c.b16 %v605, %v601
        %v646 = vpack.c.b16 %v606, %v602
        %v647 = vpack.c.b16 %v607, %v603
        %v648 = vpack.c.b16 %v612, %v608
        %v649 = vpack.c.b16 %v613, %v609
        %v650 = vpack.c.b16 %v614, %v610
        %v651 = vpack.c.b16 %v615, %v611
        %v652 = vpack.c.b16 %v620, %v616
        %v653 = vpack.c.b16 %v621, %v617
        %v654 = vpack.c.b16 %v622, %v618
        %v655 = vpack.c.b16 %v623, %v619
        %688 = vmatprep.subr.bf16.mxu0 %v625
        %689 = vmatpush1.bf16.msra.mxu0 %v624
        %690 = vmatprep.subr.bf16.mxu0 %v629
        %691 = vmatpush1.bf16.msra.mxu0 %v628
        %692 = vmatprep.subr.bf16.mxu0 %v633
        %693 = vmatpush1.bf16.msra.mxu0 %v632
        %694 = vmatprep.subr.bf16.mxu0 %v637
        %695 = vmatpush1.bf16.msra.mxu0 %v636
        %696 = vmatprep.subr.bf16.mxu0 %v641
        %697 = vmatpush1.bf16.msra.mxu0 %v640
        %698 = vmatprep.subr.bf16.mxu0 %v645
        %699 = vmatpush1.bf16.msra.mxu0 %v644
        %700 = vmatprep.subr.bf16.mxu0 %v649
        %701 = vmatpush1.bf16.msra.mxu0 %v648
        %702 = vmatprep.subr.bf16.mxu0 %v653
        %703 = vmatpush1.bf16.msra.mxu0 %v652
        %704 = vmatprep.subr.bf16.mxu0 0
        %705 = vmatpush1.bf16.msra.mxu0 0
        %706 = vmatprep.subr.bf16.mxu0 0
        %707 = vmatpush1.bf16.msra.mxu0 0
        %708 = vmatprep.subr.bf16.mxu0 0
        %709 = vmatpush1.bf16.msra.mxu0 0
        %710 = vmatprep.subr.bf16.mxu0 0
        %711 = vmatpush1.bf16.msra.mxu0 0
        %712 = vmatprep.subr.bf16.mxu0 0
        %713 = vmatpush1.bf16.msra.mxu0 0
        %714 = vmatprep.subr.bf16.mxu0 0
        %715 = vmatpush1.bf16.msra.mxu0 0
        %716 = vmatprep.subr.bf16.mxu0 0
        %717 = vmatpush1.bf16.msra.mxu0 0
        %718 = vmatprep.subr.bf16.mxu0 0
        %719 = vmatpush1.bf16.msra.mxu0 0
        %720 = vmatprep.mubr.bf16.mxu0 0
        %721 = vmatmul.mubr.bf16.gmra.mrb[0].mxu0 %v512
        %v722 = vpop.f32.mrb[0].mxu0
        %v723 = vadd.f32 %v463, %v722
        %v724 = vpop.f32.mrb[0].mxu0
        %v725 = vadd.f32 %v467, %v724
        %v726 = vpop.f32.mrb[0].mxu0
        %v727 = vadd.f32 %v463, %v726
        %v728 = vpop.f32.mrb[0].mxu0
        %v729 = vadd.f32 %v467, %v728
        %730 = vmatprep.mubr.bf16.mxu0 0
        %731 = vmatmul.mubr.bf16.gmra.mrb[0].mxu0 %v513
        %v732 = vpop.f32.mrb[0].mxu0
        %v733 = vadd.f32 %v463, %v732
        %v734 = vpop.f32.mrb[0].mxu0
        %v735 = vadd.f32 %v467, %v734
        %v736 = vpop.f32.mrb[0].mxu0
        %v737 = vadd.f32 %v463, %v736
        %v738 = vpop.f32.mrb[0].mxu0
        %v739 = vadd.f32 %v467, %v738
        %740 = vmatprep.mubr.bf16.mxu0 0
        %741 = vmatmul.mubr.bf16.gmra.mrb[0].mxu0 %v514
        %v742 = vpop.f32.mrb[0].mxu0
        %v743 = vadd.f32 %v463, %v742
        %v744 = vpop.f32.mrb[0].mxu0
        %v745 = vadd.f32 %v467, %v744
        %v746 = vpop.f32.mrb[0].mxu0
        %v747 = vadd.f32 %v463, %v746
        %v748 = vpop.f32.mrb[0].mxu0
        %v749 = vadd.f32 %v467, %v748
        %750 = vmatprep.mubr.bf16.mxu0 0
        %751 = vmatmul.mubr.bf16.gmra.mrb[0].mxu0 %v515
        %v752 = vpop.f32.mrb[0].mxu0
        %v753 = vadd.f32 %v463, %v752
        %v754 = vpop.f32.mrb[0].mxu0
        %v755 = vadd.f32 %v467, %v754
        %v756 = vpop.f32.mrb[0].mxu0
        %v757 = vadd.f32 %v463, %v756
        %v758 = vpop.f32.mrb[0].mxu0
        %v759 = vadd.f32 %v467, %v758
        %760 = vmatprep.mubr.bf16.mxu0 0
        %761 = vmatmul.mubr.bf16.gmra.mrb[0].mxu0 %v516
        %v762 = vpop.f32.mrb[0].mxu0
        %v763 = vadd.f32 %v463, %v762
        %v764 = vpop.f32.mrb[0].mxu0
        %v765 = vadd.f32 %v467, %v764
        %v766 = vpop.f32.mrb[0].mxu0
        %v767 = vadd.f32 %v463, %v766
        %v768 = vpop.f32.mrb[0].mxu0
        %v769 = vadd.f32 %v467, %v768
        %770 = vmatprep.mubr.bf16.mxu0 0
        %771 = vmatmul.mubr.bf16.gmra.mrb[0].mxu0 %v517
        %v772 = vpop.f32.mrb[0].mxu0
        %v773 = vadd.f32 %v463, %v772
        %v774 = vpop.f32.mrb[0].mxu0
        %v775 = vadd.f32 %v467, %v774
        %v776 = vpop.f32.mrb[0].mxu0
        %v777 = vadd.f32 %v463, %v776
        %v778 = vpop.f32.mrb[0].mxu0
        %v779 = vadd.f32 %v467, %v778
        %780 = vmatprep.mubr.bf16.mxu0 0
        %781 = vmatmul.mubr.bf16.gmra.mrb[0].mxu0 %v518
        %v782 = vpop.f32.mrb[0].mxu0
        %v783 = vadd.f32 %v463, %v782
        %v784 = vpop.f32.mrb[0].mxu0
        %v785 = vadd.f32 %v467, %v784
        %v786 = vpop.f32.mrb[0].mxu0
        %v787 = vadd.f32 %v463, %v786
        %v788 = vpop.f32.mrb[0].mxu0
        %v789 = vadd.f32 %v467, %v788
        %790 = vmatprep.mubr.bf16.mxu0 0
        %791 = vmatmul.mubr.bf16.gmra.mrb[0].mxu0 %v519
        %v792 = vpop.f32.mrb[0].mxu0
        %v793 = vadd.f32 %v463, %v792
        %v794 = vpop.f32.mrb[0].mxu0
        %v795 = vadd.f32 %v467, %v794
        %v796 = vpop.f32.mrb[0].mxu0
        %v797 = vadd.f32 %v463, %v796
        %v798 = vpop.f32.mrb[0].mxu0
        %v799 = vadd.f32 %v467, %v798
        %800 = vdwg.mxu0
        %801 = vmatprep.subr.bf16.mxu0 %v627
        %802 = vmatpush1.bf16.msra.mxu0 %v626
        %803 = vmatprep.subr.bf16.mxu0 %v631
        %804 = vmatpush1.bf16.msra.mxu0 %v630
        %805 = vmatprep.subr.bf16.mxu0 %v635
        %806 = vmatpush1.bf16.msra.mxu0 %v634
        %807 = vmatprep.subr.bf16.mxu0 %v639
        %808 = vmatpush1.bf16.msra.mxu0 %v638
        %809 = vmatprep.subr.bf16.mxu0 %v643
        %810 = vmatpush1.bf16.msra.mxu0 %v642
        %811 = vmatprep.subr.bf16.mxu0 %v647
        %812 = vmatpush1.bf16.msra.mxu0 %v646
        %813 = vmatprep.subr.bf16.mxu0 %v651
        %814 = vmatpush1.bf16.msra.mxu0 %v650
        %815 = vmatprep.subr.bf16.mxu0 %v655
        %816 = vmatpush1.bf16.msra.mxu0 %v654
        %817 = vmatprep.subr.bf16.mxu0 0
        %818 = vmatpush1.bf16.msra.mxu0 0
        %819 = vmatprep.subr.bf16.mxu0 0
        %820 = vmatpush1.bf16.msra.mxu0 0
        %821 = vmatprep.subr.bf16.mxu0 0
        %822 = vmatpush1.bf16.msra.mxu0 0
        %823 = vmatprep.subr.bf16.mxu0 0
        %824 = vmatpush1.bf16.msra.mxu0 0
        %825 = vmatprep.subr.bf16.mxu0 0
        %826 = vmatpush1.bf16.msra.mxu0 0
        %827 = vmatprep.subr.bf16.mxu0 0
        %828 = vmatpush1.bf16.msra.mxu0 0
        %829 = vmatprep.subr.bf16.mxu0 0
        %830 = vmatpush1.bf16.msra.mxu0 0
        %831 = vmatprep.subr.bf16.mxu0 0
        %832 = vmatpush1.bf16.msra.mxu0 0
        %833 = vmatprep.mubr.bf16.mxu0 0
        %834 = vmatmul.mubr.bf16.gmra.mrb[0].mxu0 %v512
        %v835 = vpop.f32.mrb[0].mxu0
        %v836 = vadd.f32 %v471, %v835
        %v837 = vpop.f32.mrb[0].mxu0
        %v838 = vadd.f32 %v475, %v837
        %v839 = vpop.f32.mrb[0].mxu0
        %v840 = vadd.f32 %v471, %v839
        %v841 = vpop.f32.mrb[0].mxu0
        %v842 = vadd.f32 %v475, %v841
        %843 = vmatprep.mubr.bf16.mxu0 0
        %844 = vmatmul.mubr.bf16.gmra.mrb[0].mxu0 %v513
        %v845 = vpop.f32.mrb[0].mxu0
        %v846 = vadd.f32 %v471, %v845
        %v847 = vpop.f32.mrb[0].mxu0
        %v848 = vadd.f32 %v475, %v847
        %v849 = vpop.f32.mrb[0].mxu0
        %v850 = vadd.f32 %v471, %v849
        %v851 = vpop.f32.mrb[0].mxu0
        %v852 = vadd.f32 %v475, %v851
        %853 = vmatprep.mubr.bf16.mxu0 0
        %854 = vmatmul.mubr.bf16.gmra.mrb[0].mxu0 %v514
        %v855 = vpop.f32.mrb[0].mxu0
        %v856 = vadd.f32 %v471, %v855
        %v857 = vpop.f32.mrb[0].mxu0
        %v858 = vadd.f32 %v475, %v857
        %v859 = vpop.f32.mrb[0].mxu0
        %v860 = vadd.f32 %v471, %v859
        %v861 = vpop.f32.mrb[0].mxu0
        %v862 = vadd.f32 %v475, %v861
        %863 = vmatprep.mubr.bf16.mxu0 0
        %864 = vmatmul.mubr.bf16.gmra.mrb[0].mxu0 %v515
        %v865 = vpop.f32.mrb[0].mxu0
        %v866 = vadd.f32 %v471, %v865
        %v867 = vpop.f32.mrb[0].mxu0
        %v868 = vadd.f32 %v475, %v867
        %v869 = vpop.f32.mrb[0].mxu0
        %v870 = vadd.f32 %v471, %v869
        %v871 = vpop.f32.mrb[0].mxu0
        %v872 = vadd.f32 %v475, %v871
        %873 = vmatprep.mubr.bf16.mxu0 0
        %874 = vmatmul.mubr.bf16.gmra.mrb[0].mxu0 %v516
        %v875 = vpop.f32.mrb[0].mxu0
        %v876 = vadd.f32 %v471, %v875
        %v877 = vpop.f32.mrb[0].mxu0
        %v878 = vadd.f32 %v475, %v877
        %v879 = vpop.f32.mrb[0].mxu0
        %v880 = vadd.f32 %v471, %v879
        %v881 = vpop.f32.mrb[0].mxu0
        %v882 = vadd.f32 %v475, %v881
        %883 = vmatprep.mubr.bf16.mxu0 0
        %884 = vmatmul.mubr.bf16.gmra.mrb[0].mxu0 %v517
        %v885 = vpop.f32.mrb[0].mxu0
        %v886 = vadd.f32 %v471, %v885
        %v887 = vpop.f32.mrb[0].mxu0
        %v888 = vadd.f32 %v475, %v887
        %v889 = vpop.f32.mrb[0].mxu0
        %v890 = vadd.f32 %v471, %v889
        %v891 = vpop.f32.mrb[0].mxu0
        %v892 = vadd.f32 %v475, %v891
        %893 = vmatprep.mubr.bf16.mxu0 0
        %894 = vmatmul.mubr.bf16.gmra.mrb[0].mxu0 %v518
        %v895 = vpop.f32.mrb[0].mxu0
        %v896 = vadd.f32 %v471, %v895
        %v897 = vpop.f32.mrb[0].mxu0
        %v898 = vadd.f32 %v475, %v897
        %v899 = vpop.f32.mrb[0].mxu0
        %v900 = vadd.f32 %v471, %v899
        %v901 = vpop.f32.mrb[0].mxu0
        %v902 = vadd.f32 %v475, %v901
        %903 = vmatprep.mubr.bf16.mxu0 0
        %904 = vmatmul.mubr.bf16.gmra.mrb[0].mxu0 %v519
        %v905 = vpop.f32.mrb[0].mxu0
        %v906 = vadd.f32 %v471, %v905
        %v907 = vpop.f32.mrb[0].mxu0
        %v908 = vadd.f32 %v475, %v907
        %v909 = vpop.f32.mrb[0].mxu0
        %v910 = vadd.f32 %v471, %v909
        %v911 = vpop.f32.mrb[0].mxu0
        %v912 = vadd.f32 %v475, %v911
        %913 = vdwg.mxu0
        %914 = vst [vmem:[#allocation2] sm:$0xff] %v723
        %915 = vst [vmem:[#allocation2 + $0x8] sm:$0xff] %v725
        %916 = vst [vmem:[#allocation2 + $0x10] sm:$0xff] %v836
        %917 = vst [vmem:[#allocation2 + $0x18] sm:$0xff] %v838
        %918 = vst [vmem:[#allocation2 + $0x20] sm:$0xff] %v727
        %919 = vst [vmem:[#allocation2 + $0x28] sm:$0xff] %v729
        %920 = vst [vmem:[#allocation2 + $0x30] sm:$0xff] %v840
        %921 = vst [vmem:[#allocation2 + $0x38] sm:$0xff] %v842
        %922 = vst [vmem:[#allocation2 + $0x40] sm:$0xff] %v733
        %923 = vst [vmem:[#allocation2 + $0x48] sm:$0xff] %v735
        %924 = vst [vmem:[#allocation2 + $0x50] sm:$0xff] %v846
        %925 = vst [vmem:[#allocation2 + $0x58] sm:$0xff] %v848
        %926 = vst [vmem:[#allocation2 + $0x60] sm:$0xff] %v737
        %927 = vst [vmem:[#allocation2 + $0x68] sm:$0xff] %v739
        %928 = vst [vmem:[#allocation2 + $0x70] sm:$0xff] %v850
        %929 = vst [vmem:[#allocation2 + $0x78] sm:$0xff] %v852
        %930 = vst [vmem:[#allocation2 + $0x80] sm:$0xff] %v743
        %931 = vst [vmem:[#allocation2 + $0x88] sm:$0xff] %v745
        %932 = vst [vmem:[#allocation2 + $0x90] sm:$0xff] %v856
        %933 = vst [vmem:[#allocation2 + $0x98] sm:$0xff] %v858
        %934 = vst [vmem:[#allocation2 + $0xa0] sm:$0xff] %v747
        %935 = vst [vmem:[#allocation2 + $0xa8] sm:$0xff] %v749
        %936 = vst [vmem:[#allocation2 + $0xb0] sm:$0xff] %v860
        %937 = vst [vmem:[#allocation2 + $0xb8] sm:$0xff] %v862
        %938 = vst [vmem:[#allocation2 + $0xc0] sm:$0xff] %v753
        %939 = vst [vmem:[#allocation2 + $0xc8] sm:$0xff] %v755
        %940 = vst [vmem:[#allocation2 + $0xd0] sm:$0xff] %v866
        %941 = vst [vmem:[#allocation2 + $0xd8] sm:$0xff] %v868
        %942 = vst [vmem:[#allocation2 + $0xe0] sm:$0xff] %v757
        %943 = vst [vmem:[#allocation2 + $0xe8] sm:$0xff] %v759
        %944 = vst [vmem:[#allocation2 + $0xf0] sm:$0xff] %v870
        %945 = vst [vmem:[#allocation2 + $0xf8] sm:$0xff] %v872
        %946 = vst [vmem:[#allocation2 + $0x100] sm:$0xff] %v763
        %947 = vst [vmem:[#allocation2 + $0x108] sm:$0xff] %v765
        %948 = vst [vmem:[#allocation2 + $0x110] sm:$0xff] %v876
        %949 = vst [vmem:[#allocation2 + $0x118] sm:$0xff] %v878
        %950 = vst [vmem:[#allocation2 + $0x120] sm:$0xff] %v767
        %951 = vst [vmem:[#allocation2 + $0x128] sm:$0xff] %v769
        %952 = vst [vmem:[#allocation2 + $0x130] sm:$0xff] %v880
        %953 = vst [vmem:[#allocation2 + $0x138] sm:$0xff] %v882
        %954 = vst [vmem:[#allocation2 + $0x140] sm:$0xff] %v773
        %955 = vst [vmem:[#allocation2 + $0x148] sm:$0xff] %v775
        %956 = vst [vmem:[#allocation2 + $0x150] sm:$0xff] %v886
        %957 = vst [vmem:[#allocation2 + $0x158] sm:$0xff] %v888
        %958 = vst [vmem:[#allocation2 + $0x160] sm:$0xff] %v777
        %959 = vst [vmem:[#allocation2 + $0x168] sm:$0xff] %v779
        %960 = vst [vmem:[#allocation2 + $0x170] sm:$0xff] %v890
        %961 = vst [vmem:[#allocation2 + $0x178] sm:$0xff] %v892
        %962 = vst [vmem:[#allocation2 + $0x180] sm:$0xff] %v783
        %963 = vst [vmem:[#allocation2 + $0x188] sm:$0xff] %v785
        %964 = vst [vmem:[#allocation2 + $0x190] sm:$0xff] %v896
        %965 = vst [vmem:[#allocation2 + $0x198] sm:$0xff] %v898
        %966 = vst [vmem:[#allocation2 + $0x1a0] sm:$0xff] %v787
        %967 = vst [vmem:[#allocation2 + $0x1a8] sm:$0xff] %v789
        %968 = vst [vmem:[#allocation2 + $0x1b0] sm:$0xff] %v900
        %969 = vst [vmem:[#allocation2 + $0x1b8] sm:$0xff] %v902
        %970 = vst [vmem:[#allocation2 + $0x1c0] sm:$0xff] %v793
        %971 = vst [vmem:[#allocation2 + $0x1c8] sm:$0xff] %v795
        %972 = vst [vmem:[#allocation2 + $0x1d0] sm:$0xff] %v906
        %973 = vst [vmem:[#allocation2 + $0x1d8] sm:$0xff] %v908
        %974 = vst [vmem:[#allocation2 + $0x1e0] sm:$0xff] %v797
        %975 = vst [vmem:[#allocation2 + $0x1e8] sm:$0xff] %v799
        %976 = vst [vmem:[#allocation2 + $0x1f0] sm:$0xff] %v910
        %977 = vst [vmem:[#allocation2 + $0x1f8] sm:$0xff] %v912
      $region48: #{segment_lstm_encoder_forward.2} parent=43 // pred_fallthru
        _
      %p978 = scmp.ne.s32.totalorder %s22, 0
      // Predicated region
      $region49: #{segment_lstm_encoder_forward.2} parent=43 // pred_check
        %p979 = pneg %p978
      $region50: #{segment_lstm_encoder_forward.2} parent=43 // pred_check_branch
        %981 = sbr.rel (%p979) target = $region52
      $region51: #{segment_lstm_encoder_forward.2} parent=43 // pred_region
        %s982 = smul.u32 0, 16
        %s983 = scalar_lea.vmem %s350, %s982
        %v984 = vld [vmem:[%s983] sm:$0xff]
        %v985 = vld [vmem:[%s983 + $0x8] sm:$0xff]
        %v986 = vld [vmem:[%s983 + $0x10] sm:$0xff]
        %v987 = vld [vmem:[%s983 + $0x18] sm:$0xff]
        %v988 = vld [vmem:[%s983 + $0x20] sm:$0xff]
        %v989 = vld [vmem:[%s983 + $0x28] sm:$0xff]
        %v990 = vld [vmem:[%s983 + $0x30] sm:$0xff]
        %v991 = vld [vmem:[%s983 + $0x38] sm:$0xff]
        %v992 = vld [vmem:[%s983 + $0x40] sm:$0xff]
        %v993 = vld [vmem:[%s983 + $0x48] sm:$0xff]
        %v994 = vld [vmem:[%s983 + $0x50] sm:$0xff]
        %v995 = vld [vmem:[%s983 + $0x58] sm:$0xff]
        %v996 = vld [vmem:[%s983 + $0x60] sm:$0xff]
        %v997 = vld [vmem:[%s983 + $0x68] sm:$0xff]
        %v998 = vld [vmem:[%s983 + $0x70] sm:$0xff]
        %v999 = vld [vmem:[%s983 + $0x78] sm:$0xff]
        %v1000 = vpack.c.bf16 %v985, %v984
        %v1001 = vpack.c.bf16 %v987, %v986
        %v1002 = vpack.c.bf16 %v989, %v988
        %v1003 = vpack.c.bf16 %v991, %v990
        %v1004 = vpack.c.bf16 %v993, %v992
        %v1005 = vpack.c.bf16 %v995, %v994
        %v1006 = vpack.c.bf16 %v997, %v996
        %v1007 = vpack.c.bf16 %v999, %v998
        %v1009 = vlaneseq
        %v1010 = vshrl.u32 %v1009, 7
        %v1011 = vsub.s32 0, %v1010
        %v1012 = vrot.slane %v417, %v1011
        %v1013 = vlaneseq
        %v1014 = vshrl.u32 %v1013, 7
        %v1015 = vsub.s32 1, %v1014
        %v1016 = vrot.slane %v417, %v1015
        %v1017 = vlaneseq
        %v1018 = vshrl.u32 %v1017, 7
        %v1019 = vsub.s32 2, %v1018
        %v1020 = vrot.slane %v417, %v1019
        %v1021 = vlaneseq
        %v1022 = vshrl.u32 %v1021, 7
        %v1023 = vsub.s32 3, %v1022
        %v1024 = vrot.slane %v417, %v1023
        %v1061 = vunpack.c.l.b16 %v353
        %v1062 = vunpack.c.h.b16 %v353
        %v1063 = vunpack.c.l.b16 %v354
        %v1064 = vunpack.c.h.b16 %v354
        %v1065 = vunpack.c.l.b16 %v355
        %v1066 = vunpack.c.h.b16 %v355
        %v1067 = vunpack.c.l.b16 %v356
        %v1068 = vunpack.c.h.b16 %v356
        %v1069 = vunpack.c.l.b16 %v357
        %v1070 = vunpack.c.h.b16 %v357
        %v1071 = vunpack.c.l.b16 %v358
        %v1072 = vunpack.c.h.b16 %v358
        %v1073 = vunpack.c.l.b16 %v359
        %v1074 = vunpack.c.h.b16 %v359
        %v1075 = vunpack.c.l.b16 %v360
        %v1076 = vunpack.c.h.b16 %v360
        %v1077 = vunpack.c.l.b16 %v361
        %v1078 = vunpack.c.h.b16 %v361
        %v1079 = vunpack.c.l.b16 %v362
        %v1080 = vunpack.c.h.b16 %v362
        %v1081 = vunpack.c.l.b16 %v363
        %v1082 = vunpack.c.h.b16 %v363
        %v1083 = vunpack.c.l.b16 %v364
        %v1084 = vunpack.c.h.b16 %v364
        %v1085 = vunpack.c.l.b16 %v365
        %v1086 = vunpack.c.h.b16 %v365
        %v1087 = vunpack.c.l.b16 %v366
        %v1088 = vunpack.c.h.b16 %v366
        %v1089 = vunpack.c.l.b16 %v367
        %v1090 = vunpack.c.h.b16 %v367
        %v1091 = vunpack.c.l.b16 %v368
        %v1092 = vunpack.c.h.b16 %v368
        %v1093 = vunpack.c.l.b16 %v369
        %v1094 = vunpack.c.h.b16 %v369
        %v1095 = vunpack.c.l.b16 %v370
        %v1096 = vunpack.c.h.b16 %v370
        %v1097 = vunpack.c.l.b16 %v371
        %v1098 = vunpack.c.h.b16 %v371
        %v1099 = vunpack.c.l.b16 %v372
        %v1100 = vunpack.c.h.b16 %v372
        %v1101 = vunpack.c.l.b16 %v373
        %v1102 = vunpack.c.h.b16 %v373
        %v1103 = vunpack.c.l.b16 %v374
        %v1104 = vunpack.c.h.b16 %v374
        %v1105 = vunpack.c.l.b16 %v375
        %v1106 = vunpack.c.h.b16 %v375
        %v1107 = vunpack.c.l.b16 %v376
        %v1108 = vunpack.c.h.b16 %v376
        %v1109 = vunpack.c.l.b16 %v377
        %v1110 = vunpack.c.h.b16 %v377
        %v1111 = vunpack.c.l.b16 %v378
        %v1112 = vunpack.c.h.b16 %v378
        %v1113 = vunpack.c.l.b16 %v379
        %v1114 = vunpack.c.h.b16 %v379
        %v1115 = vunpack.c.l.b16 %v380
        %v1116 = vunpack.c.h.b16 %v380
        %v1117 = vunpack.c.l.b16 %v381
        %v1118 = vunpack.c.h.b16 %v381
        %v1119 = vunpack.c.l.b16 %v382
        %v1120 = vunpack.c.h.b16 %v382
        %v1121 = vunpack.c.l.b16 %v383
        %v1122 = vunpack.c.h.b16 %v383
        %v1123 = vunpack.c.l.b16 %v384
        %v1124 = vunpack.c.h.b16 %v384
        %v1125 = vpack.c.b16 %v1065, %v1061
        %v1126 = vpack.c.b16 %v1066, %v1062
        %v1127 = vpack.c.b16 %v1067, %v1063
        %v1128 = vpack.c.b16 %v1068, %v1064
        %v1129 = vpack.c.b16 %v1073, %v1069
        %v1130 = vpack.c.b16 %v1074, %v1070
        %v1131 = vpack.c.b16 %v1075, %v1071
        %v1132 = vpack.c.b16 %v1076, %v1072
        %v1133 = vpack.c.b16 %v1081, %v1077
        %v1134 = vpack.c.b16 %v1082, %v1078
        %v1135 = vpack.c.b16 %v1083, %v1079
        %v1136 = vpack.c.b16 %v1084, %v1080
        %v1137 = vpack.c.b16 %v1089, %v1085
        %v1138 = vpack.c.b16 %v1090, %v1086
        %v1139 = vpack.c.b16 %v1091, %v1087
        %v1140 = vpack.c.b16 %v1092, %v1088
        %v1141 = vpack.c.b16 %v1097, %v1093
        %v1142 = vpack.c.b16 %v1098, %v1094
        %v1143 = vpack.c.b16 %v1099, %v1095
        %v1144 = vpack.c.b16 %v1100, %v1096
        %v1145 = vpack.c.b16 %v1105, %v1101
        %v1146 = vpack.c.b16 %v1106, %v1102
        %v1147 = vpack.c.b16 %v1107, %v1103
        %v1148 = vpack.c.b16 %v1108, %v1104
        %v1149 = vpack.c.b16 %v1113, %v1109
        %v1150 = vpack.c.b16 %v1114, %v1110
        %v1151 = vpack.c.b16 %v1115, %v1111
        %v1152 = vpack.c.b16 %v1116, %v1112
        %v1153 = vpack.c.b16 %v1121, %v1117
        %v1154 = vpack.c.b16 %v1122, %v1118
        %v1155 = vpack.c.b16 %v1123, %v1119
        %v1156 = vpack.c.b16 %v1124, %v1120
        %1189 = vmatprep.subr.bf16.mxu0 %v1126
        %1190 = vmatpush1.bf16.msra.mxu0 %v1125
        %1191 = vmatprep.subr.bf16.mxu0 %v1130
        %1192 = vmatpush1.bf16.msra.mxu0 %v1129
        %1193 = vmatprep.subr.bf16.mxu0 %v1134
        %1194 = vmatpush1.bf16.msra.mxu0 %v1133
        %1195 = vmatprep.subr.bf16.mxu0 %v1138
        %1196 = vmatpush1.bf16.msra.mxu0 %v1137
        %1197 = vmatprep.subr.bf16.mxu0 %v1142
        %1198 = vmatpush1.bf16.msra.mxu0 %v1141
        %1199 = vmatprep.subr.bf16.mxu0 %v1146
        %1200 = vmatpush1.bf16.msra.mxu0 %v1145
        %1201 = vmatprep.subr.bf16.mxu0 %v1150
        %1202 = vmatpush1.bf16.msra.mxu0 %v1149
        %1203 = vmatprep.subr.bf16.mxu0 %v1154
        %1204 = vmatpush1.bf16.msra.mxu0 %v1153
        %1205 = vmatprep.subr.bf16.mxu0 0
        %1206 = vmatpush1.bf16.msra.mxu0 0
        %1207 = vmatprep.subr.bf16.mxu0 0
        %1208 = vmatpush1.bf16.msra.mxu0 0
        %1209 = vmatprep.subr.bf16.mxu0 0
        %1210 = vmatpush1.bf16.msra.mxu0 0
        %1211 = vmatprep.subr.bf16.mxu0 0
        %1212 = vmatpush1.bf16.msra.mxu0 0
        %1213 = vmatprep.subr.bf16.mxu0 0
        %1214 = vmatpush1.bf16.msra.mxu0 0
        %1215 = vmatprep.subr.bf16.mxu0 0
        %1216 = vmatpush1.bf16.msra.mxu0 0
        %1217 = vmatprep.subr.bf16.mxu0 0
        %1218 = vmatpush1.bf16.msra.mxu0 0
        %1219 = vmatprep.subr.bf16.mxu0 0
        %1220 = vmatpush1.bf16.msra.mxu0 0
        %1221 = vmatprep.mubr.bf16.mxu0 0
        %1222 = vmatmul.mubr.bf16.gmra.mrb[0].mxu0 %v1000
        %v1223 = vpop.f32.mrb[0].mxu0
        %v1224 = vadd.f32 %v1012, %v1223
        %v1225 = vpop.f32.mrb[0].mxu0
        %v1226 = vadd.f32 %v1016, %v1225
        %v1227 = vpop.f32.mrb[0].mxu0
        %v1228 = vadd.f32 %v1012, %v1227
        %v1229 = vpop.f32.mrb[0].mxu0
        %v1230 = vadd.f32 %v1016, %v1229
        %1231 = vmatprep.mubr.bf16.mxu0 0
        %1232 = vmatmul.mubr.bf16.gmra.mrb[0].mxu0 %v1001
        %v1233 = vpop.f32.mrb[0].mxu0
        %v1234 = vadd.f32 %v1012, %v1233
        %v1235 = vpop.f32.mrb[0].mxu0
        %v1236 = vadd.f32 %v1016, %v1235
        %v1237 = vpop.f32.mrb[0].mxu0
        %v1238 = vadd.f32 %v1012, %v1237
        %v1239 = vpop.f32.mrb[0].mxu0
        %v1240 = vadd.f32 %v1016, %v1239
        %1241 = vmatprep.mubr.bf16.mxu0 0
        %1242 = vmatmul.mubr.bf16.gmra.mrb[0].mxu0 %v1002
        %v1243 = vpop.f32.mrb[0].mxu0
        %v1244 = vadd.f32 %v1012, %v1243
        %v1245 = vpop.f32.mrb[0].mxu0
        %v1246 = vadd.f32 %v1016, %v1245
        %v1247 = vpop.f32.mrb[0].mxu0
        %v1248 = vadd.f32 %v1012, %v1247
        %v1249 = vpop.f32.mrb[0].mxu0
        %v1250 = vadd.f32 %v1016, %v1249
        %1251 = vmatprep.mubr.bf16.mxu0 0
        %1252 = vmatmul.mubr.bf16.gmra.mrb[0].mxu0 %v1003
        %v1253 = vpop.f32.mrb[0].mxu0
        %v1254 = vadd.f32 %v1012, %v1253
        %v1255 = vpop.f32.mrb[0].mxu0
        %v1256 = vadd.f32 %v1016, %v1255
        %v1257 = vpop.f32.mrb[0].mxu0
        %v1258 = vadd.f32 %v1012, %v1257
        %v1259 = vpop.f32.mrb[0].mxu0
        %v1260 = vadd.f32 %v1016, %v1259
        %1261 = vmatprep.mubr.bf16.mxu0 0
        %1262 = vmatmul.mubr.bf16.gmra.mrb[0].mxu0 %v1004
        %v1263 = vpop.f32.mrb[0].mxu0
        %v1264 = vadd.f32 %v1012, %v1263
        %v1265 = vpop.f32.mrb[0].mxu0
        %v1266 = vadd.f32 %v1016, %v1265
        %v1267 = vpop.f32.mrb[0].mxu0
        %v1268 = vadd.f32 %v1012, %v1267
        %v1269 = vpop.f32.mrb[0].mxu0
        %v1270 = vadd.f32 %v1016, %v1269
        %1271 = vmatprep.mubr.bf16.mxu0 0
        %1272 = vmatmul.mubr.bf16.gmra.mrb[0].mxu0 %v1005
        %v1273 = vpop.f32.mrb[0].mxu0
        %v1274 = vadd.f32 %v1012, %v1273
        %v1275 = vpop.f32.mrb[0].mxu0
        %v1276 = vadd.f32 %v1016, %v1275
        %v1277 = vpop.f32.mrb[0].mxu0
        %v1278 = vadd.f32 %v1012, %v1277
        %v1279 = vpop.f32.mrb[0].mxu0
        %v1280 = vadd.f32 %v1016, %v1279
        %1281 = vmatprep.mubr.bf16.mxu0 0
        %1282 = vmatmul.mubr.bf16.gmra.mrb[0].mxu0 %v1006
        %v1283 = vpop.f32.mrb[0].mxu0
        %v1284 = vadd.f32 %v1012, %v1283
        %v1285 = vpop.f32.mrb[0].mxu0
        %v1286 = vadd.f32 %v1016, %v1285
        %v1287 = vpop.f32.mrb[0].mxu0
        %v1288 = vadd.f32 %v1012, %v1287
        %v1289 = vpop.f32.mrb[0].mxu0
        %v1290 = vadd.f32 %v1016, %v1289
        %1291 = vmatprep.mubr.bf16.mxu0 0
        %1292 = vmatmul.mubr.bf16.gmra.mrb[0].mxu0 %v1007
        %v1293 = vpop.f32.mrb[0].mxu0
        %v1294 = vadd.f32 %v1012, %v1293
        %v1295 = vpop.f32.mrb[0].mxu0
        %v1296 = vadd.f32 %v1016, %v1295
        %v1297 = vpop.f32.mrb[0].mxu0
        %v1298 = vadd.f32 %v1012, %v1297
        %v1299 = vpop.f32.mrb[0].mxu0
        %v1300 = vadd.f32 %v1016, %v1299
        %1301 = vdwg.mxu0
        %1302 = vmatprep.subr.bf16.mxu0 %v1128
        %1303 = vmatpush1.bf16.msra.mxu0 %v1127
        %1304 = vmatprep.subr.bf16.mxu0 %v1132
        %1305 = vmatpush1.bf16.msra.mxu0 %v1131
        %1306 = vmatprep.subr.bf16.mxu0 %v1136
        %1307 = vmatpush1.bf16.msra.mxu0 %v1135
        %1308 = vmatprep.subr.bf16.mxu0 %v1140
        %1309 = vmatpush1.bf16.msra.mxu0 %v1139
        %1310 = vmatprep.subr.bf16.mxu0 %v1144
        %1311 = vmatpush1.bf16.msra.mxu0 %v1143
        %1312 = vmatprep.subr.bf16.mxu0 %v1148
        %1313 = vmatpush1.bf16.msra.mxu0 %v1147
        %1314 = vmatprep.subr.bf16.mxu0 %v1152
        %1315 = vmatpush1.bf16.msra.mxu0 %v1151
        %1316 = vmatprep.subr.bf16.mxu0 %v1156
        %1317 = vmatpush1.bf16.msra.mxu0 %v1155
        %1318 = vmatprep.subr.bf16.mxu0 0
        %1319 = vmatpush1.bf16.msra.mxu0 0
        %1320 = vmatprep.subr.bf16.mxu0 0
        %1321 = vmatpush1.bf16.msra.mxu0 0
        %1322 = vmatprep.subr.bf16.mxu0 0
        %1323 = vmatpush1.bf16.msra.mxu0 0
        %1324 = vmatprep.subr.bf16.mxu0 0
        %1325 = vmatpush1.bf16.msra.mxu0 0
        %1326 = vmatprep.subr.bf16.mxu0 0
        %1327 = vmatpush1.bf16.msra.mxu0 0
        %1328 = vmatprep.subr.bf16.mxu0 0
        %1329 = vmatpush1.bf16.msra.mxu0 0
        %1330 = vmatprep.subr.bf16.mxu0 0
        %1331 = vmatpush1.bf16.msra.mxu0 0
        %1332 = vmatprep.subr.bf16.mxu0 0
        %1333 = vmatpush1.bf16.msra.mxu0 0
        %1334 = vmatprep.mubr.bf16.mxu0 0
        %1335 = vmatmul.mubr.bf16.gmra.mrb[0].mxu0 %v1000
        %v1336 = vpop.f32.mrb[0].mxu0
        %v1337 = vadd.f32 %v1020, %v1336
        %v1338 = vpop.f32.mrb[0].mxu0
        %v1339 = vadd.f32 %v1024, %v1338
        %v1340 = vpop.f32.mrb[0].mxu0
        %v1341 = vadd.f32 %v1020, %v1340
        %v1342 = vpop.f32.mrb[0].mxu0
        %v1343 = vadd.f32 %v1024, %v1342
        %1344 = vmatprep.mubr.bf16.mxu0 0
        %1345 = vmatmul.mubr.bf16.gmra.mrb[0].mxu0 %v1001
        %v1346 = vpop.f32.mrb[0].mxu0
        %v1347 = vadd.f32 %v1020, %v1346
        %v1348 = vpop.f32.mrb[0].mxu0
        %v1349 = vadd.f32 %v1024, %v1348
        %v1350 = vpop.f32.mrb[0].mxu0
        %v1351 = vadd.f32 %v1020, %v1350
        %v1352 = vpop.f32.mrb[0].mxu0
        %v1353 = vadd.f32 %v1024, %v1352
        %1354 = vmatprep.mubr.bf16.mxu0 0
        %1355 = vmatmul.mubr.bf16.gmra.mrb[0].mxu0 %v1002
        %v1356 = vpop.f32.mrb[0].mxu0
        %v1357 = vadd.f32 %v1020, %v1356
        %v1358 = vpop.f32.mrb[0].mxu0
        %v1359 = vadd.f32 %v1024, %v1358
        %v1360 = vpop.f32.mrb[0].mxu0
        %v1361 = vadd.f32 %v1020, %v1360
        %v1362 = vpop.f32.mrb[0].mxu0
        %v1363 = vadd.f32 %v1024, %v1362
        %1364 = vmatprep.mubr.bf16.mxu0 0
        %1365 = vmatmul.mubr.bf16.gmra.mrb[0].mxu0 %v1003
        %v1366 = vpop.f32.mrb[0].mxu0
        %v1367 = vadd.f32 %v1020, %v1366
        %v1368 = vpop.f32.mrb[0].mxu0
        %v1369 = vadd.f32 %v1024, %v1368
        %v1370 = vpop.f32.mrb[0].mxu0
        %v1371 = vadd.f32 %v1020, %v1370
        %v1372 = vpop.f32.mrb[0].mxu0
        %v1373 = vadd.f32 %v1024, %v1372
        %1374 = vmatprep.mubr.bf16.mxu0 0
        %1375 = vmatmul.mubr.bf16.gmra.mrb[0].mxu0 %v1004
        %v1376 = vpop.f32.mrb[0].mxu0
        %v1377 = vadd.f32 %v1020, %v1376
        %v1378 = vpop.f32.mrb[0].mxu0
        %v1379 = vadd.f32 %v1024, %v1378
        %v1380 = vpop.f32.mrb[0].mxu0
        %v1381 = vadd.f32 %v1020, %v1380
        %v1382 = vpop.f32.mrb[0].mxu0
        %v1383 = vadd.f32 %v1024, %v1382
        %1384 = vmatprep.mubr.bf16.mxu0 0
        %1385 = vmatmul.mubr.bf16.gmra.mrb[0].mxu0 %v1005
        %v1386 = vpop.f32.mrb[0].mxu0
        %v1387 = vadd.f32 %v1020, %v1386
        %v1388 = vpop.f32.mrb[0].mxu0
        %v1389 = vadd.f32 %v1024, %v1388
        %v1390 = vpop.f32.mrb[0].mxu0
        %v1391 = vadd.f32 %v1020, %v1390
        %v1392 = vpop.f32.mrb[0].mxu0
        %v1393 = vadd.f32 %v1024, %v1392
        %1394 = vmatprep.mubr.bf16.mxu0 0
        %1395 = vmatmul.mubr.bf16.gmra.mrb[0].mxu0 %v1006
        %v1396 = vpop.f32.mrb[0].mxu0
        %v1397 = vadd.f32 %v1020, %v1396
        %v1398 = vpop.f32.mrb[0].mxu0
        %v1399 = vadd.f32 %v1024, %v1398
        %v1400 = vpop.f32.mrb[0].mxu0
        %v1401 = vadd.f32 %v1020, %v1400
        %v1402 = vpop.f32.mrb[0].mxu0
        %v1403 = vadd.f32 %v1024, %v1402
        %1404 = vmatprep.mubr.bf16.mxu0 0
        %1405 = vmatmul.mubr.bf16.gmra.mrb[0].mxu0 %v1007
        %v1406 = vpop.f32.mrb[0].mxu0
        %v1407 = vadd.f32 %v1020, %v1406
        %v1408 = vpop.f32.mrb[0].mxu0
        %v1409 = vadd.f32 %v1024, %v1408
        %v1410 = vpop.f32.mrb[0].mxu0
        %v1411 = vadd.f32 %v1020, %v1410
        %v1412 = vpop.f32.mrb[0].mxu0
        %v1413 = vadd.f32 %v1024, %v1412
        %1414 = vdwg.mxu0
        %1415 = vst [vmem:[#allocation2] sm:$0xff] %v1224
        %1416 = vst [vmem:[#allocation2 + $0x8] sm:$0xff] %v1226
        %1417 = vst [vmem:[#allocation2 + $0x10] sm:$0xff] %v1337
        %1418 = vst [vmem:[#allocation2 + $0x18] sm:$0xff] %v1339
        %1419 = vst [vmem:[#allocation2 + $0x20] sm:$0xff] %v1228
        %1420 = vst [vmem:[#allocation2 + $0x28] sm:$0xff] %v1230
        %1421 = vst [vmem:[#allocation2 + $0x30] sm:$0xff] %v1341
        %1422 = vst [vmem:[#allocation2 + $0x38] sm:$0xff] %v1343
        %1423 = vst [vmem:[#allocation2 + $0x40] sm:$0xff] %v1234
        %1424 = vst [vmem:[#allocation2 + $0x48] sm:$0xff] %v1236
        %1425 = vst [vmem:[#allocation2 + $0x50] sm:$0xff] %v1347
        %1426 = vst [vmem:[#allocation2 + $0x58] sm:$0xff] %v1349
        %1427 = vst [vmem:[#allocation2 + $0x60] sm:$0xff] %v1238
        %1428 = vst [vmem:[#allocation2 + $0x68] sm:$0xff] %v1240
        %1429 = vst [vmem:[#allocation2 + $0x70] sm:$0xff] %v1351
        %1430 = vst [vmem:[#allocation2 + $0x78] sm:$0xff] %v1353
        %1431 = vst [vmem:[#allocation2 + $0x80] sm:$0xff] %v1244
        %1432 = vst [vmem:[#allocation2 + $0x88] sm:$0xff] %v1246
        %1433 = vst [vmem:[#allocation2 + $0x90] sm:$0xff] %v1357
        %1434 = vst [vmem:[#allocation2 + $0x98] sm:$0xff] %v1359
        %1435 = vst [vmem:[#allocation2 + $0xa0] sm:$0xff] %v1248
        %1436 = vst [vmem:[#allocation2 + $0xa8] sm:$0xff] %v1250
        %1437 = vst [vmem:[#allocation2 + $0xb0] sm:$0xff] %v1361
        %1438 = vst [vmem:[#allocation2 + $0xb8] sm:$0xff] %v1363
        %1439 = vst [vmem:[#allocation2 + $0xc0] sm:$0xff] %v1254
        %1440 = vst [vmem:[#allocation2 + $0xc8] sm:$0xff] %v1256
        %1441 = vst [vmem:[#allocation2 + $0xd0] sm:$0xff] %v1367
        %1442 = vst [vmem:[#allocation2 + $0xd8] sm:$0xff] %v1369
        %1443 = vst [vmem:[#allocation2 + $0xe0] sm:$0xff] %v1258
        %1444 = vst [vmem:[#allocation2 + $0xe8] sm:$0xff] %v1260
        %1445 = vst [vmem:[#allocation2 + $0xf0] sm:$0xff] %v1371
        %1446 = vst [vmem:[#allocation2 + $0xf8] sm:$0xff] %v1373
        %1447 = vst [vmem:[#allocation2 + $0x100] sm:$0xff] %v1264
        %1448 = vst [vmem:[#allocation2 + $0x108] sm:$0xff] %v1266
        %1449 = vst [vmem:[#allocation2 + $0x110] sm:$0xff] %v1377
        %1450 = vst [vmem:[#allocation2 + $0x118] sm:$0xff] %v1379
        %1451 = vst [vmem:[#allocation2 + $0x120] sm:$0xff] %v1268
        %1452 = vst [vmem:[#allocation2 + $0x128] sm:$0xff] %v1270
        %1453 = vst [vmem:[#allocation2 + $0x130] sm:$0xff] %v1381
        %1454 = vst [vmem:[#allocation2 + $0x138] sm:$0xff] %v1383
        %1455 = vst [vmem:[#allocation2 + $0x140] sm:$0xff] %v1274
        %1456 = vst [vmem:[#allocation2 + $0x148] sm:$0xff] %v1276
        %1457 = vst [vmem:[#allocation2 + $0x150] sm:$0xff] %v1387
        %1458 = vst [vmem:[#allocation2 + $0x158] sm:$0xff] %v1389
        %1459 = vst [vmem:[#allocation2 + $0x160] sm:$0xff] %v1278
        %1460 = vst [vmem:[#allocation2 + $0x168] sm:$0xff] %v1280
        %1461 = vst [vmem:[#allocation2 + $0x170] sm:$0xff] %v1391
        %1462 = vst [vmem:[#allocation2 + $0x178] sm:$0xff] %v1393
        %1463 = vst [vmem:[#allocation2 + $0x180] sm:$0xff] %v1284
        %1464 = vst [vmem:[#allocation2 + $0x188] sm:$0xff] %v1286
        %1465 = vst [vmem:[#allocation2 + $0x190] sm:$0xff] %v1397
        %1466 = vst [vmem:[#allocation2 + $0x198] sm:$0xff] %v1399
        %1467 = vst [vmem:[#allocation2 + $0x1a0] sm:$0xff] %v1288
        %1468 = vst [vmem:[#allocation2 + $0x1a8] sm:$0xff] %v1290
        %1469 = vst [vmem:[#allocation2 + $0x1b0] sm:$0xff] %v1401
        %1470 = vst [vmem:[#allocation2 + $0x1b8] sm:$0xff] %v1403
        %1471 = vst [vmem:[#allocation2 + $0x1c0] sm:$0xff] %v1294
        %1472 = vst [vmem:[#allocation2 + $0x1c8] sm:$0xff] %v1296
        %1473 = vst [vmem:[#allocation2 + $0x1d0] sm:$0xff] %v1407
        %1474 = vst [vmem:[#allocation2 + $0x1d8] sm:$0xff] %v1409
        %1475 = vst [vmem:[#allocation2 + $0x1e0] sm:$0xff] %v1298
        %1476 = vst [vmem:[#allocation2 + $0x1e8] sm:$0xff] %v1300
        %1477 = vst [vmem:[#allocation2 + $0x1f0] sm:$0xff] %v1411
        %1478 = vst [vmem:[#allocation2 + $0x1f8] sm:$0xff] %v1413
      $region52: #{segment_lstm_encoder_forward.2} parent=43 // pred_fallthru
        _
      %v1479 = vld [vmem:[#allocation3] sm:$0xff]
      %v1480 = vld [vmem:[#allocation3 + $0x8] sm:$0xff]
      %v1481 = vld [vmem:[#allocation4] sm:$0xff]
      %v1482 = vld [vmem:[#allocation4 + $0x8] sm:$0xff]
      %s1483 = smul.u32 0, 4
      %s1484 = smul.addr %s1483, 8
      %s1485 = scalar_lea.vmem [#allocation2], %s1484
      %v1486 = vld [vmem:[%s1485] sm:$0xff]
      %v1487 = vld [vmem:[%s1485 + $0x8] sm:$0xff]
      %v1488 = vld [vmem:[%s1485 + $0x10] sm:$0xff]
      %v1489 = vld [vmem:[%s1485 + $0x18] sm:$0xff]
      %v1490 = vld [vmem:[%s1485 + $0x20] sm:$0xff]
      %v1491 = vld [vmem:[%s1485 + $0x28] sm:$0xff]
      %v1492 = vld [vmem:[%s1485 + $0x30] sm:$0xff]
      %v1493 = vld [vmem:[%s1485 + $0x38] sm:$0xff]
      %v1494 = vpack.c.bf16 %v1480, %v1479
      %v1527 = vunpack.c.l.b16 %v385
      %v1528 = vunpack.c.h.b16 %v385
      %v1529 = vunpack.c.l.b16 %v386
      %v1530 = vunpack.c.h.b16 %v386
      %v1531 = vunpack.c.l.b16 %v387
      %v1532 = vunpack.c.h.b16 %v387
      %v1533 = vunpack.c.l.b16 %v388
      %v1534 = vunpack.c.h.b16 %v388
      %v1535 = vunpack.c.l.b16 %v389
      %v1536 = vunpack.c.h.b16 %v389
      %v1537 = vunpack.c.l.b16 %v390
      %v1538 = vunpack.c.h.b16 %v390
      %v1539 = vunpack.c.l.b16 %v391
      %v1540 = vunpack.c.h.b16 %v391
      %v1541 = vunpack.c.l.b16 %v392
      %v1542 = vunpack.c.h.b16 %v392
      %v1543 = vunpack.c.l.b16 %v393
      %v1544 = vunpack.c.h.b16 %v393
      %v1545 = vunpack.c.l.b16 %v394
      %v1546 = vunpack.c.h.b16 %v394
      %v1547 = vunpack.c.l.b16 %v395
      %v1548 = vunpack.c.h.b16 %v395
      %v1549 = vunpack.c.l.b16 %v396
      %v1550 = vunpack.c.h.b16 %v396
      %v1551 = vunpack.c.l.b16 %v397
      %v1552 = vunpack.c.h.b16 %v397
      %v1553 = vunpack.c.l.b16 %v398
      %v1554 = vunpack.c.h.b16 %v398
      %v1555 = vunpack.c.l.b16 %v399
      %v1556 = vunpack.c.h.b16 %v399
      %v1557 = vunpack.c.l.b16 %v400
      %v1558 = vunpack.c.h.b16 %v400
      %v1559 = vunpack.c.l.b16 %v401
      %v1560 = vunpack.c.h.b16 %v401
      %v1561 = vunpack.c.l.b16 %v402
      %v1562 = vunpack.c.h.b16 %v402
      %v1563 = vunpack.c.l.b16 %v403
      %v1564 = vunpack.c.h.b16 %v403
      %v1565 = vunpack.c.l.b16 %v404
      %v1566 = vunpack.c.h.b16 %v404
      %v1567 = vunpack.c.l.b16 %v405
      %v1568 = vunpack.c.h.b16 %v405
      %v1569 = vunpack.c.l.b16 %v406
      %v1570 = vunpack.c.h.b16 %v406
      %v1571 = vunpack.c.l.b16 %v407
      %v1572 = vunpack.c.h.b16 %v407
      %v1573 = vunpack.c.l.b16 %v408
      %v1574 = vunpack.c.h.b16 %v408
      %v1575 = vunpack.c.l.b16 %v409
      %v1576 = vunpack.c.h.b16 %v409
      %v1577 = vunpack.c.l.b16 %v410
      %v1578 = vunpack.c.h.b16 %v410
      %v1579 = vunpack.c.l.b16 %v411
      %v1580 = vunpack.c.h.b16 %v411
      %v1581 = vunpack.c.l.b16 %v412
      %v1582 = vunpack.c.h.b16 %v412
      %v1583 = vunpack.c.l.b16 %v413
      %v1584 = vunpack.c.h.b16 %v413
      %v1585 = vunpack.c.l.b16 %v414
      %v1586 = vunpack.c.h.b16 %v414
      %v1587 = vunpack.c.l.b16 %v415
      %v1588 = vunpack.c.h.b16 %v415
      %v1589 = vunpack.c.l.b16 %v416
      %v1590 = vunpack.c.h.b16 %v416
      %v1591 = vpack.c.b16 %v1531, %v1527
      %v1592 = vpack.c.b16 %v1532, %v1528
      %v1593 = vpack.c.b16 %v1533, %v1529
      %v1594 = vpack.c.b16 %v1534, %v1530
      %v1595 = vpack.c.b16 %v1539, %v1535
      %v1596 = vpack.c.b16 %v1540, %v1536
      %v1597 = vpack.c.b16 %v1541, %v1537
      %v1598 = vpack.c.b16 %v1542, %v1538
      %v1599 = vpack.c.b16 %v1547, %v1543
      %v1600 = vpack.c.b16 %v1548, %v1544
      %v1601 = vpack.c.b16 %v1549, %v1545
      %v1602 = vpack.c.b16 %v1550, %v1546
      %v1603 = vpack.c.b16 %v1555, %v1551
      %v1604 = vpack.c.b16 %v1556, %v1552
      %v1605 = vpack.c.b16 %v1557, %v1553
      %v1606 = vpack.c.b16 %v1558, %v1554
      %v1607 = vpack.c.b16 %v1563, %v1559
      %v1608 = vpack.c.b16 %v1564, %v1560
      %v1609 = vpack.c.b16 %v1565, %v1561
      %v1610 = vpack.c.b16 %v1566, %v1562
      %v1611 = vpack.c.b16 %v1571, %v1567
      %v1612 = vpack.c.b16 %v1572, %v1568
      %v1613 = vpack.c.b16 %v1573, %v1569
      %v1614 = vpack.c.b16 %v1574, %v1570
      %v1615 = vpack.c.b16 %v1579, %v1575
      %v1616 = vpack.c.b16 %v1580, %v1576
      %v1617 = vpack.c.b16 %v1581, %v1577
      %v1618 = vpack.c.b16 %v1582, %v1578
      %v1619 = vpack.c.b16 %v1587, %v1583
      %v1620 = vpack.c.b16 %v1588, %v1584
      %v1621 = vpack.c.b16 %v1589, %v1585
      %v1622 = vpack.c.b16 %v1590, %v1586
      %1655 = vmatprep.subr.bf16.mxu0 %v1592
      %1656 = vmatpush1.bf16.msra.mxu0 %v1591
      %1657 = vmatprep.subr.bf16.mxu0 %v1596
      %1658 = vmatpush1.bf16.msra.mxu0 %v1595
      %1659 = vmatprep.subr.bf16.mxu0 %v1600
      %1660 = vmatpush1.bf16.msra.mxu0 %v1599
      %1661 = vmatprep.subr.bf16.mxu0 %v1604
      %1662 = vmatpush1.bf16.msra.mxu0 %v1603
      %1663 = vmatprep.subr.bf16.mxu0 %v1608
      %1664 = vmatpush1.bf16.msra.mxu0 %v1607
      %1665 = vmatprep.subr.bf16.mxu0 %v1612
      %1666 = vmatpush1.bf16.msra.mxu0 %v1611
      %1667 = vmatprep.subr.bf16.mxu0 %v1616
      %1668 = vmatpush1.bf16.msra.mxu0 %v1615
      %1669 = vmatprep.subr.bf16.mxu0 %v1620
      %1670 = vmatpush1.bf16.msra.mxu0 %v1619
      %1671 = vmatprep.subr.bf16.mxu0 0
      %1672 = vmatpush1.bf16.msra.mxu0 0
      %1673 = vmatprep.subr.bf16.mxu0 0
      %1674 = vmatpush1.bf16.msra.mxu0 0
      %1675 = vmatprep.subr.bf16.mxu0 0
      %1676 = vmatpush1.bf16.msra.mxu0 0
      %1677 = vmatprep.subr.bf16.mxu0 0
      %1678 = vmatpush1.bf16.msra.mxu0 0
      %1679 = vmatprep.subr.bf16.mxu0 0
      %1680 = vmatpush1.bf16.msra.mxu0 0
      %1681 = vmatprep.subr.bf16.mxu0 0
      %1682 = vmatpush1.bf16.msra.mxu0 0
      %1683 = vmatprep.subr.bf16.mxu0 0
      %1684 = vmatpush1.bf16.msra.mxu0 0
      %1685 = vmatprep.subr.bf16.mxu0 0
      %1686 = vmatpush1.bf16.msra.mxu0 0
      %1687 = vmatprep.mubr.bf16.mxu0 0
      %1688 = vmatmul.mubr.bf16.gmra.mrb[0].mxu0 %v1494
      %v1689 = vpop.f32.mrb[0].mxu0
      %v1690 = vadd.f32 0.0, %v1689
      %v1691 = vpop.f32.mrb[0].mxu0
      %v1692 = vadd.f32 0.0, %v1691
      %v1693 = vpop.f32.mrb[0].mxu0
      %v1694 = vadd.f32 0.0, %v1693
      %v1695 = vpop.f32.mrb[0].mxu0
      %v1696 = vadd.f32 0.0, %v1695
      %1697 = vdwg.mxu0
      %1698 = vmatprep.subr.bf16.mxu0 %v1594
      %1699 = vmatpush1.bf16.msra.mxu0 %v1593
      %1700 = vmatprep.subr.bf16.mxu0 %v1598
      %1701 = vmatpush1.bf16.msra.mxu0 %v1597
      %1702 = vmatprep.subr.bf16.mxu0 %v1602
      %1703 = vmatpush1.bf16.msra.mxu0 %v1601
      %1704 = vmatprep.subr.bf16.mxu0 %v1606
      %1705 = vmatpush1.bf16.msra.mxu0 %v1605
      %1706 = vmatprep.subr.bf16.mxu0 %v1610
      %1707 = vmatpush1.bf16.msra.mxu0 %v1609
      %1708 = vmatprep.subr.bf16.mxu0 %v1614
      %1709 = vmatpush1.bf16.msra.mxu0 %v1613
      %1710 = vmatprep.subr.bf16.mxu0 %v1618
      %1711 = vmatpush1.bf16.msra.mxu0 %v1617
      %1712 = vmatprep.subr.bf16.mxu0 %v1622
      %1713 = vmatpush1.bf16.msra.mxu0 %v1621
      %1714 = vmatprep.subr.bf16.mxu0 0
      %1715 = vmatpush1.bf16.msra.mxu0 0
      %1716 = vmatprep.subr.bf16.mxu0 0
      %1717 = vmatpush1.bf16.msra.mxu0 0
      %1718 = vmatprep.subr.bf16.mxu0 0
      %1719 = vmatpush1.bf16.msra.mxu0 0
      %1720 = vmatprep.subr.bf16.mxu0 0
      %1721 = vmatpush1.bf16.msra.mxu0 0
      %1722 = vmatprep.subr.bf16.mxu0 0
      %1723 = vmatpush1.bf16.msra.mxu0 0
      %1724 = vmatprep.subr.bf16.mxu0 0
      %1725 = vmatpush1.bf16.msra.mxu0 0
      %1726 = vmatprep.subr.bf16.mxu0 0
      %1727 = vmatpush1.bf16.msra.mxu0 0
      %1728 = vmatprep.subr.bf16.mxu0 0
      %1729 = vmatpush1.bf16.msra.mxu0 0
      %1730 = vmatprep.mubr.bf16.mxu0 0
      %1731 = vmatmul.mubr.bf16.gmra.mrb[0].mxu0 %v1494
      %v1732 = vpop.f32.mrb[0].mxu0
      %v1733 = vadd.f32 0.0, %v1732
      %v1734 = vpop.f32.mrb[0].mxu0
      %v1735 = vadd.f32 0.0, %v1734
      %v1736 = vpop.f32.mrb[0].mxu0
      %v1737 = vadd.f32 0.0, %v1736
      %v1738 = vpop.f32.mrb[0].mxu0
      %v1739 = vadd.f32 0.0, %v1738
      %1740 = vdwg.mxu0
      %v1741 = vadd.f32 %v1486, %v1690
      %v1742 = vadd.f32 %v1487, %v1692
      %v1743 = vadd.f32 %v1488, %v1733
      %v1744 = vadd.f32 %v1489, %v1735
      %v1745 = vadd.f32 %v1490, %v1694
      %v1746 = vadd.f32 %v1491, %v1696
      %v1747 = vadd.f32 %v1492, %v1737
      %v1748 = vadd.f32 %v1493, %v1739
      %v1749 = vxor.u32 %v1741, 2147483648
      %v1750 = vxor.u32 %v1742, 2147483648
      %v1751 = vxor.u32 %v1745, 2147483648
      %v1752 = vxor.u32 %v1746, 2147483648
      %v1753 = vmul.f32 %v1749, 1.442695
      %v1754 = vpow.pop %v1753
      %v1755 = vmul.f32 %v1750, 1.442695
      %v1756 = vpow.pop %v1755
      %v1757 = vmul.f32 %v1751, 1.442695
      %v1758 = vpow.pop %v1757
      %v1759 = vmul.f32 %v1752, 1.442695
      %v1760 = vpow.pop %v1759
      %v1761 = vadd.f32 %v1754, 1.0
      %v1762 = vadd.f32 %v1756, 1.0
      %v1763 = vadd.f32 %v1758, 1.0
      %v1764 = vadd.f32 %v1760, 1.0
      %v1765 = vrcp.pop %v1761
      %v1766 = vmul.f32 1.0, %v1765
      %v1767 = vrcp.pop %v1762
      %v1768 = vmul.f32 1.0, %v1767
      %v1769 = vrcp.pop %v1763
      %v1770 = vmul.f32 1.0, %v1769
      %v1771 = vrcp.pop %v1764
      %v1772 = vmul.f32 1.0, %v1771
      %v1773 = vtanh.pop %v1743
      %v1774 = vtanh.pop %v1747
      %v1775 = vxor.u32 %v1744, 2147483648
      %v1776 = vxor.u32 %v1748, 2147483648
      %v1777 = vmul.f32 %v1775, 1.442695
      %v1778 = vpow.pop %v1777
      %v1779 = vmul.f32 %v1776, 1.442695
      %v1780 = vpow.pop %v1779
      %v1781 = vadd.f32 %v1778, 1.0
      %v1782 = vadd.f32 %v1780, 1.0
      %v1783 = vrcp.pop %v1781
      %v1784 = vmul.f32 1.0, %v1783
      %v1785 = vrcp.pop %v1782
      %v1786 = vmul.f32 1.0, %v1785
      %v1787 = vmul.f32 %v1768, %v1481
      %v1788 = vmul.f32 %v1772, %v1482
      %v1789 = vmul.f32 %v1766, %v1773
      %v1790 = vmul.f32 %v1770, %v1774
      %v1791 = vadd.f32 %v1787, %v1789
      %v1792 = vadd.f32 %v1788, %v1790
      %v1793 = vtanh.pop %v1791
      %v1794 = vtanh.pop %v1792
      %v1795 = vmul.f32 %v1784, %v1793
      %v1796 = vmul.f32 %v1786, %v1794
      %1797 = vst [vmem:[#allocation3] sm:$0xff] %v1795
      %1798 = vst [vmem:[#allocation3 + $0x8] sm:$0xff] %v1796
      %1799 = vst [vmem:[#allocation4] sm:$0xff] %v1791
      %1800 = vst [vmem:[#allocation4 + $0x8] sm:$0xff] %v1792
      %s1801 = smul.u32 0, 16
      %s1802 = scalar_lea.vmem %s350, %s1801
      %1803 = vst [vmem:[%s1802] sm:$0xff] %v1795
      %1804 = vst [vmem:[%s1802 + $0x8] sm:$0xff] %v1796
      %v1805 = vld [vmem:[#allocation3] sm:$0xff]
      %v1806 = vld [vmem:[#allocation3 + $0x8] sm:$0xff]
      %v1807 = vld [vmem:[#allocation4] sm:$0xff]
      %v1808 = vld [vmem:[#allocation4 + $0x8] sm:$0xff]
      %s1809 = smul.u32 2, 4
      %s1810 = smul.addr %s1809, 8
      %s1811 = scalar_lea.vmem [#allocation2], %s1810
      %v1812 = vld [vmem:[%s1811] sm:$0xff]
      %v1813 = vld [vmem:[%s1811 + $0x8] sm:$0xff]
      %v1814 = vld [vmem:[%s1811 + $0x10] sm:$0xff]
      %v1815 = vld [vmem:[%s1811 + $0x18] sm:$0xff]
      %v1816 = vld [vmem:[%s1811 + $0x20] sm:$0xff]
      %v1817 = vld [vmem:[%s1811 + $0x28] sm:$0xff]
      %v1818 = vld [vmem:[%s1811 + $0x30] sm:$0xff]
      %v1819 = vld [vmem:[%s1811 + $0x38] sm:$0xff]
      %v1820 = vpack.c.bf16 %v1806, %v1805
      %1821 = vmatprep.subr.bf16.mxu0 %v1592
      %1822 = vmatpush1.bf16.msra.mxu0 %v1591
      %1823 = vmatprep.subr.bf16.mxu0 %v1596
      %1824 = vmatpush1.bf16.msra.mxu0 %v1595
      %1825 = vmatprep.subr.bf16.mxu0 %v1600
      %1826 = vmatpush1.bf16.msra.mxu0 %v1599
      %1827 = vmatprep.subr.bf16.mxu0 %v1604
      %1828 = vmatpush1.bf16.msra.mxu0 %v1603
      %1829 = vmatprep.subr.bf16.mxu0 %v1608
      %1830 = vmatpush1.bf16.msra.mxu0 %v1607
      %1831 = vmatprep.subr.bf16.mxu0 %v1612
      %1832 = vmatpush1.bf16.msra.mxu0 %v1611
      %1833 = vmatprep.subr.bf16.mxu0 %v1616
      %1834 = vmatpush1.bf16.msra.mxu0 %v1615
      %1835 = vmatprep.subr.bf16.mxu0 %v1620
      %1836 = vmatpush1.bf16.msra.mxu0 %v1619
      %1837 = vmatprep.subr.bf16.mxu0 0
      %1838 = vmatpush1.bf16.msra.mxu0 0
      %1839 = vmatprep.subr.bf16.mxu0 0
      %1840 = vmatpush1.bf16.msra.mxu0 0
      %1841 = vmatprep.subr.bf16.mxu0 0
      %1842 = vmatpush1.bf16.msra.mxu0 0
      %1843 = vmatprep.subr.bf16.mxu0 0
      %1844 = vmatpush1.bf16.msra.mxu0 0
      %1845 = vmatprep.subr.bf16.mxu0 0
      %1846 = vmatpush1.bf16.msra.mxu0 0
      %1847 = vmatprep.subr.bf16.mxu0 0
      %1848 = vmatpush1.bf16.msra.mxu0 0
      %1849 = vmatprep.subr.bf16.mxu0 0
      %1850 = vmatpush1.bf16.msra.mxu0 0
      %1851 = vmatprep.subr.bf16.mxu0 0
      %1852 = vmatpush1.bf16.msra.mxu0 0
      %1853 = vmatprep.mubr.bf16.mxu0 0
      %1854 = vmatmul.mubr.bf16.gmra.mrb[0].mxu0 %v1820
      %v1855 = vpop.f32.mrb[0].mxu0
      %v1856 = vadd.f32 0.0, %v1855
      %v1857 = vpop.f32.mrb[0].mxu0
      %v1858 = vadd.f32 0.0, %v1857
      %v1859 = vpop.f32.mrb[0].mxu0
      %v1860 = vadd.f32 0.0, %v1859
      %v1861 = vpop.f32.mrb[0].mxu0
      %v1862 = vadd.f32 0.0, %v1861
      %1863 = vdwg.mxu0
      %1864 = vmatprep.subr.bf16.mxu0 %v1594
      %1865 = vmatpush1.bf16.msra.mxu0 %v1593
      %1866 = vmatprep.subr.bf16.mxu0 %v1598
      %1867 = vmatpush1.bf16.msra.mxu0 %v1597
      %1868 = vmatprep.subr.bf16.mxu0 %v1602
      %1869 = vmatpush1.bf16.msra.mxu0 %v1601
      %1870 = vmatprep.subr.bf16.mxu0 %v1606
      %1871 = vmatpush1.bf16.msra.mxu0 %v1605
      %1872 = vmatprep.subr.bf16.mxu0 %v1610
      %1873 = vmatpush1.bf16.msra.mxu0 %v1609
      %1874 = vmatprep.subr.bf16.mxu0 %v1614
      %1875 = vmatpush1.bf16.msra.mxu0 %v1613
      %1876 = vmatprep.subr.bf16.mxu0 %v1618
      %1877 = vmatpush1.bf16.msra.mxu0 %v1617
      %1878 = vmatprep.subr.bf16.mxu0 %v1622
      %1879 = vmatpush1.bf16.msra.mxu0 %v1621
      %1880 = vmatprep.subr.bf16.mxu0 0
      %1881 = vmatpush1.bf16.msra.mxu0 0
      %1882 = vmatprep.subr.bf16.mxu0 0
      %1883 = vmatpush1.bf16.msra.mxu0 0
      %1884 = vmatprep.subr.bf16.mxu0 0
      %1885 = vmatpush1.bf16.msra.mxu0 0
      %1886 = vmatprep.subr.bf16.mxu0 0
      %1887 = vmatpush1.bf16.msra.mxu0 0
      %1888 = vmatprep.subr.bf16.mxu0 0
      %1889 = vmatpush1.bf16.msra.mxu0 0
      %1890 = vmatprep.subr.bf16.mxu0 0
      %1891 = vmatpush1.bf16.msra.mxu0 0
      %1892 = vmatprep.subr.bf16.mxu0 0
      %1893 = vmatpush1.bf16.msra.mxu0 0
      %1894 = vmatprep.subr.bf16.mxu0 0
      %1895 = vmatpush1.bf16.msra.mxu0 0
      %1896 = vmatprep.mubr.bf16.mxu0 0
      %1897 = vmatmul.mubr.bf16.gmra.mrb[0].mxu0 %v1820
      %v1898 = vpop.f32.mrb[0].mxu0
      %v1899 = vadd.f32 0.0, %v1898
      %v1900 = vpop.f32.mrb[0].mxu0
      %v1901 = vadd.f32 0.0, %v1900
      %v1902 = vpop.f32.mrb[0].mxu0
      %v1903 = vadd.f32 0.0, %v1902
      %v1904 = vpop.f32.mrb[0].mxu0
      %v1905 = vadd.f32 0.0, %v1904
      %1906 = vdwg.mxu0
      %v1907 = vadd.f32 %v1812, %v1856
      %v1908 = vadd.f32 %v1813, %v1858
      %v1909 = vadd.f32 %v1814, %v1899
      %v1910 = vadd.f32 %v1815, %v1901
      %v1911 = vadd.f32 %v1816, %v1860
      %v1912 = vadd.f32 %v1817, %v1862
      %v1913 = vadd.f32 %v1818, %v1903
      %v1914 = vadd.f32 %v1819, %v1905
      %v1915 = vxor.u32 %v1907, 2147483648
      %v1916 = vxor.u32 %v1908, 2147483648
      %v1917 = vxor.u32 %v1911, 2147483648
      %v1918 = vxor.u32 %v1912, 2147483648
      %v1919 = vmul.f32 %v1915, 1.442695
      %v1920 = vpow.pop %v1919
      %v1921 = vmul.f32 %v1916, 1.442695
      %v1922 = vpow.pop %v1921
      %v1923 = vmul.f32 %v1917, 1.442695
      %v1924 = vpow.pop %v1923
      %v1925 = vmul.f32 %v1918, 1.442695
      %v1926 = vpow.pop %v1925
      %v1927 = vadd.f32 %v1920, 1.0
      %v1928 = vadd.f32 %v1922, 1.0
      %v1929 = vadd.f32 %v1924, 1.0
      %v1930 = vadd.f32 %v1926, 1.0
      %v1931 = vrcp.pop %v1927
      %v1932 = vmul.f32 1.0, %v1931
      %v1933 = vrcp.pop %v1928
      %v1934 = vmul.f32 1.0, %v1933
      %v1935 = vrcp.pop %v1929
      %v1936 = vmul.f32 1.0, %v1935
      %v1937 = vrcp.pop %v1930
      %v1938 = vmul.f32 1.0, %v1937
      %v1939 = vtanh.pop %v1909
      %v1940 = vtanh.pop %v1913
      %v1941 = vxor.u32 %v1910, 2147483648
      %v1942 = vxor.u32 %v1914, 2147483648
      %v1943 = vmul.f32 %v1941, 1.442695
      %v1944 = vpow.pop %v1943
      %v1945 = vmul.f32 %v1942, 1.442695
      %v1946 = vpow.pop %v1945
      %v1947 = vadd.f32 %v1944, 1.0
      %v1948 = vadd.f32 %v1946, 1.0
      %v1949 = vrcp.pop %v1947
      %v1950 = vmul.f32 1.0, %v1949
      %v1951 = vrcp.pop %v1948
      %v1952 = vmul.f32 1.0, %v1951
      %v1953 = vmul.f32 %v1934, %v1807
      %v1954 = vmul.f32 %v1938, %v1808
      %v1955 = vmul.f32 %v1932, %v1939
      %v1956 = vmul.f32 %v1936, %v1940
      %v1957 = vadd.f32 %v1953, %v1955
      %v1958 = vadd.f32 %v1954, %v1956
      %v1959 = vtanh.pop %v1957
      %v1960 = vtanh.pop %v1958
      %v1961 = vmul.f32 %v1950, %v1959
      %v1962 = vmul.f32 %v1952, %v1960
      %1963 = vst [vmem:[#allocation3] sm:$0xff] %v1961
      %1964 = vst [vmem:[#allocation3 + $0x8] sm:$0xff] %v1962
      %1965 = vst [vmem:[#allocation4] sm:$0xff] %v1957
      %1966 = vst [vmem:[#allocation4 + $0x8] sm:$0xff] %v1958
      %s1967 = sadd.s32 0, 1
      %s1968 = smul.u32 %s1967, 16
      %s1969 = scalar_lea.vmem %s350, %s1968
      %1970 = vst [vmem:[%s1969] sm:$0xff] %v1961
      %1971 = vst [vmem:[%s1969 + $0x8] sm:$0xff] %v1962
      %v1972 = vld [vmem:[#allocation3] sm:$0xff]
      %v1973 = vld [vmem:[#allocation3 + $0x8] sm:$0xff]
      %v1974 = vld [vmem:[#allocation4] sm:$0xff]
      %v1975 = vld [vmem:[#allocation4 + $0x8] sm:$0xff]
      %s1976 = smul.u32 4, 4
      %s1977 = smul.addr %s1976, 8
      %s1978 = scalar_lea.vmem [#allocation2], %s1977
      %v1979 = vld [vmem:[%s1978] sm:$0xff]
      %v1980 = vld [vmem:[%s1978 + $0x8] sm:$0xff]
      %v1981 = vld [vmem:[%s1978 + $0x10] sm:$0xff]
      %v1982 = vld [vmem:[%s1978 + $0x18] sm:$0xff]
      %v1983 = vld [vmem:[%s1978 + $0x20] sm:$0xff]
      %v1984 = vld [vmem:[%s1978 + $0x28] sm:$0xff]
      %v1985 = vld [vmem:[%s1978 + $0x30] sm:$0xff]
      %v1986 = vld [vmem:[%s1978 + $0x38] sm:$0xff]
      %v1987 = vpack.c.bf16 %v1973, %v1972
      %1988 = vmatprep.subr.bf16.mxu0 %v1592
      %1989 = vmatpush1.bf16.msra.mxu0 %v1591
      %1990 = vmatprep.subr.bf16.mxu0 %v1596
      %1991 = vmatpush1.bf16.msra.mxu0 %v1595
      %1992 = vmatprep.subr.bf16.mxu0 %v1600
      %1993 = vmatpush1.bf16.msra.mxu0 %v1599
      %1994 = vmatprep.subr.bf16.mxu0 %v1604
      %1995 = vmatpush1.bf16.msra.mxu0 %v1603
      %1996 = vmatprep.subr.bf16.mxu0 %v1608
      %1997 = vmatpush1.bf16.msra.mxu0 %v1607
      %1998 = vmatprep.subr.bf16.mxu0 %v1612
      %1999 = vmatpush1.bf16.msra.mxu0 %v1611
      %2000 = vmatprep.subr.bf16.mxu0 %v1616
      %2001 = vmatpush1.bf16.msra.mxu0 %v1615
      %2002 = vmatprep.subr.bf16.mxu0 %v1620
      %2003 = vmatpush1.bf16.msra.mxu0 %v1619
      %2004 = vmatprep.subr.bf16.mxu0 0
      %2005 = vmatpush1.bf16.msra.mxu0 0
      %2006 = vmatprep.subr.bf16.mxu0 0
      %2007 = vmatpush1.bf16.msra.mxu0 0
      %2008 = vmatprep.subr.bf16.mxu0 0
      %2009 = vmatpush1.bf16.msra.mxu0 0
      %2010 = vmatprep.subr.bf16.mxu0 0
      %2011 = vmatpush1.bf16.msra.mxu0 0
      %2012 = vmatprep.subr.bf16.mxu0 0
      %2013 = vmatpush1.bf16.msra.mxu0 0
      %2014 = vmatprep.subr.bf16.mxu0 0
      %2015 = vmatpush1.bf16.msra.mxu0 0
      %2016 = vmatprep.subr.bf16.mxu0 0
      %2017 = vmatpush1.bf16.msra.mxu0 0
      %2018 = vmatprep.subr.bf16.mxu0 0
      %2019 = vmatpush1.bf16.msra.mxu0 0
      %2020 = vmatprep.mubr.bf16.mxu0 0
      %2021 = vmatmul.mubr.bf16.gmra.mrb[0].mxu0 %v1987
      %v2022 = vpop.f32.mrb[0].mxu0
      %v2023 = vadd.f32 0.0, %v2022
      %v2024 = vpop.f32.mrb[0].mxu0
      %v2025 = vadd.f32 0.0, %v2024
      %v2026 = vpop.f32.mrb[0].mxu0
      %v2027 = vadd.f32 0.0, %v2026
      %v2028 = vpop.f32.mrb[0].mxu0
      %v2029 = vadd.f32 0.0, %v2028
      %2030 = vdwg.mxu0
      %2031 = vmatprep.subr.bf16.mxu0 %v1594
      %2032 = vmatpush1.bf16.msra.mxu0 %v1593
      %2033 = vmatprep.subr.bf16.mxu0 %v1598
      %2034 = vmatpush1.bf16.msra.mxu0 %v1597
      %2035 = vmatprep.subr.bf16.mxu0 %v1602
      %2036 = vmatpush1.bf16.msra.mxu0 %v1601
      %2037 = vmatprep.subr.bf16.mxu0 %v1606
      %2038 = vmatpush1.bf16.msra.mxu0 %v1605
      %2039 = vmatprep.subr.bf16.mxu0 %v1610
      %2040 = vmatpush1.bf16.msra.mxu0 %v1609
      %2041 = vmatprep.subr.bf16.mxu0 %v1614
      %2042 = vmatpush1.bf16.msra.mxu0 %v1613
      %2043 = vmatprep.subr.bf16.mxu0 %v1618
      %2044 = vmatpush1.bf16.msra.mxu0 %v1617
      %2045 = vmatprep.subr.bf16.mxu0 %v1622
      %2046 = vmatpush1.bf16.msra.mxu0 %v1621
      %2047 = vmatprep.subr.bf16.mxu0 0
      %2048 = vmatpush1.bf16.msra.mxu0 0
      %2049 = vmatprep.subr.bf16.mxu0 0
      %2050 = vmatpush1.bf16.msra.mxu0 0
      %2051 = vmatprep.subr.bf16.mxu0 0
      %2052 = vmatpush1.bf16.msra.mxu0 0
      %2053 = vmatprep.subr.bf16.mxu0 0
      %2054 = vmatpush1.bf16.msra.mxu0 0
      %2055 = vmatprep.subr.bf16.mxu0 0
      %2056 = vmatpush1.bf16.msra.mxu0 0
      %2057 = vmatprep.subr.bf16.mxu0 0
      %2058 = vmatpush1.bf16.msra.mxu0 0
      %2059 = vmatprep.subr.bf16.mxu0 0
      %2060 = vmatpush1.bf16.msra.mxu0 0
      %2061 = vmatprep.subr.bf16.mxu0 0
      %2062 = vmatpush1.bf16.msra.mxu0 0
      %2063 = vmatprep.mubr.bf16.mxu0 0
      %2064 = vmatmul.mubr.bf16.gmra.mrb[0].mxu0 %v1987
      %v2065 = vpop.f32.mrb[0].mxu0
      %v2066 = vadd.f32 0.0, %v2065
      %v2067 = vpop.f32.mrb[0].mxu0
      %v2068 = vadd.f32 0.0, %v2067
      %v2069 = vpop.f32.mrb[0].mxu0
      %v2070 = vadd.f32 0.0, %v2069
      %v2071 = vpop.f32.mrb[0].mxu0
      %v2072 = vadd.f32 0.0, %v2071
      %2073 = vdwg.mxu0
      %v2074 = vadd.f32 %v1979, %v2023
      %v2075 = vadd.f32 %v1980, %v2025
      %v2076 = vadd.f32 %v1981, %v2066
      %v2077 = vadd.f32 %v1982, %v2068
      %v2078 = vadd.f32 %v1983, %v2027
      %v2079 = vadd.f32 %v1984, %v2029
      %v2080 = vadd.f32 %v1985, %v2070
      %v2081 = vadd.f32 %v1986, %v2072
      %v2082 = vxor.u32 %v2074, 2147483648
      %v2083 = vxor.u32 %v2075, 2147483648
      %v2084 = vxor.u32 %v2078, 2147483648
      %v2085 = vxor.u32 %v2079, 2147483648
      %v2086 = vmul.f32 %v2082, 1.442695
      %v2087 = vpow.pop %v2086
      %v2088 = vmul.f32 %v2083, 1.442695
      %v2089 = vpow.pop %v2088
      %v2090 = vmul.f32 %v2084, 1.442695
      %v2091 = vpow.pop %v2090
      %v2092 = vmul.f32 %v2085, 1.442695
      %v2093 = vpow.pop %v2092
      %v2094 = vadd.f32 %v2087, 1.0
      %v2095 = vadd.f32 %v2089, 1.0
      %v2096 = vadd.f32 %v2091, 1.0
      %v2097 = vadd.f32 %v2093, 1.0
      %v2098 = vrcp.pop %v2094
      %v2099 = vmul.f32 1.0, %v2098
      %v2100 = vrcp.pop %v2095
      %v2101 = vmul.f32 1.0, %v2100
      %v2102 = vrcp.pop %v2096
      %v2103 = vmul.f32 1.0, %v2102
      %v2104 = vrcp.pop %v2097
      %v2105 = vmul.f32 1.0, %v2104
      %v2106 = vtanh.pop %v2076
      %v2107 = vtanh.pop %v2080
      %v2108 = vxor.u32 %v2077, 2147483648
      %v2109 = vxor.u32 %v2081, 2147483648
      %v2110 = vmul.f32 %v2108, 1.442695
      %v2111 = vpow.pop %v2110
      %v2112 = vmul.f32 %v2109, 1.442695
      %v2113 = vpow.pop %v2112
      %v2114 = vadd.f32 %v2111, 1.0
      %v2115 = vadd.f32 %v2113, 1.0
      %v2116 = vrcp.pop %v2114
      %v2117 = vmul.f32 1.0, %v2116
      %v2118 = vrcp.pop %v2115
      %v2119 = vmul.f32 1.0, %v2118
      %v2120 = vmul.f32 %v2101, %v1974
      %v2121 = vmul.f32 %v2105, %v1975
      %v2122 = vmul.f32 %v2099, %v2106
      %v2123 = vmul.f32 %v2103, %v2107
      %v2124 = vadd.f32 %v2120, %v2122
      %v2125 = vadd.f32 %v2121, %v2123
      %v2126 = vtanh.pop %v2124
      %v2127 = vtanh.pop %v2125
      %v2128 = vmul.f32 %v2117, %v2126
      %v2129 = vmul.f32 %v2119, %v2127
      %2130 = vst [vmem:[#allocation3] sm:$0xff] %v2128
      %2131 = vst [vmem:[#allocation3 + $0x8] sm:$0xff] %v2129
      %2132 = vst [vmem:[#allocation4] sm:$0xff] %v2124
      %2133 = vst [vmem:[#allocation4 + $0x8] sm:$0xff] %v2125
      %s2134 = sadd.s32 0, 2
      %s2135 = smul.u32 %s2134, 16
      %s2136 = scalar_lea.vmem %s350, %s2135
      %2137 = vst [vmem:[%s2136] sm:$0xff] %v2128
      %2138 = vst [vmem:[%s2136 + $0x8] sm:$0xff] %v2129
      %v2139 = vld [vmem:[#allocation3] sm:$0xff]
      %v2140 = vld [vmem:[#allocation3 + $0x8] sm:$0xff]
      %v2141 = vld [vmem:[#allocation4] sm:$0xff]
      %v2142 = vld [vmem:[#allocation4 + $0x8] sm:$0xff]
      %s2143 = smul.u32 6, 4
      %s2144 = smul.addr %s2143, 8
      %s2145 = scalar_lea.vmem [#allocation2], %s2144
      %v2146 = vld [vmem:[%s2145] sm:$0xff]
      %v2147 = vld [vmem:[%s2145 + $0x8] sm:$0xff]
      %v2148 = vld [vmem:[%s2145 + $0x10] sm:$0xff]
      %v2149 = vld [vmem:[%s2145 + $0x18] sm:$0xff]
      %v2150 = vld [vmem:[%s2145 + $0x20] sm:$0xff]
      %v2151 = vld [vmem:[%s2145 + $0x28] sm:$0xff]
      %v2152 = vld [vmem:[%s2145 + $0x30] sm:$0xff]
      %v2153 = vld [vmem:[%s2145 + $0x38] sm:$0xff]
      %v2154 = vpack.c.bf16 %v2140, %v2139
      %2155 = vmatprep.subr.bf16.mxu0 %v1592
      %2156 = vmatpush1.bf16.msra.mxu0 %v1591
      %2157 = vmatprep.subr.bf16.mxu0 %v1596
      %2158 = vmatpush1.bf16.msra.mxu0 %v1595
      %2159 = vmatprep.subr.bf16.mxu0 %v1600
      %2160 = vmatpush1.bf16.msra.mxu0 %v1599
      %2161 = vmatprep.subr.bf16.mxu0 %v1604
      %2162 = vmatpush1.bf16.msra.mxu0 %v1603
      %2163 = vmatprep.subr.bf16.mxu0 %v1608
      %2164 = vmatpush1.bf16.msra.mxu0 %v1607
      %2165 = vmatprep.subr.bf16.mxu0 %v1612
      %2166 = vmatpush1.bf16.msra.mxu0 %v1611
      %2167 = vmatprep.subr.bf16.mxu0 %v1616
      %2168 = vmatpush1.bf16.msra.mxu0 %v1615
      %2169 = vmatprep.subr.bf16.mxu0 %v1620
      %2170 = vmatpush1.bf16.msra.mxu0 %v1619
      %2171 = vmatprep.subr.bf16.mxu0 0
      %2172 = vmatpush1.bf16.msra.mxu0 0
      %2173 = vmatprep.subr.bf16.mxu0 0
      %2174 = vmatpush1.bf16.msra.mxu0 0
      %2175 = vmatprep.subr.bf16.mxu0 0
      %2176 = vmatpush1.bf16.msra.mxu0 0
      %2177 = vmatprep.subr.bf16.mxu0 0
      %2178 = vmatpush1.bf16.msra.mxu0 0
      %2179 = vmatprep.subr.bf16.mxu0 0
      %2180 = vmatpush1.bf16.msra.mxu0 0
      %2181 = vmatprep.subr.bf16.mxu0 0
      %2182 = vmatpush1.bf16.msra.mxu0 0
      %2183 = vmatprep.subr.bf16.mxu0 0
      %2184 = vmatpush1.bf16.msra.mxu0 0
      %2185 = vmatprep.subr.bf16.mxu0 0
      %2186 = vmatpush1.bf16.msra.mxu0 0
      %2187 = vmatprep.mubr.bf16.mxu0 0
      %2188 = vmatmul.mubr.bf16.gmra.mrb[0].mxu0 %v2154
      %v2189 = vpop.f32.mrb[0].mxu0
      %v2190 = vadd.f32 0.0, %v2189
      %v2191 = vpop.f32.mrb[0].mxu0
      %v2192 = vadd.f32 0.0, %v2191
      %v2193 = vpop.f32.mrb[0].mxu0
      %v2194 = vadd.f32 0.0, %v2193
      %v2195 = vpop.f32.mrb[0].mxu0
      %v2196 = vadd.f32 0.0, %v2195
      %2197 = vdwg.mxu0
      %2198 = vmatprep.subr.bf16.mxu0 %v1594
      %2199 = vmatpush1.bf16.msra.mxu0 %v1593
      %2200 = vmatprep.subr.bf16.mxu0 %v1598
      %2201 = vmatpush1.bf16.msra.mxu0 %v1597
      %2202 = vmatprep.subr.bf16.mxu0 %v1602
      %2203 = vmatpush1.bf16.msra.mxu0 %v1601
      %2204 = vmatprep.subr.bf16.mxu0 %v1606
      %2205 = vmatpush1.bf16.msra.mxu0 %v1605
      %2206 = vmatprep.subr.bf16.mxu0 %v1610
      %2207 = vmatpush1.bf16.msra.mxu0 %v1609
      %2208 = vmatprep.subr.bf16.mxu0 %v1614
      %2209 = vmatpush1.bf16.msra.mxu0 %v1613
      %2210 = vmatprep.subr.bf16.mxu0 %v1618
      %2211 = vmatpush1.bf16.msra.mxu0 %v1617
      %2212 = vmatprep.subr.bf16.mxu0 %v1622
      %2213 = vmatpush1.bf16.msra.mxu0 %v1621
      %2214 = vmatprep.subr.bf16.mxu0 0
      %2215 = vmatpush1.bf16.msra.mxu0 0
      %2216 = vmatprep.subr.bf16.mxu0 0
      %2217 = vmatpush1.bf16.msra.mxu0 0
      %2218 = vmatprep.subr.bf16.mxu0 0
      %2219 = vmatpush1.bf16.msra.mxu0 0
      %2220 = vmatprep.subr.bf16.mxu0 0
      %2221 = vmatpush1.bf16.msra.mxu0 0
      %2222 = vmatprep.subr.bf16.mxu0 0
      %2223 = vmatpush1.bf16.msra.mxu0 0
      %2224 = vmatprep.subr.bf16.mxu0 0
      %2225 = vmatpush1.bf16.msra.mxu0 0
      %2226 = vmatprep.subr.bf16.mxu0 0
      %2227 = vmatpush1.bf16.msra.mxu0 0
      %2228 = vmatprep.subr.bf16.mxu0 0
      %2229 = vmatpush1.bf16.msra.mxu0 0
      %2230 = vmatprep.mubr.bf16.mxu0 0
      %2231 = vmatmul.mubr.bf16.gmra.mrb[0].mxu0 %v2154
      %v2232 = vpop.f32.mrb[0].mxu0
      %v2233 = vadd.f32 0.0, %v2232
      %v2234 = vpop.f32.mrb[0].mxu0
      %v2235 = vadd.f32 0.0, %v2234
      %v2236 = vpop.f32.mrb[0].mxu0
      %v2237 = vadd.f32 0.0, %v2236
      %v2238 = vpop.f32.mrb[0].mxu0
      %v2239 = vadd.f32 0.0, %v2238
      %2240 = vdwg.mxu0
      %v2241 = vadd.f32 %v2146, %v2190
      %v2242 = vadd.f32 %v2147, %v2192
      %v2243 = vadd.f32 %v2148, %v2233
      %v2244 = vadd.f32 %v2149, %v2235
      %v2245 = vadd.f32 %v2150, %v2194
      %v2246 = vadd.f32 %v2151, %v2196
      %v2247 = vadd.f32 %v2152, %v2237
      %v2248 = vadd.f32 %v2153, %v2239
      %v2249 = vxor.u32 %v2241, 2147483648
      %v2250 = vxor.u32 %v2242, 2147483648
      %v2251 = vxor.u32 %v2245, 2147483648
      %v2252 = vxor.u32 %v2246, 2147483648
      %v2253 = vmul.f32 %v2249, 1.442695
      %v2254 = vpow.pop %v2253
      %v2255 = vmul.f32 %v2250, 1.442695
      %v2256 = vpow.pop %v2255
      %v2257 = vmul.f32 %v2251, 1.442695
      %v2258 = vpow.pop %v2257
      %v2259 = vmul.f32 %v2252, 1.442695
      %v2260 = vpow.pop %v2259
      %v2261 = vadd.f32 %v2254, 1.0
      %v2262 = vadd.f32 %v2256, 1.0
      %v2263 = vadd.f32 %v2258, 1.0
      %v2264 = vadd.f32 %v2260, 1.0
      %v2265 = vrcp.pop %v2261
      %v2266 = vmul.f32 1.0, %v2265
      %v2267 = vrcp.pop %v2262
      %v2268 = vmul.f32 1.0, %v2267
      %v2269 = vrcp.pop %v2263
      %v2270 = vmul.f32 1.0, %v2269
      %v2271 = vrcp.pop %v2264
      %v2272 = vmul.f32 1.0, %v2271
      %v2273 = vtanh.pop %v2243
      %v2274 = vtanh.pop %v2247
      %v2275 = vxor.u32 %v2244, 2147483648
      %v2276 = vxor.u32 %v2248, 2147483648
      %v2277 = vmul.f32 %v2275, 1.442695
      %v2278 = vpow.pop %v2277
      %v2279 = vmul.f32 %v2276, 1.442695
      %v2280 = vpow.pop %v2279
      %v2281 = vadd.f32 %v2278, 1.0
      %v2282 = vadd.f32 %v2280, 1.0
      %v2283 = vrcp.pop %v2281
      %v2284 = vmul.f32 1.0, %v2283
      %v2285 = vrcp.pop %v2282
      %v2286 = vmul.f32 1.0, %v2285
      %v2287 = vmul.f32 %v2268, %v2141
      %v2288 = vmul.f32 %v2272, %v2142
      %v2289 = vmul.f32 %v2266, %v2273
      %v2290 = vmul.f32 %v2270, %v2274
      %v2291 = vadd.f32 %v2287, %v2289
      %v2292 = vadd.f32 %v2288, %v2290
      %v2293 = vtanh.pop %v2291
      %v2294 = vtanh.pop %v2292
      %v2295 = vmul.f32 %v2284, %v2293
      %v2296 = vmul.f32 %v2286, %v2294
      %2297 = vst [vmem:[#allocation3] sm:$0xff] %v2295
      %2298 = vst [vmem:[#allocation3 + $0x8] sm:$0xff] %v2296
      %2299 = vst [vmem:[#allocation4] sm:$0xff] %v2291
      %2300 = vst [vmem:[#allocation4 + $0x8] sm:$0xff] %v2292
      %s2301 = sadd.s32 0, 3
      %s2302 = smul.u32 %s2301, 16
      %s2303 = scalar_lea.vmem %s350, %s2302
      %2304 = vst [vmem:[%s2303] sm:$0xff] %v2295
      %2305 = vst [vmem:[%s2303 + $0x8] sm:$0xff] %v2296
      %v2306 = vld [vmem:[#allocation3] sm:$0xff]
      %v2307 = vld [vmem:[#allocation3 + $0x8] sm:$0xff]
      %v2308 = vld [vmem:[#allocation4] sm:$0xff]
      %v2309 = vld [vmem:[#allocation4 + $0x8] sm:$0xff]
      %s2310 = smul.u32 8, 4
      %s2311 = smul.addr %s2310, 8
      %s2312 = scalar_lea.vmem [#allocation2], %s2311
      %v2313 = vld [vmem:[%s2312] sm:$0xff]
      %v2314 = vld [vmem:[%s2312 + $0x8] sm:$0xff]
      %v2315 = vld [vmem:[%s2312 + $0x10] sm:$0xff]
      %v2316 = vld [vmem:[%s2312 + $0x18] sm:$0xff]
      %v2317 = vld [vmem:[%s2312 + $0x20] sm:$0xff]
      %v2318 = vld [vmem:[%s2312 + $0x28] sm:$0xff]
      %v2319 = vld [vmem:[%s2312 + $0x30] sm:$0xff]
      %v2320 = vld [vmem:[%s2312 + $0x38] sm:$0xff]
      %v2321 = vpack.c.bf16 %v2307, %v2306
      %2322 = vmatprep.subr.bf16.mxu0 %v1592
      %2323 = vmatpush1.bf16.msra.mxu0 %v1591
      %2324 = vmatprep.subr.bf16.mxu0 %v1596
      %2325 = vmatpush1.bf16.msra.mxu0 %v1595
      %2326 = vmatprep.subr.bf16.mxu0 %v1600
      %2327 = vmatpush1.bf16.msra.mxu0 %v1599
      %2328 = vmatprep.subr.bf16.mxu0 %v1604
      %2329 = vmatpush1.bf16.msra.mxu0 %v1603
      %2330 = vmatprep.subr.bf16.mxu0 %v1608
      %2331 = vmatpush1.bf16.msra.mxu0 %v1607
      %2332 = vmatprep.subr.bf16.mxu0 %v1612
      %2333 = vmatpush1.bf16.msra.mxu0 %v1611
      %2334 = vmatprep.subr.bf16.mxu0 %v1616
      %2335 = vmatpush1.bf16.msra.mxu0 %v1615
      %2336 = vmatprep.subr.bf16.mxu0 %v1620
      %2337 = vmatpush1.bf16.msra.mxu0 %v1619
      %2338 = vmatprep.subr.bf16.mxu0 0
      %2339 = vmatpush1.bf16.msra.mxu0 0
      %2340 = vmatprep.subr.bf16.mxu0 0
      %2341 = vmatpush1.bf16.msra.mxu0 0
      %2342 = vmatprep.subr.bf16.mxu0 0
      %2343 = vmatpush1.bf16.msra.mxu0 0
      %2344 = vmatprep.subr.bf16.mxu0 0
      %2345 = vmatpush1.bf16.msra.mxu0 0
      %2346 = vmatprep.subr.bf16.mxu0 0
      %2347 = vmatpush1.bf16.msra.mxu0 0
      %2348 = vmatprep.subr.bf16.mxu0 0
      %2349 = vmatpush1.bf16.msra.mxu0 0
      %2350 = vmatprep.subr.bf16.mxu0 0
      %2351 = vmatpush1.bf16.msra.mxu0 0
      %2352 = vmatprep.subr.bf16.mxu0 0
      %2353 = vmatpush1.bf16.msra.mxu0 0
      %2354 = vmatprep.mubr.bf16.mxu0 0
      %2355 = vmatmul.mubr.bf16.gmra.mrb[0].mxu0 %v2321
      %v2356 = vpop.f32.mrb[0].mxu0
      %v2357 = vadd.f32 0.0, %v2356
      %v2358 = vpop.f32.mrb[0].mxu0
      %v2359 = vadd.f32 0.0, %v2358
      %v2360 = vpop.f32.mrb[0].mxu0
      %v2361 = vadd.f32 0.0, %v2360
      %v2362 = vpop.f32.mrb[0].mxu0
      %v2363 = vadd.f32 0.0, %v2362
      %2364 = vdwg.mxu0
      %2365 = vmatprep.subr.bf16.mxu0 %v1594
      %2366 = vmatpush1.bf16.msra.mxu0 %v1593
      %2367 = vmatprep.subr.bf16.mxu0 %v1598
      %2368 = vmatpush1.bf16.msra.mxu0 %v1597
      %2369 = vmatprep.subr.bf16.mxu0 %v1602
      %2370 = vmatpush1.bf16.msra.mxu0 %v1601
      %2371 = vmatprep.subr.bf16.mxu0 %v1606
      %2372 = vmatpush1.bf16.msra.mxu0 %v1605
      %2373 = vmatprep.subr.bf16.mxu0 %v1610
      %2374 = vmatpush1.bf16.msra.mxu0 %v1609
      %2375 = vmatprep.subr.bf16.mxu0 %v1614
      %2376 = vmatpush1.bf16.msra.mxu0 %v1613
      %2377 = vmatprep.subr.bf16.mxu0 %v1618
      %2378 = vmatpush1.bf16.msra.mxu0 %v1617
      %2379 = vmatprep.subr.bf16.mxu0 %v1622
      %2380 = vmatpush1.bf16.msra.mxu0 %v1621
      %2381 = vmatprep.subr.bf16.mxu0 0
      %2382 = vmatpush1.bf16.msra.mxu0 0
      %2383 = vmatprep.subr.bf16.mxu0 0
      %2384 = vmatpush1.bf16.msra.mxu0 0
      %2385 = vmatprep.subr.bf16.mxu0 0
      %2386 = vmatpush1.bf16.msra.mxu0 0
      %2387 = vmatprep.subr.bf16.mxu0 0
      %2388 = vmatpush1.bf16.msra.mxu0 0
      %2389 = vmatprep.subr.bf16.mxu0 0
      %2390 = vmatpush1.bf16.msra.mxu0 0
      %2391 = vmatprep.subr.bf16.mxu0 0
      %2392 = vmatpush1.bf16.msra.mxu0 0
      %2393 = vmatprep.subr.bf16.mxu0 0
      %2394 = vmatpush1.bf16.msra.mxu0 0
      %2395 = vmatprep.subr.bf16.mxu0 0
      %2396 = vmatpush1.bf16.msra.mxu0 0
      %2397 = vmatprep.mubr.bf16.mxu0 0
      %2398 = vmatmul.mubr.bf16.gmra.mrb[0].mxu0 %v2321
      %v2399 = vpop.f32.mrb[0].mxu0
      %v2400 = vadd.f32 0.0, %v2399
      %v2401 = vpop.f32.mrb[0].mxu0
      %v2402 = vadd.f32 0.0, %v2401
      %v2403 = vpop.f32.mrb[0].mxu0
      %v2404 = vadd.f32 0.0, %v2403
      %v2405 = vpop.f32.mrb[0].mxu0
      %v2406 = vadd.f32 0.0, %v2405
      %2407 = vdwg.mxu0
      %v2408 = vadd.f32 %v2313, %v2357
      %v2409 = vadd.f32 %v2314, %v2359
      %v2410 = vadd.f32 %v2315, %v2400
      %v2411 = vadd.f32 %v2316, %v2402
      %v2412 = vadd.f32 %v2317, %v2361
      %v2413 = vadd.f32 %v2318, %v2363
      %v2414 = vadd.f32 %v2319, %v2404
      %v2415 = vadd.f32 %v2320, %v2406
      %v2416 = vxor.u32 %v2408, 2147483648
      %v2417 = vxor.u32 %v2409, 2147483648
      %v2418 = vxor.u32 %v2412, 2147483648
      %v2419 = vxor.u32 %v2413, 2147483648
      %v2420 = vmul.f32 %v2416, 1.442695
      %v2421 = vpow.pop %v2420
      %v2422 = vmul.f32 %v2417, 1.442695
      %v2423 = vpow.pop %v2422
      %v2424 = vmul.f32 %v2418, 1.442695
      %v2425 = vpow.pop %v2424
      %v2426 = vmul.f32 %v2419, 1.442695
      %v2427 = vpow.pop %v2426
      %v2428 = vadd.f32 %v2421, 1.0
      %v2429 = vadd.f32 %v2423, 1.0
      %v2430 = vadd.f32 %v2425, 1.0
      %v2431 = vadd.f32 %v2427, 1.0
      %v2432 = vrcp.pop %v2428
      %v2433 = vmul.f32 1.0, %v2432
      %v2434 = vrcp.pop %v2429
      %v2435 = vmul.f32 1.0, %v2434
      %v2436 = vrcp.pop %v2430
      %v2437 = vmul.f32 1.0, %v2436
      %v2438 = vrcp.pop %v2431
      %v2439 = vmul.f32 1.0, %v2438
      %v2440 = vtanh.pop %v2410
      %v2441 = vtanh.pop %v2414
      %v2442 = vxor.u32 %v2411, 2147483648
      %v2443 = vxor.u32 %v2415, 2147483648
      %v2444 = vmul.f32 %v2442, 1.442695
      %v2445 = vpow.pop %v2444
      %v2446 = vmul.f32 %v2443, 1.442695
      %v2447 = vpow.pop %v2446
      %v2448 = vadd.f32 %v2445, 1.0
      %v2449 = vadd.f32 %v2447, 1.0
      %v2450 = vrcp.pop %v2448
      %v2451 = vmul.f32 1.0, %v2450
      %v2452 = vrcp.pop %v2449
      %v2453 = vmul.f32 1.0, %v2452
      %v2454 = vmul.f32 %v2435, %v2308
      %v2455 = vmul.f32 %v2439, %v2309
      %v2456 = vmul.f32 %v2433, %v2440
      %v2457 = vmul.f32 %v2437, %v2441
      %v2458 = vadd.f32 %v2454, %v2456
      %v2459 = vadd.f32 %v2455, %v2457
      %v2460 = vtanh.pop %v2458
      %v2461 = vtanh.pop %v2459
      %v2462 = vmul.f32 %v2451, %v2460
      %v2463 = vmul.f32 %v2453, %v2461
      %2464 = vst [vmem:[#allocation3] sm:$0xff] %v2462
      %2465 = vst [vmem:[#allocation3 + $0x8] sm:$0xff] %v2463
      %2466 = vst [vmem:[#allocation4] sm:$0xff] %v2458
      %2467 = vst [vmem:[#allocation4 + $0x8] sm:$0xff] %v2459
      %s2468 = sadd.s32 0, 4
      %s2469 = smul.u32 %s2468, 16
      %s2470 = scalar_lea.vmem %s350, %s2469
      %2471 = vst [vmem:[%s2470] sm:$0xff] %v2462
      %2472 = vst [vmem:[%s2470 + $0x8] sm:$0xff] %v2463
      %v2473 = vld [vmem:[#allocation3] sm:$0xff]
      %v2474 = vld [vmem:[#allocation3 + $0x8] sm:$0xff]
      %v2475 = vld [vmem:[#allocation4] sm:$0xff]
      %v2476 = vld [vmem:[#allocation4 + $0x8] sm:$0xff]
      %s2477 = smul.u32 10, 4
      %s2478 = smul.addr %s2477, 8
      %s2479 = scalar_lea.vmem [#allocation2], %s2478
      %v2480 = vld [vmem:[%s2479] sm:$0xff]
      %v2481 = vld [vmem:[%s2479 + $0x8] sm:$0xff]
      %v2482 = vld [vmem:[%s2479 + $0x10] sm:$0xff]
      %v2483 = vld [vmem:[%s2479 + $0x18] sm:$0xff]
      %v2484 = vld [vmem:[%s2479 + $0x20] sm:$0xff]
      %v2485 = vld [vmem:[%s2479 + $0x28] sm:$0xff]
      %v2486 = vld [vmem:[%s2479 + $0x30] sm:$0xff]
      %v2487 = vld [vmem:[%s2479 + $0x38] sm:$0xff]
      %v2488 = vpack.c.bf16 %v2474, %v2473
      %2489 = vmatprep.subr.bf16.mxu0 %v1592
      %2490 = vmatpush1.bf16.msra.mxu0 %v1591
      %2491 = vmatprep.subr.bf16.mxu0 %v1596
      %2492 = vmatpush1.bf16.msra.mxu0 %v1595
      %2493 = vmatprep.subr.bf16.mxu0 %v1600
      %2494 = vmatpush1.bf16.msra.mxu0 %v1599
      %2495 = vmatprep.subr.bf16.mxu0 %v1604
      %2496 = vmatpush1.bf16.msra.mxu0 %v1603
      %2497 = vmatprep.subr.bf16.mxu0 %v1608
      %2498 = vmatpush1.bf16.msra.mxu0 %v1607
      %2499 = vmatprep.subr.bf16.mxu0 %v1612
      %2500 = vmatpush1.bf16.msra.mxu0 %v1611
      %2501 = vmatprep.subr.bf16.mxu0 %v1616
      %2502 = vmatpush1.bf16.msra.mxu0 %v1615
      %2503 = vmatprep.subr.bf16.mxu0 %v1620
      %2504 = vmatpush1.bf16.msra.mxu0 %v1619
      %2505 = vmatprep.subr.bf16.mxu0 0
      %2506 = vmatpush1.bf16.msra.mxu0 0
      %2507 = vmatprep.subr.bf16.mxu0 0
      %2508 = vmatpush1.bf16.msra.mxu0 0
      %2509 = vmatprep.subr.bf16.mxu0 0
      %2510 = vmatpush1.bf16.msra.mxu0 0
      %2511 = vmatprep.subr.bf16.mxu0 0
      %2512 = vmatpush1.bf16.msra.mxu0 0
      %2513 = vmatprep.subr.bf16.mxu0 0
      %2514 = vmatpush1.bf16.msra.mxu0 0
      %2515 = vmatprep.subr.bf16.mxu0 0
      %2516 = vmatpush1.bf16.msra.mxu0 0
      %2517 = vmatprep.subr.bf16.mxu0 0
      %2518 = vmatpush1.bf16.msra.mxu0 0
      %2519 = vmatprep.subr.bf16.mxu0 0
      %2520 = vmatpush1.bf16.msra.mxu0 0
      %2521 = vmatprep.mubr.bf16.mxu0 0
      %2522 = vmatmul.mubr.bf16.gmra.mrb[0].mxu0 %v2488
      %v2523 = vpop.f32.mrb[0].mxu0
      %v2524 = vadd.f32 0.0, %v2523
      %v2525 = vpop.f32.mrb[0].mxu0
      %v2526 = vadd.f32 0.0, %v2525
      %v2527 = vpop.f32.mrb[0].mxu0
      %v2528 = vadd.f32 0.0, %v2527
      %v2529 = vpop.f32.mrb[0].mxu0
      %v2530 = vadd.f32 0.0, %v2529
      %2531 = vdwg.mxu0
      %2532 = vmatprep.subr.bf16.mxu0 %v1594
      %2533 = vmatpush1.bf16.msra.mxu0 %v1593
      %2534 = vmatprep.subr.bf16.mxu0 %v1598
      %2535 = vmatpush1.bf16.msra.mxu0 %v1597
      %2536 = vmatprep.subr.bf16.mxu0 %v1602
      %2537 = vmatpush1.bf16.msra.mxu0 %v1601
      %2538 = vmatprep.subr.bf16.mxu0 %v1606
      %2539 = vmatpush1.bf16.msra.mxu0 %v1605
      %2540 = vmatprep.subr.bf16.mxu0 %v1610
      %2541 = vmatpush1.bf16.msra.mxu0 %v1609
      %2542 = vmatprep.subr.bf16.mxu0 %v1614
      %2543 = vmatpush1.bf16.msra.mxu0 %v1613
      %2544 = vmatprep.subr.bf16.mxu0 %v1618
      %2545 = vmatpush1.bf16.msra.mxu0 %v1617
      %2546 = vmatprep.subr.bf16.mxu0 %v1622
      %2547 = vmatpush1.bf16.msra.mxu0 %v1621
      %2548 = vmatprep.subr.bf16.mxu0 0
      %2549 = vmatpush1.bf16.msra.mxu0 0
      %2550 = vmatprep.subr.bf16.mxu0 0
      %2551 = vmatpush1.bf16.msra.mxu0 0
      %2552 = vmatprep.subr.bf16.mxu0 0
      %2553 = vmatpush1.bf16.msra.mxu0 0
      %2554 = vmatprep.subr.bf16.mxu0 0
      %2555 = vmatpush1.bf16.msra.mxu0 0
      %2556 = vmatprep.subr.bf16.mxu0 0
      %2557 = vmatpush1.bf16.msra.mxu0 0
      %2558 = vmatprep.subr.bf16.mxu0 0
      %2559 = vmatpush1.bf16.msra.mxu0 0
      %2560 = vmatprep.subr.bf16.mxu0 0
      %2561 = vmatpush1.bf16.msra.mxu0 0
      %2562 = vmatprep.subr.bf16.mxu0 0
      %2563 = vmatpush1.bf16.msra.mxu0 0
      %2564 = vmatprep.mubr.bf16.mxu0 0
      %2565 = vmatmul.mubr.bf16.gmra.mrb[0].mxu0 %v2488
      %v2566 = vpop.f32.mrb[0].mxu0
      %v2567 = vadd.f32 0.0, %v2566
      %v2568 = vpop.f32.mrb[0].mxu0
      %v2569 = vadd.f32 0.0, %v2568
      %v2570 = vpop.f32.mrb[0].mxu0
      %v2571 = vadd.f32 0.0, %v2570
      %v2572 = vpop.f32.mrb[0].mxu0
      %v2573 = vadd.f32 0.0, %v2572
      %2574 = vdwg.mxu0
      %v2575 = vadd.f32 %v2480, %v2524
      %v2576 = vadd.f32 %v2481, %v2526
      %v2577 = vadd.f32 %v2482, %v2567
      %v2578 = vadd.f32 %v2483, %v2569
      %v2579 = vadd.f32 %v2484, %v2528
      %v2580 = vadd.f32 %v2485, %v2530
      %v2581 = vadd.f32 %v2486, %v2571
      %v2582 = vadd.f32 %v2487, %v2573
      %v2583 = vxor.u32 %v2575, 2147483648
      %v2584 = vxor.u32 %v2576, 2147483648
      %v2585 = vxor.u32 %v2579, 2147483648
      %v2586 = vxor.u32 %v2580, 2147483648
      %v2587 = vmul.f32 %v2583, 1.442695
      %v2588 = vpow.pop %v2587
      %v2589 = vmul.f32 %v2584, 1.442695
      %v2590 = vpow.pop %v2589
      %v2591 = vmul.f32 %v2585, 1.442695
      %v2592 = vpow.pop %v2591
      %v2593 = vmul.f32 %v2586, 1.442695
      %v2594 = vpow.pop %v2593
      %v2595 = vadd.f32 %v2588, 1.0
      %v2596 = vadd.f32 %v2590, 1.0
      %v2597 = vadd.f32 %v2592, 1.0
      %v2598 = vadd.f32 %v2594, 1.0
      %v2599 = vrcp.pop %v2595
      %v2600 = vmul.f32 1.0, %v2599
      %v2601 = vrcp.pop %v2596
      %v2602 = vmul.f32 1.0, %v2601
      %v2603 = vrcp.pop %v2597
      %v2604 = vmul.f32 1.0, %v2603
      %v2605 = vrcp.pop %v2598
      %v2606 = vmul.f32 1.0, %v2605
      %v2607 = vtanh.pop %v2577
      %v2608 = vtanh.pop %v2581
      %v2609 = vxor.u32 %v2578, 2147483648
      %v2610 = vxor.u32 %v2582, 2147483648
      %v2611 = vmul.f32 %v2609, 1.442695
      %v2612 = vpow.pop %v2611
      %v2613 = vmul.f32 %v2610, 1.442695
      %v2614 = vpow.pop %v2613
      %v2615 = vadd.f32 %v2612, 1.0
      %v2616 = vadd.f32 %v2614, 1.0
      %v2617 = vrcp.pop %v2615
      %v2618 = vmul.f32 1.0, %v2617
      %v2619 = vrcp.pop %v2616
      %v2620 = vmul.f32 1.0, %v2619
      %v2621 = vmul.f32 %v2602, %v2475
      %v2622 = vmul.f32 %v2606, %v2476
      %v2623 = vmul.f32 %v2600, %v2607
      %v2624 = vmul.f32 %v2604, %v2608
      %v2625 = vadd.f32 %v2621, %v2623
      %v2626 = vadd.f32 %v2622, %v2624
      %v2627 = vtanh.pop %v2625
      %v2628 = vtanh.pop %v2626
      %v2629 = vmul.f32 %v2618, %v2627
      %v2630 = vmul.f32 %v2620, %v2628
      %2631 = vst [vmem:[#allocation3] sm:$0xff] %v2629
      %2632 = vst [vmem:[#allocation3 + $0x8] sm:$0xff] %v2630
      %2633 = vst [vmem:[#allocation4] sm:$0xff] %v2625
      %2634 = vst [vmem:[#allocation4 + $0x8] sm:$0xff] %v2626
      %s2635 = sadd.s32 0, 5
      %s2636 = smul.u32 %s2635, 16
      %s2637 = scalar_lea.vmem %s350, %s2636
      %2638 = vst [vmem:[%s2637] sm:$0xff] %v2629
      %2639 = vst [vmem:[%s2637 + $0x8] sm:$0xff] %v2630
      %v2640 = vld [vmem:[#allocation3] sm:$0xff]
      %v2641 = vld [vmem:[#allocation3 + $0x8] sm:$0xff]
      %v2642 = vld [vmem:[#allocation4] sm:$0xff]
      %v2643 = vld [vmem:[#allocation4 + $0x8] sm:$0xff]
      %s2644 = smul.u32 12, 4
      %s2645 = smul.addr %s2644, 8
      %s2646 = scalar_lea.vmem [#allocation2], %s2645
      %v2647 = vld [vmem:[%s2646] sm:$0xff]
      %v2648 = vld [vmem:[%s2646 + $0x8] sm:$0xff]
      %v2649 = vld [vmem:[%s2646 + $0x10] sm:$0xff]
      %v2650 = vld [vmem:[%s2646 + $0x18] sm:$0xff]
      %v2651 = vld [vmem:[%s2646 + $0x20] sm:$0xff]
      %v2652 = vld [vmem:[%s2646 + $0x28] sm:$0xff]
      %v2653 = vld [vmem:[%s2646 + $0x30] sm:$0xff]
      %v2654 = vld [vmem:[%s2646 + $0x38] sm:$0xff]
      %v2655 = vpack.c.bf16 %v2641, %v2640
      %2656 = vmatprep.subr.bf16.mxu0 %v1592
      %2657 = vmatpush1.bf16.msra.mxu0 %v1591
      %2658 = vmatprep.subr.bf16.mxu0 %v1596
      %2659 = vmatpush1.bf16.msra.mxu0 %v1595
      %2660 = vmatprep.subr.bf16.mxu0 %v1600
      %2661 = vmatpush1.bf16.msra.mxu0 %v1599
      %2662 = vmatprep.subr.bf16.mxu0 %v1604
      %2663 = vmatpush1.bf16.msra.mxu0 %v1603
      %2664 = vmatprep.subr.bf16.mxu0 %v1608
      %2665 = vmatpush1.bf16.msra.mxu0 %v1607
      %2666 = vmatprep.subr.bf16.mxu0 %v1612
      %2667 = vmatpush1.bf16.msra.mxu0 %v1611
      %2668 = vmatprep.subr.bf16.mxu0 %v1616
      %2669 = vmatpush1.bf16.msra.mxu0 %v1615
      %2670 = vmatprep.subr.bf16.mxu0 %v1620
      %2671 = vmatpush1.bf16.msra.mxu0 %v1619
      %2672 = vmatprep.subr.bf16.mxu0 0
      %2673 = vmatpush1.bf16.msra.mxu0 0
      %2674 = vmatprep.subr.bf16.mxu0 0
      %2675 = vmatpush1.bf16.msra.mxu0 0
      %2676 = vmatprep.subr.bf16.mxu0 0
      %2677 = vmatpush1.bf16.msra.mxu0 0
      %2678 = vmatprep.subr.bf16.mxu0 0
      %2679 = vmatpush1.bf16.msra.mxu0 0
      %2680 = vmatprep.subr.bf16.mxu0 0
      %2681 = vmatpush1.bf16.msra.mxu0 0
      %2682 = vmatprep.subr.bf16.mxu0 0
      %2683 = vmatpush1.bf16.msra.mxu0 0
      %2684 = vmatprep.subr.bf16.mxu0 0
      %2685 = vmatpush1.bf16.msra.mxu0 0
      %2686 = vmatprep.subr.bf16.mxu0 0
      %2687 = vmatpush1.bf16.msra.mxu0 0
      %2688 = vmatprep.mubr.bf16.mxu0 0
      %2689 = vmatmul.mubr.bf16.gmra.mrb[0].mxu0 %v2655
      %v2690 = vpop.f32.mrb[0].mxu0
      %v2691 = vadd.f32 0.0, %v2690
      %v2692 = vpop.f32.mrb[0].mxu0
      %v2693 = vadd.f32 0.0, %v2692
      %v2694 = vpop.f32.mrb[0].mxu0
      %v2695 = vadd.f32 0.0, %v2694
      %v2696 = vpop.f32.mrb[0].mxu0
      %v2697 = vadd.f32 0.0, %v2696
      %2698 = vdwg.mxu0
      %2699 = vmatprep.subr.bf16.mxu0 %v1594
      %2700 = vmatpush1.bf16.msra.mxu0 %v1593
      %2701 = vmatprep.subr.bf16.mxu0 %v1598
      %2702 = vmatpush1.bf16.msra.mxu0 %v1597
      %2703 = vmatprep.subr.bf16.mxu0 %v1602
      %2704 = vmatpush1.bf16.msra.mxu0 %v1601
      %2705 = vmatprep.subr.bf16.mxu0 %v1606
      %2706 = vmatpush1.bf16.msra.mxu0 %v1605
      %2707 = vmatprep.subr.bf16.mxu0 %v1610
      %2708 = vmatpush1.bf16.msra.mxu0 %v1609
      %2709 = vmatprep.subr.bf16.mxu0 %v1614
      %2710 = vmatpush1.bf16.msra.mxu0 %v1613
      %2711 = vmatprep.subr.bf16.mxu0 %v1618
      %2712 = vmatpush1.bf16.msra.mxu0 %v1617
      %2713 = vmatprep.subr.bf16.mxu0 %v1622
      %2714 = vmatpush1.bf16.msra.mxu0 %v1621
      %2715 = vmatprep.subr.bf16.mxu0 0
      %2716 = vmatpush1.bf16.msra.mxu0 0
      %2717 = vmatprep.subr.bf16.mxu0 0
      %2718 = vmatpush1.bf16.msra.mxu0 0
      %2719 = vmatprep.subr.bf16.mxu0 0
      %2720 = vmatpush1.bf16.msra.mxu0 0
      %2721 = vmatprep.subr.bf16.mxu0 0
      %2722 = vmatpush1.bf16.msra.mxu0 0
      %2723 = vmatprep.subr.bf16.mxu0 0
      %2724 = vmatpush1.bf16.msra.mxu0 0
      %2725 = vmatprep.subr.bf16.mxu0 0
      %2726 = vmatpush1.bf16.msra.mxu0 0
      %2727 = vmatprep.subr.bf16.mxu0 0
      %2728 = vmatpush1.bf16.msra.mxu0 0
      %2729 = vmatprep.subr.bf16.mxu0 0
      %2730 = vmatpush1.bf16.msra.mxu0 0
      %2731 = vmatprep.mubr.bf16.mxu0 0
      %2732 = vmatmul.mubr.bf16.gmra.mrb[0].mxu0 %v2655
      %v2733 = vpop.f32.mrb[0].mxu0
      %v2734 = vadd.f32 0.0, %v2733
      %v2735 = vpop.f32.mrb[0].mxu0
      %v2736 = vadd.f32 0.0, %v2735
      %v2737 = vpop.f32.mrb[0].mxu0
      %v2738 = vadd.f32 0.0, %v2737
      %v2739 = vpop.f32.mrb[0].mxu0
      %v2740 = vadd.f32 0.0, %v2739
      %2741 = vdwg.mxu0
      %v2742 = vadd.f32 %v2647, %v2691
      %v2743 = vadd.f32 %v2648, %v2693
      %v2744 = vadd.f32 %v2649, %v2734
      %v2745 = vadd.f32 %v2650, %v2736
      %v2746 = vadd.f32 %v2651, %v2695
      %v2747 = vadd.f32 %v2652, %v2697
      %v2748 = vadd.f32 %v2653, %v2738
      %v2749 = vadd.f32 %v2654, %v2740
      %v2750 = vxor.u32 %v2742, 2147483648
      %v2751 = vxor.u32 %v2743, 2147483648
      %v2752 = vxor.u32 %v2746, 2147483648
      %v2753 = vxor.u32 %v2747, 2147483648
      %v2754 = vmul.f32 %v2750, 1.442695
      %v2755 = vpow.pop %v2754
      %v2756 = vmul.f32 %v2751, 1.442695
      %v2757 = vpow.pop %v2756
      %v2758 = vmul.f32 %v2752, 1.442695
      %v2759 = vpow.pop %v2758
      %v2760 = vmul.f32 %v2753, 1.442695
      %v2761 = vpow.pop %v2760
      %v2762 = vadd.f32 %v2755, 1.0
      %v2763 = vadd.f32 %v2757, 1.0
      %v2764 = vadd.f32 %v2759, 1.0
      %v2765 = vadd.f32 %v2761, 1.0
      %v2766 = vrcp.pop %v2762
      %v2767 = vmul.f32 1.0, %v2766
      %v2768 = vrcp.pop %v2763
      %v2769 = vmul.f32 1.0, %v2768
      %v2770 = vrcp.pop %v2764
      %v2771 = vmul.f32 1.0, %v2770
      %v2772 = vrcp.pop %v2765
      %v2773 = vmul.f32 1.0, %v2772
      %v2774 = vtanh.pop %v2744
      %v2775 = vtanh.pop %v2748
      %v2776 = vxor.u32 %v2745, 2147483648
      %v2777 = vxor.u32 %v2749, 2147483648
      %v2778 = vmul.f32 %v2776, 1.442695
      %v2779 = vpow.pop %v2778
      %v2780 = vmul.f32 %v2777, 1.442695
      %v2781 = vpow.pop %v2780
      %v2782 = vadd.f32 %v2779, 1.0
      %v2783 = vadd.f32 %v2781, 1.0
      %v2784 = vrcp.pop %v2782
      %v2785 = vmul.f32 1.0, %v2784
      %v2786 = vrcp.pop %v2783
      %v2787 = vmul.f32 1.0, %v2786
      %v2788 = vmul.f32 %v2769, %v2642
      %v2789 = vmul.f32 %v2773, %v2643
      %v2790 = vmul.f32 %v2767, %v2774
      %v2791 = vmul.f32 %v2771, %v2775
      %v2792 = vadd.f32 %v2788, %v2790
      %v2793 = vadd.f32 %v2789, %v2791
      %v2794 = vtanh.pop %v2792
      %v2795 = vtanh.pop %v2793
      %v2796 = vmul.f32 %v2785, %v2794
      %v2797 = vmul.f32 %v2787, %v2795
      %2798 = vst [vmem:[#allocation3] sm:$0xff] %v2796
      %2799 = vst [vmem:[#allocation3 + $0x8] sm:$0xff] %v2797
      %2800 = vst [vmem:[#allocation4] sm:$0xff] %v2792
      %2801 = vst [vmem:[#allocation4 + $0x8] sm:$0xff] %v2793
      %s2802 = sadd.s32 0, 6
      %s2803 = smul.u32 %s2802, 16
      %s2804 = scalar_lea.vmem %s350, %s2803
      %2805 = vst [vmem:[%s2804] sm:$0xff] %v2796
      %2806 = vst [vmem:[%s2804 + $0x8] sm:$0xff] %v2797
      %v2807 = vld [vmem:[#allocation3] sm:$0xff]
      %v2808 = vld [vmem:[#allocation3 + $0x8] sm:$0xff]
      %v2809 = vld [vmem:[#allocation4] sm:$0xff]
      %v2810 = vld [vmem:[#allocation4 + $0x8] sm:$0xff]
      %s2811 = smul.u32 14, 4
      %s2812 = smul.addr %s2811, 8
      %s2813 = scalar_lea.vmem [#allocation2], %s2812
      %v2814 = vld [vmem:[%s2813] sm:$0xff]
      %v2815 = vld [vmem:[%s2813 + $0x8] sm:$0xff]
      %v2816 = vld [vmem:[%s2813 + $0x10] sm:$0xff]
      %v2817 = vld [vmem:[%s2813 + $0x18] sm:$0xff]
      %v2818 = vld [vmem:[%s2813 + $0x20] sm:$0xff]
      %v2819 = vld [vmem:[%s2813 + $0x28] sm:$0xff]
      %v2820 = vld [vmem:[%s2813 + $0x30] sm:$0xff]
      %v2821 = vld [vmem:[%s2813 + $0x38] sm:$0xff]
      %v2822 = vpack.c.bf16 %v2808, %v2807
      %2823 = vmatprep.subr.bf16.mxu0 %v1592
      %2824 = vmatpush1.bf16.msra.mxu0 %v1591
      %2825 = vmatprep.subr.bf16.mxu0 %v1596
      %2826 = vmatpush1.bf16.msra.mxu0 %v1595
      %2827 = vmatprep.subr.bf16.mxu0 %v1600
      %2828 = vmatpush1.bf16.msra.mxu0 %v1599
      %2829 = vmatprep.subr.bf16.mxu0 %v1604
      %2830 = vmatpush1.bf16.msra.mxu0 %v1603
      %2831 = vmatprep.subr.bf16.mxu0 %v1608
      %2832 = vmatpush1.bf16.msra.mxu0 %v1607
      %2833 = vmatprep.subr.bf16.mxu0 %v1612
      %2834 = vmatpush1.bf16.msra.mxu0 %v1611
      %2835 = vmatprep.subr.bf16.mxu0 %v1616
      %2836 = vmatpush1.bf16.msra.mxu0 %v1615
      %2837 = vmatprep.subr.bf16.mxu0 %v1620
      %2838 = vmatpush1.bf16.msra.mxu0 %v1619
      %2839 = vmatprep.subr.bf16.mxu0 0
      %2840 = vmatpush1.bf16.msra.mxu0 0
      %2841 = vmatprep.subr.bf16.mxu0 0
      %2842 = vmatpush1.bf16.msra.mxu0 0
      %2843 = vmatprep.subr.bf16.mxu0 0
      %2844 = vmatpush1.bf16.msra.mxu0 0
      %2845 = vmatprep.subr.bf16.mxu0 0
      %2846 = vmatpush1.bf16.msra.mxu0 0
      %2847 = vmatprep.subr.bf16.mxu0 0
      %2848 = vmatpush1.bf16.msra.mxu0 0
      %2849 = vmatprep.subr.bf16.mxu0 0
      %2850 = vmatpush1.bf16.msra.mxu0 0
      %2851 = vmatprep.subr.bf16.mxu0 0
      %2852 = vmatpush1.bf16.msra.mxu0 0
      %2853 = vmatprep.subr.bf16.mxu0 0
      %2854 = vmatpush1.bf16.msra.mxu0 0
      %2855 = vmatprep.mubr.bf16.mxu0 0
      %2856 = vmatmul.mubr.bf16.gmra.mrb[0].mxu0 %v2822
      %v2857 = vpop.f32.mrb[0].mxu0
      %v2858 = vadd.f32 0.0, %v2857
      %v2859 = vpop.f32.mrb[0].mxu0
      %v2860 = vadd.f32 0.0, %v2859
      %v2861 = vpop.f32.mrb[0].mxu0
      %v2862 = vadd.f32 0.0, %v2861
      %v2863 = vpop.f32.mrb[0].mxu0
      %v2864 = vadd.f32 0.0, %v2863
      %2865 = vdwg.mxu0
      %2866 = vmatprep.subr.bf16.mxu0 %v1594
      %2867 = vmatpush1.bf16.msra.mxu0 %v1593
      %2868 = vmatprep.subr.bf16.mxu0 %v1598
      %2869 = vmatpush1.bf16.msra.mxu0 %v1597
      %2870 = vmatprep.subr.bf16.mxu0 %v1602
      %2871 = vmatpush1.bf16.msra.mxu0 %v1601
      %2872 = vmatprep.subr.bf16.mxu0 %v1606
      %2873 = vmatpush1.bf16.msra.mxu0 %v1605
      %2874 = vmatprep.subr.bf16.mxu0 %v1610
      %2875 = vmatpush1.bf16.msra.mxu0 %v1609
      %2876 = vmatprep.subr.bf16.mxu0 %v1614
      %2877 = vmatpush1.bf16.msra.mxu0 %v1613
      %2878 = vmatprep.subr.bf16.mxu0 %v1618
      %2879 = vmatpush1.bf16.msra.mxu0 %v1617
      %2880 = vmatprep.subr.bf16.mxu0 %v1622
      %2881 = vmatpush1.bf16.msra.mxu0 %v1621
      %2882 = vmatprep.subr.bf16.mxu0 0
      %2883 = vmatpush1.bf16.msra.mxu0 0
      %2884 = vmatprep.subr.bf16.mxu0 0
      %2885 = vmatpush1.bf16.msra.mxu0 0
      %2886 = vmatprep.subr.bf16.mxu0 0
      %2887 = vmatpush1.bf16.msra.mxu0 0
      %2888 = vmatprep.subr.bf16.mxu0 0
      %2889 = vmatpush1.bf16.msra.mxu0 0
      %2890 = vmatprep.subr.bf16.mxu0 0
      %2891 = vmatpush1.bf16.msra.mxu0 0
      %2892 = vmatprep.subr.bf16.mxu0 0
      %2893 = vmatpush1.bf16.msra.mxu0 0
      %2894 = vmatprep.subr.bf16.mxu0 0
      %2895 = vmatpush1.bf16.msra.mxu0 0
      %2896 = vmatprep.subr.bf16.mxu0 0
      %2897 = vmatpush1.bf16.msra.mxu0 0
      %2898 = vmatprep.mubr.bf16.mxu0 0
      %2899 = vmatmul.mubr.bf16.gmra.mrb[0].mxu0 %v2822
      %v2900 = vpop.f32.mrb[0].mxu0
      %v2901 = vadd.f32 0.0, %v2900
      %v2902 = vpop.f32.mrb[0].mxu0
      %v2903 = vadd.f32 0.0, %v2902
      %v2904 = vpop.f32.mrb[0].mxu0
      %v2905 = vadd.f32 0.0, %v2904
      %v2906 = vpop.f32.mrb[0].mxu0
      %v2907 = vadd.f32 0.0, %v2906
      %2908 = vdwg.mxu0
      %v2909 = vadd.f32 %v2814, %v2858
      %v2910 = vadd.f32 %v2815, %v2860
      %v2911 = vadd.f32 %v2816, %v2901
      %v2912 = vadd.f32 %v2817, %v2903
      %v2913 = vadd.f32 %v2818, %v2862
      %v2914 = vadd.f32 %v2819, %v2864
      %v2915 = vadd.f32 %v2820, %v2905
      %v2916 = vadd.f32 %v2821, %v2907
      %v2917 = vxor.u32 %v2909, 2147483648
      %v2918 = vxor.u32 %v2910, 2147483648
      %v2919 = vxor.u32 %v2913, 2147483648
      %v2920 = vxor.u32 %v2914, 2147483648
      %v2921 = vmul.f32 %v2917, 1.442695
      %v2922 = vpow.pop %v2921
      %v2923 = vmul.f32 %v2918, 1.442695
      %v2924 = vpow.pop %v2923
      %v2925 = vmul.f32 %v2919, 1.442695
      %v2926 = vpow.pop %v2925
      %v2927 = vmul.f32 %v2920, 1.442695
      %v2928 = vpow.pop %v2927
      %v2929 = vadd.f32 %v2922, 1.0
      %v2930 = vadd.f32 %v2924, 1.0
      %v2931 = vadd.f32 %v2926, 1.0
      %v2932 = vadd.f32 %v2928, 1.0
      %v2933 = vrcp.pop %v2929
      %v2934 = vmul.f32 1.0, %v2933
      %v2935 = vrcp.pop %v2930
      %v2936 = vmul.f32 1.0, %v2935
      %v2937 = vrcp.pop %v2931
      %v2938 = vmul.f32 1.0, %v2937
      %v2939 = vrcp.pop %v2932
      %v2940 = vmul.f32 1.0, %v2939
      %v2941 = vtanh.pop %v2911
      %v2942 = vtanh.pop %v2915
      %v2943 = vxor.u32 %v2912, 2147483648
      %v2944 = vxor.u32 %v2916, 2147483648
      %v2945 = vmul.f32 %v2943, 1.442695
      %v2946 = vpow.pop %v2945
      %v2947 = vmul.f32 %v2944, 1.442695
      %v2948 = vpow.pop %v2947
      %v2949 = vadd.f32 %v2946, 1.0
      %v2950 = vadd.f32 %v2948, 1.0
      %v2951 = vrcp.pop %v2949
      %v2952 = vmul.f32 1.0, %v2951
      %v2953 = vrcp.pop %v2950
      %v2954 = vmul.f32 1.0, %v2953
      %v2955 = vmul.f32 %v2936, %v2809
      %v2956 = vmul.f32 %v2940, %v2810
      %v2957 = vmul.f32 %v2934, %v2941
      %v2958 = vmul.f32 %v2938, %v2942
      %v2959 = vadd.f32 %v2955, %v2957
      %v2960 = vadd.f32 %v2956, %v2958
      %v2961 = vtanh.pop %v2959
      %v2962 = vtanh.pop %v2960
      %v2963 = vmul.f32 %v2952, %v2961
      %v2964 = vmul.f32 %v2954, %v2962
      %2965 = vst [vmem:[#allocation3] sm:$0xff] %v2963
      %2966 = vst [vmem:[#allocation3 + $0x8] sm:$0xff] %v2964
      %2967 = vst [vmem:[#allocation4] sm:$0xff] %v2959
      %2968 = vst [vmem:[#allocation4 + $0x8] sm:$0xff] %v2960
      %s2969 = sadd.s32 0, 7
      %s2970 = smul.u32 %s2969, 16
      %s2971 = scalar_lea.vmem %s350, %s2970
      %2972 = vst [vmem:[%s2971] sm:$0xff] %v2963
      %2973 = vst [vmem:[%s2971 + $0x8] sm:$0xff] %v2964
      %s2974 = smul.u32 2, %s21
      %p2975 = scmp.lt.s32.totalorder %s2974, 1
      %s2976 = scalar_select %p2975, %s2974, 1
      %s2977 = smul.addr %s2976, 8
      %s2978 = scalar_lea.vmem %s6, %s2977
      // Predicated region
      $region53: #{segment_lstm_encoder_forward.2} parent=43 // pred_check
        %p2979 = pneg %p203
      $region54: #{segment_lstm_encoder_forward.2} parent=43 // pred_check_branch
        %2981 = sbr.rel (%p2979) target = $region56
      $region55: #{segment_lstm_encoder_forward.2} parent=43 // pred_region
        %s2982 = smul.u32 2, %s21
      $region56: #{segment_lstm_encoder_forward.2} parent=43 // pred_fallthru
        _
      // Predicated region
      $region57: #{segment_lstm_encoder_forward.2} parent=43 // pred_check
        %p2983 = pneg %p203
      $region58: #{segment_lstm_encoder_forward.2} parent=43 // pred_check_branch
        %2985 = sbr.rel (%p2983) target = $region60
      $region59: #{segment_lstm_encoder_forward.2} parent=43 // pred_region
        %s2986 = smul.u32 2, %s21
        %p2987 = scmp.lt.s32.totalorder %s2986, 1
        %s2988 = scalar_select %p2987, %s2986, 1
        %s2989 = smul.addr %s2988, 8
        %s2990 = scalar_lea.vmem %s6, %s2989
      $region60: #{segment_lstm_encoder_forward.2} parent=43 // pred_fallthru
        _
    $region44: #{segment_lstm_encoder_forward.2} parent=5 // pred_fallthru
      _
    %p2991 = scmp.le.s32.totalorder 2, %s12
    // Predicated region
    $region61: #{segment_lstm_encoder_forward.2} parent=5 // pred_check
      %p2992 = pneg %p2991
    $region62: #{segment_lstm_encoder_forward.2} parent=5 // pred_check_branch
      %2994 = sbr.rel (%p2992) target = $region64
    $region63: #{segment_lstm_encoder_forward.2} parent=5 // pred_region
      %s2995 = ssub.s32 %s12, 2
    $region64: #{segment_lstm_encoder_forward.2} parent=5 // pred_fallthru
      _
  $region6: #{segment_lstm_encoder_forward.2} parent=0 // loop_footer
    %s16 = sadd.s32 1, %s12
  $region7: #{segment_lstm_encoder_forward.2} parent=0 // loop_footer_branch
    %11 = sbr.rel target = $region3
  $region8: #{segment_lstm_encoder_forward.2} parent=0 // loop_exit
    _

</llo_original>
